<compile_context>
chip_gen: v7x
topology: tpu7x:2x2x1
jax: 0.10.0
libtpu: 0.0.40
codegen_flags: <defaults>
</compile_context>

<pallas_src>
import functools

import jax
import jax.numpy as jnp
from jax import lax
from jax.experimental import pallas as pl
from jax.experimental.pallas import tpu as pltpu


def _round_up(x, m):
    return (x + m - 1) // m * m


def _pick_conv_rows(H, W, target_m=512):
    """Smallest divisor HB of H with HB*W >= target_m (else H): the matmul M dim."""
    for hb in range(1, H + 1):
        if H % hb == 0 and (hb * W >= target_m or hb == H):
            return hb
    return H


def _largest_divisor_le(n, cap):
    for d in range(min(cap, n), 0, -1):
        if n % d == 0:
            return d
    return 1


def _vmem_cap_bytes():
    """Physical VMEM of the attached TPU; fall back to 64 MiB (v7x, the smallest)."""
    try:
        cap = getattr(pltpu.get_tpu_info(), "vmem_capacity_bytes", None)
        if cap:
            return int(cap)
    except Exception:
        pass
    return 64 << 20


def _const_spec(block_shape, index_map):
    """Spec for constant-index operands (weights/biases): single-buffered.

    Default double-buffering would duplicate the weights in VMEM for nothing
    (their index maps are constant, they are DMA'd once). Falls back to the
    plain spec if this JAX build does not take the pipeline_mode kwarg.
    """
    buffered = getattr(pl, "Buffered", None)
    if buffered is not None:
        try:
            return pl.BlockSpec(block_shape, index_map, pipeline_mode=buffered(1))
        except Exception:
            pass
    return pl.BlockSpec(block_shape, index_map)


def _arm_kernel(xp_ref, w3_ref, b3_ref, w1_ref, b1_ref, o_ref,
                y_ref, sum_ref, *, conv_rows, mul_rows):
    # xp_ref : (H+2, W+2, Cin_p)  zero-padded image (NHWC, batch squeezed)
    # w3_ref : (9, Cin_p, Cout_p) 3x3 weights, taps flattened, BN scale folded
    # b3_ref : (1, Cout_p)        folded BN bias after conv3x3
    # w1_ref : (Cout_p, Cout_p)   1x1 weights (in, out), BN scale folded
    # b1_ref : (1, Cout_p)        folded BN bias after conv1x1
    # o_ref  : (H*W, Cout_p)      output block (spatial flattened, lane-dense)
    # y_ref  : (H*W, Cout_p) f32  scratch: y = ReLU(conv3x3 + b3)
    # sum_ref: (1, Cout_p)   f32  scratch: running channel sum for the GAP
    Hp2, Wp2, Cin_p = xp_ref.shape
    H, W = Hp2 - 2, Wp2 - 2
    Cp = o_ref.shape[-1]
    HB = conv_rows
    M = HB * W
    mm_dtype = w3_ref.dtype

    b3 = b3_ref[...]
    sum_ref[...] = jnp.zeros_like(sum_ref)

    # --- pass 1: 3x3 conv (BN scale pre-folded) + bias + ReLU, fused GAP ----
    # Per row-block: 9 taps, each a (HB*W, Cin_p) @ (Cin_p, Cout_p) MXU matmul,
    # all accumulated in one f32 expression (no per-tap VMEM RMW passes).
    def conv_block(hb, carry):
        h0 = pl.multiple_of(hb * HB, HB)      # first output row of this block
        r0 = pl.multiple_of(hb * M, M)        # same offset in flattened rows
        acc = jnp.zeros((M, Cp), jnp.float32)
        for ky in range(3):
            rows = xp_ref[pl.ds(h0 + ky, HB)]                     # (HB, W+2, Cin_p)
            for kx in range(3):
                slab = rows[:, kx:kx + W, :].reshape(M, Cin_p)    # shifted window
                acc = acc + jnp.dot(slab.astype(mm_dtype),
                                    w3_ref[3 * ky + kx],
                                    preferred_element_type=jnp.float32)
        yb = jnp.maximum(acc + b3, 0.0)                           # (M, Cp) f32
        y_ref[pl.ds(r0, M)] = yb
        sum_ref[...] += jnp.sum(yb, axis=0, keepdims=True)        # fused GAP
        return carry

    nb = H // HB
    lax.fori_loop(0, nb, conv_block, 0, unroll=min(2, nb))

    # --- channel attention: GAP -> 1x1 conv (scale folded) -> ReLU -> sigmoid
    pooled = sum_ref[...] * (1.0 / (H * W))                       # (1, Cp)
    att = jnp.dot(pooled.astype(w1_ref.dtype), w1_ref[...],
                  preferred_element_type=jnp.float32)
    att = jnp.maximum(att + b1_ref[...], 0.0)
    att = pl.reciprocal(1.0 + jnp.exp(-att))                      # exact sigmoid

    # --- pass 2: chunked y * att store (bounded vreg pressure, unmasked vst) -
    RB = mul_rows
    nmb = (H * W) // RB

    def mul_block(i, carry):
        r0 = pl.multiple_of(i * RB, RB)
        o_ref[pl.ds(r0, RB)] = (y_ref[pl.ds(r0, RB)] * att).astype(o_ref.dtype)
        return carry

    lax.fori_loop(0, nmb, mul_block, 0, unroll=min(2, nmb))


def attention_refinement_nhwc(x_nhwc, w3_hwio, bn3_scale, bn3_bias,
                              w1_io, bn1_scale, bn1_bias, *,
                              use_bf16_matmul=False):
    """NHWC-native ARM forward.  x: (N, H, W, Cin) -> (N, H, W, Cout)."""
    N, H, W, Cin = x_nhwc.shape
    Cout = w3_hwio.shape[-1]

    Cin_p = _round_up(Cin, 8)        # matmul-K alignment
    Cout_p = _round_up(Cout, 128)    # lane-dense output / full MXU N width
    mm_dtype = jnp.bfloat16 if use_bf16_matmul else jnp.float32

    # Single fused pad: +1 spatial halo for the 3x3 conv + channel padding.
    xp = jnp.pad(x_nhwc, ((0, 0), (1, 1), (1, 1), (0, Cin_p - Cin)))

    # Fold BN scales into the conv weights (per output channel) host-side so the
    # in-kernel epilogue is add-bias + ReLU only.
    w3 = w3_hwio.astype(jnp.float32) * bn3_scale.astype(jnp.float32)
    w3 = jnp.pad(w3, ((0, 0), (0, 0), (0, Cin_p - Cin), (0, Cout_p - Cout)))
    w3 = w3.reshape(9, Cin_p, Cout_p).astype(mm_dtype)
    w1 = w1_io.astype(jnp.float32) * bn1_scale.astype(jnp.float32)
    w1 = jnp.pad(w1, ((0, Cout_p - Cout), (0, Cout_p - Cout))).astype(mm_dtype)

    def _bias(v):
        return jnp.pad(v.astype(jnp.float32), (0, Cout_p - Cout)).reshape(1, Cout_p)

    b3, b1 = _bias(bn3_bias), _bias(bn1_bias)

    conv_rows = _pick_conv_rows(H, W)             # matmul M = conv_rows * W
    mul_rows = _largest_divisor_le(H, 8) * W      # <= 8-row store chunks

    # VMEM budget, clamped to the attached generation's physical capacity.
    x_bytes = jnp.dtype(x_nhwc.dtype).itemsize
    w_bytes = jnp.dtype(mm_dtype).itemsize
    est = (2 * (H + 2) * (W + 2) * Cin_p * x_bytes      # double-buffered x block
           + 2 * H * W * Cout_p * x_bytes               # double-buffered out block
           + H * W * Cout_p * 4                         # y scratch (f32)
           + 2 * (9 * Cin_p * Cout_p + Cout_p * Cout_p) * w_bytes
           + 8 * Cout_p * 4 + (1 << 20))
    vmem_limit = int(min(max(int(1.3 * est), 16 << 20),
                         int(0.85 * _vmem_cap_bytes())))

    kernel = functools.partial(_arm_kernel, conv_rows=conv_rows, mul_rows=mul_rows)

    out = pl.pallas_call(
        kernel,
        out_shape=jax.ShapeDtypeStruct((N, H * W, Cout_p), x_nhwc.dtype),
        grid_spec=pltpu.PrefetchScalarGridSpec(
            num_scalar_prefetch=0,
            grid=(N,),
            in_specs=[
                pl.BlockSpec((None, H + 2, W + 2, Cin_p), lambda n: (n, 0, 0, 0)),
                _const_spec((9, Cin_p, Cout_p), lambda n: (0, 0, 0)),
                _const_spec((1, Cout_p), lambda n: (0, 0)),
                _const_spec((Cout_p, Cout_p), lambda n: (0, 0)),
                _const_spec((1, Cout_p), lambda n: (0, 0)),
            ],
            out_specs=pl.BlockSpec((None, H * W, Cout_p), lambda n: (n, 0, 0)),
            scratch_shapes=[pltpu.VMEM((H * W, Cout_p), jnp.float32),
                            pltpu.VMEM((1, Cout_p), jnp.float32)],
        ),
        compiler_params=pltpu.CompilerParams(
            dimension_semantics=("parallel",),
            vmem_limit_bytes=vmem_limit,
        ),
    )(xp, w3, b3, w1, b1)

    out = out.reshape(N, H, W, Cout_p)     # free row-major metadata reshape
    return out[..., :Cout] if Cout_p != Cout else out


def attention_refinement(x_nchw, w3_oihw, bn3_scale, bn3_bias,
                         w1_oihw, bn1_scale, bn1_bias):
    """PyTorch-layout (NCHW / OIHW) glue for the demo/reference check.

    Production use should stay channels-last end-to-end (each transpose is an
    extra HBM round trip) and keep the Cout_p-padded channel layout downstream.
    """
    x_nhwc = jnp.transpose(x_nchw, (0, 2, 3, 1))
    w3_hwio = jnp.transpose(w3_oihw, (2, 3, 1, 0))          # OIHW -> HWIO
    w1_io = jnp.transpose(w1_oihw[:, :, 0, 0], (1, 0))      # OI11 -> (I, O)
    out_nhwc = attention_refinement_nhwc(x_nhwc, w3_hwio, bn3_scale, bn3_bias,
                                         w1_io, bn1_scale, bn1_bias)
    return jnp.transpose(out_nhwc, (0, 3, 1, 2))


def _reference(x, w3, s3, b3, w1, s1, b1):
    """Pure-JAX reference of the same forward pass (NCHW)."""
    y = jax.lax.conv_general_dilated(
        x, w3, (1, 1), 'SAME', dimension_numbers=('NCHW', 'OIHW', 'NCHW'))
    y = jnp.maximum(y * s3[None, :, None, None] + b3[None, :, None, None], 0.0)
    pooled = jnp.mean(y, axis=(2, 3), keepdims=True)
    att = jax.lax.conv_general_dilated(
        pooled, w1, (1, 1), 'VALID', dimension_numbers=('NCHW', 'OIHW', 'NCHW'))
    att = jnp.maximum(att * s1[None, :, None, None] + b1[None, :, None, None], 0.0)
    att = jax.nn.sigmoid(att)
    return y * att


if __name__ == "__main__":
    N, Cin, Cout, H, W = 2, 4, 8, 16, 16
    eps = 1e-5

    key = jax.random.PRNGKey(0)
    k_x, k_w3, k_w1 = jax.random.split(key, 3)

    x = jax.random.normal(k_x, (N, Cin, H, W), jnp.float32)
    # Conv weights (bias=False in _ConvBNReLU), deterministic init.
    w3 = jax.random.normal(k_w3, (Cout, Cin, 3, 3), jnp.float32) * 0.1
    w1 = jax.random.normal(k_w1, (Cout, Cout, 1, 1), jnp.float32) * 0.1

    # BatchNorm2d default init (inference): gamma=1, beta=0, mean=0, var=1.
    gamma3 = jnp.ones((Cout,), jnp.float32); beta3 = jnp.zeros((Cout,), jnp.float32)
    mean3 = jnp.zeros((Cout,), jnp.float32); var3 = jnp.ones((Cout,), jnp.float32)
    gamma1 = jnp.ones((Cout,), jnp.float32); beta1 = jnp.zeros((Cout,), jnp.float32)
    mean1 = jnp.zeros((Cout,), jnp.float32); var1 = jnp.ones((Cout,), jnp.float32)

    # Fold BN into per-channel scale / bias (scale is folded into the weights
    # inside the wrapper; bias stays a separate add).
    s3 = gamma3 / jnp.sqrt(var3 + eps); b3 = beta3 - mean3 * s3
    s1 = gamma1 / jnp.sqrt(var1 + eps); b1 = beta1 - mean1 * s1

    out = jax.jit(attention_refinement)(x, w3, s3, b3, w1, s1, b1)
    out = jax.block_until_ready(out)

    ref = _reference(x, w3, s3, b3, w1, s1, b1)
    assert out.shape == (N, Cout, H, W)
    err = jnp.max(jnp.abs(out - ref))
    assert jnp.allclose(out, ref, atol=1e-4, rtol=1e-4), f"max abs err {err}"

    print("KERNEL_OK")
</pallas_src>

<mosaic_0001>
module attributes {stable_mosaic.version = 11 : i64} {
  func.func @_arm_kernel(%arg0: i32, %arg1: memref<1x18x18x8xf32, #tpu.memory_space<vmem>>, %arg2: memref<9x8x128xf32, #tpu.memory_space<vmem>>, %arg3: memref<1x128xf32, #tpu.memory_space<vmem>>, %arg4: memref<128x128xf32, #tpu.memory_space<vmem>>, %arg5: memref<1x128xf32, #tpu.memory_space<vmem>>, %arg6: memref<1x256x128xf32, #tpu.memory_space<vmem>>, %arg7: memref<256x128xf32, #tpu.memory_space<vmem>>, %arg8: memref<1x128xf32, #tpu.memory_space<vmem>>) attributes {dimension_semantics = [#tpu.dimension_semantics<parallel>], iteration_bounds = array<i64: 2>, scalar_prefetch = 0 : i64, scratch_operands = 2 : i64, tpu.core_type = #tpu.core_type<tc>, window_params = [{transform_indices = @transform_0, window_bounds = array<i64: 1, 18, 18, 8>}, {pipeline_mode = #tpu.pipeline_mode<synchronous>, transform_indices = @transform_1, window_bounds = array<i64: 9, 8, 128>}, {pipeline_mode = #tpu.pipeline_mode<synchronous>, transform_indices = @transform_2, window_bounds = array<i64: 1, 128>}, {pipeline_mode = #tpu.pipeline_mode<synchronous>, transform_indices = @transform_3, window_bounds = array<i64: 128, 128>}, {pipeline_mode = #tpu.pipeline_mode<synchronous>, transform_indices = @transform_4, window_bounds = array<i64: 1, 128>}, {transform_indices = @transform_5, window_bounds = array<i64: 1, 256, 128>}]} {
    %c0 = arith.constant 0 : index
    %c0_0 = arith.constant 0 : index
    %0 = vector.load %arg3[%c0, %c0_0] : memref<1x128xf32, #tpu.memory_space<vmem>>, vector<1x128xf32>
    %cst = arith.constant 0.000000e+00 : f32
    %1 = vector.broadcast %cst : f32 to vector<1x128xf32>
    %c0_1 = arith.constant 0 : index
    %c0_2 = arith.constant 0 : index
    %2 = vector.load %arg8[%c0_1, %c0_2] : memref<1x128xf32, #tpu.memory_space<vmem>>, vector<1x128xf32>
    tpu.vector_store %arg8[%c0_1, %c0_2], %1 {strides = array<i32>} : memref<1x128xf32, #tpu.memory_space<vmem>>, vector<1x128xf32>,
    %c0_i32 = arith.constant 0 : i32
    %c16_i32 = arith.constant 16 : i32
    %3 = arith.muli %c0_i32, %c16_i32 : i32
    %4 = tpu.assume_multiple %3, 16 : i32
    %c256_i32 = arith.constant 256 : i32
    %5 = arith.muli %c0_i32, %c256_i32 : i32
    %6 = tpu.assume_multiple %5, 256 : i32
    %cst_3 = arith.constant 0.000000e+00 : f32
    %7 = vector.broadcast %cst_3 : f32 to vector<256x128xf32>
    %c0_i32_4 = arith.constant 0 : i32
    %8 = arith.addi %4, %c0_i32_4 : i32
    %c0_5 = arith.constant 0 : index
    %9 = arith.index_cast %8 : i32 to index
    %c0_6 = arith.constant 0 : index
    %c0_7 = arith.constant 0 : index
    %10 = vector.load %arg1[%c0_5, %9, %c0_6, %c0_7] : memref<1x18x18x8xf32, #tpu.memory_space<vmem>>, vector<1x16x18x8xf32>
    %11 = vector.shape_cast %10 : vector<1x16x18x8xf32> to vector<16x18x8xf32>
    %12 = vector.extract_strided_slice %11 {offsets = [0, 0, 0], sizes = [16, 16, 8], strides = [1, 1, 1]} : vector<16x18x8xf32> to vector<16x16x8xf32>
    %13 = vector.shape_cast %12 : vector<16x16x8xf32> to vector<256x8xf32>
    %c0_8 = arith.constant 0 : index
    %c0_9 = arith.constant 0 : index
    %c0_10 = arith.constant 0 : index
    %14 = vector.load %arg2[%c0_8, %c0_9, %c0_10] : memref<9x8x128xf32, #tpu.memory_space<vmem>>, vector<1x8x128xf32>
    %15 = vector.shape_cast %14 : vector<1x8x128xf32> to vector<8x128xf32>
    %cst_11 = arith.constant dense<0.000000e+00> : vector<256x128xf32>
    %16 = tpu.matmul %13, %15, %cst_11 {dimension_numbers = #tpu.dot_dimension_numbers<[1], [0], [0], [1], [0, 0, 1, 1], [], []>} : vector<256x8xf32>, vector<8x128xf32>, vector<256x128xf32> -> vector<256x128xf32>
    %17 = arith.addf %7, %16 : vector<256x128xf32>
    %18 = vector.extract_strided_slice %11 {offsets = [0, 1, 0], sizes = [16, 16, 8], strides = [1, 1, 1]} : vector<16x18x8xf32> to vector<16x16x8xf32>
    %19 = vector.shape_cast %18 : vector<16x16x8xf32> to vector<256x8xf32>
    %c1 = arith.constant 1 : index
    %c0_12 = arith.constant 0 : index
    %c0_13 = arith.constant 0 : index
    %20 = vector.load %arg2[%c1, %c0_12, %c0_13] : memref<9x8x128xf32, #tpu.memory_space<vmem>>, vector<1x8x128xf32>
    %21 = vector.shape_cast %20 : vector<1x8x128xf32> to vector<8x128xf32>
    %cst_14 = arith.constant dense<0.000000e+00> : vector<256x128xf32>
    %22 = tpu.matmul %19, %21, %cst_14 {dimension_numbers = #tpu.dot_dimension_numbers<[1], [0], [0], [1], [0, 0, 1, 1], [], []>} : vector<256x8xf32>, vector<8x128xf32>, vector<256x128xf32> -> vector<256x128xf32>
    %23 = arith.addf %17, %22 : vector<256x128xf32>
    %24 = vector.extract_strided_slice %11 {offsets = [0, 2, 0], sizes = [16, 16, 8], strides = [1, 1, 1]} : vector<16x18x8xf32> to vector<16x16x8xf32>
    %25 = vector.shape_cast %24 : vector<16x16x8xf32> to vector<256x8xf32>
    %c2 = arith.constant 2 : index
    %c0_15 = arith.constant 0 : index
    %c0_16 = arith.constant 0 : index
    %26 = vector.load %arg2[%c2, %c0_15, %c0_16] : memref<9x8x128xf32, #tpu.memory_space<vmem>>, vector<1x8x128xf32>
    %27 = vector.shape_cast %26 : vector<1x8x128xf32> to vector<8x128xf32>
    %cst_17 = arith.constant dense<0.000000e+00> : vector<256x128xf32>
    %28 = tpu.matmul %25, %27, %cst_17 {dimension_numbers = #tpu.dot_dimension_numbers<[1], [0], [0], [1], [0, 0, 1, 1], [], []>} : vector<256x8xf32>, vector<8x128xf32>, vector<256x128xf32> -> vector<256x128xf32>
    %29 = arith.addf %23, %28 : vector<256x128xf32>
    %c1_i32 = arith.constant 1 : i32
    %30 = arith.addi %4, %c1_i32 : i32
    %c0_18 = arith.constant 0 : index
    %31 = arith.index_cast %30 : i32 to index
    %c0_19 = arith.constant 0 : index
    %c0_20 = arith.constant 0 : index
    %32 = vector.load %arg1[%c0_18, %31, %c0_19, %c0_20] : memref<1x18x18x8xf32, #tpu.memory_space<vmem>>, vector<1x16x18x8xf32>
    %33 = vector.shape_cast %32 : vector<1x16x18x8xf32> to vector<16x18x8xf32>
    %34 = vector.extract_strided_slice %33 {offsets = [0, 0, 0], sizes = [16, 16, 8], strides = [1, 1, 1]} : vector<16x18x8xf32> to vector<16x16x8xf32>
    %35 = vector.shape_cast %34 : vector<16x16x8xf32> to vector<256x8xf32>
    %c3 = arith.constant 3 : index
    %c0_21 = arith.constant 0 : index
    %c0_22 = arith.constant 0 : index
    %36 = vector.load %arg2[%c3, %c0_21, %c0_22] : memref<9x8x128xf32, #tpu.memory_space<vmem>>, vector<1x8x128xf32>
    %37 = vector.shape_cast %36 : vector<1x8x128xf32> to vector<8x128xf32>
    %cst_23 = arith.constant dense<0.000000e+00> : vector<256x128xf32>
    %38 = tpu.matmul %35, %37, %cst_23 {dimension_numbers = #tpu.dot_dimension_numbers<[1], [0], [0], [1], [0, 0, 1, 1], [], []>} : vector<256x8xf32>, vector<8x128xf32>, vector<256x128xf32> -> vector<256x128xf32>
    %39 = arith.addf %29, %38 : vector<256x128xf32>
    %40 = vector.extract_strided_slice %33 {offsets = [0, 1, 0], sizes = [16, 16, 8], strides = [1, 1, 1]} : vector<16x18x8xf32> to vector<16x16x8xf32>
    %41 = vector.shape_cast %40 : vector<16x16x8xf32> to vector<256x8xf32>
    %c4 = arith.constant 4 : index
    %c0_24 = arith.constant 0 : index
    %c0_25 = arith.constant 0 : index
    %42 = vector.load %arg2[%c4, %c0_24, %c0_25] : memref<9x8x128xf32, #tpu.memory_space<vmem>>, vector<1x8x128xf32>
    %43 = vector.shape_cast %42 : vector<1x8x128xf32> to vector<8x128xf32>
    %cst_26 = arith.constant dense<0.000000e+00> : vector<256x128xf32>
    %44 = tpu.matmul %41, %43, %cst_26 {dimension_numbers = #tpu.dot_dimension_numbers<[1], [0], [0], [1], [0, 0, 1, 1], [], []>} : vector<256x8xf32>, vector<8x128xf32>, vector<256x128xf32> -> vector<256x128xf32>
    %45 = arith.addf %39, %44 : vector<256x128xf32>
    %46 = vector.extract_strided_slice %33 {offsets = [0, 2, 0], sizes = [16, 16, 8], strides = [1, 1, 1]} : vector<16x18x8xf32> to vector<16x16x8xf32>
    %47 = vector.shape_cast %46 : vector<16x16x8xf32> to vector<256x8xf32>
    %c5 = arith.constant 5 : index
    %c0_27 = arith.constant 0 : index
    %c0_28 = arith.constant 0 : index
    %48 = vector.load %arg2[%c5, %c0_27, %c0_28] : memref<9x8x128xf32, #tpu.memory_space<vmem>>, vector<1x8x128xf32>
    %49 = vector.shape_cast %48 : vector<1x8x128xf32> to vector<8x128xf32>
    %cst_29 = arith.constant dense<0.000000e+00> : vector<256x128xf32>
    %50 = tpu.matmul %47, %49, %cst_29 {dimension_numbers = #tpu.dot_dimension_numbers<[1], [0], [0], [1], [0, 0, 1, 1], [], []>} : vector<256x8xf32>, vector<8x128xf32>, vector<256x128xf32> -> vector<256x128xf32>
    %51 = arith.addf %45, %50 : vector<256x128xf32>
    %c2_i32 = arith.constant 2 : i32
    %52 = arith.addi %4, %c2_i32 : i32
    %c0_30 = arith.constant 0 : index
    %53 = arith.index_cast %52 : i32 to index
    %c0_31 = arith.constant 0 : index
    %c0_32 = arith.constant 0 : index
    %54 = vector.load %arg1[%c0_30, %53, %c0_31, %c0_32] : memref<1x18x18x8xf32, #tpu.memory_space<vmem>>, vector<1x16x18x8xf32>
    %55 = vector.shape_cast %54 : vector<1x16x18x8xf32> to vector<16x18x8xf32>
    %56 = vector.extract_strided_slice %55 {offsets = [0, 0, 0], sizes = [16, 16, 8], strides = [1, 1, 1]} : vector<16x18x8xf32> to vector<16x16x8xf32>
    %57 = vector.shape_cast %56 : vector<16x16x8xf32> to vector<256x8xf32>
    %c6 = arith.constant 6 : index
    %c0_33 = arith.constant 0 : index
    %c0_34 = arith.constant 0 : index
    %58 = vector.load %arg2[%c6, %c0_33, %c0_34] : memref<9x8x128xf32, #tpu.memory_space<vmem>>, vector<1x8x128xf32>
    %59 = vector.shape_cast %58 : vector<1x8x128xf32> to vector<8x128xf32>
    %cst_35 = arith.constant dense<0.000000e+00> : vector<256x128xf32>
    %60 = tpu.matmul %57, %59, %cst_35 {dimension_numbers = #tpu.dot_dimension_numbers<[1], [0], [0], [1], [0, 0, 1, 1], [], []>} : vector<256x8xf32>, vector<8x128xf32>, vector<256x128xf32> -> vector<256x128xf32>
    %61 = arith.addf %51, %60 : vector<256x128xf32>
    %62 = vector.extract_strided_slice %55 {offsets = [0, 1, 0], sizes = [16, 16, 8], strides = [1, 1, 1]} : vector<16x18x8xf32> to vector<16x16x8xf32>
    %63 = vector.shape_cast %62 : vector<16x16x8xf32> to vector<256x8xf32>
    %c7 = arith.constant 7 : index
    %c0_36 = arith.constant 0 : index
    %c0_37 = arith.constant 0 : index
    %64 = vector.load %arg2[%c7, %c0_36, %c0_37] : memref<9x8x128xf32, #tpu.memory_space<vmem>>, vector<1x8x128xf32>
    %65 = vector.shape_cast %64 : vector<1x8x128xf32> to vector<8x128xf32>
    %cst_38 = arith.constant dense<0.000000e+00> : vector<256x128xf32>
    %66 = tpu.matmul %63, %65, %cst_38 {dimension_numbers = #tpu.dot_dimension_numbers<[1], [0], [0], [1], [0, 0, 1, 1], [], []>} : vector<256x8xf32>, vector<8x128xf32>, vector<256x128xf32> -> vector<256x128xf32>
    %67 = arith.addf %61, %66 : vector<256x128xf32>
    %68 = vector.extract_strided_slice %55 {offsets = [0, 2, 0], sizes = [16, 16, 8], strides = [1, 1, 1]} : vector<16x18x8xf32> to vector<16x16x8xf32>
    %69 = vector.shape_cast %68 : vector<16x16x8xf32> to vector<256x8xf32>
    %c8 = arith.constant 8 : index
    %c0_39 = arith.constant 0 : index
    %c0_40 = arith.constant 0 : index
    %70 = vector.load %arg2[%c8, %c0_39, %c0_40] : memref<9x8x128xf32, #tpu.memory_space<vmem>>, vector<1x8x128xf32>
    %71 = vector.shape_cast %70 : vector<1x8x128xf32> to vector<8x128xf32>
    %cst_41 = arith.constant dense<0.000000e+00> : vector<256x128xf32>
    %72 = tpu.matmul %69, %71, %cst_41 {dimension_numbers = #tpu.dot_dimension_numbers<[1], [0], [0], [1], [0, 0, 1, 1], [], []>} : vector<256x8xf32>, vector<8x128xf32>, vector<256x128xf32> -> vector<256x128xf32>
    %73 = arith.addf %67, %72 : vector<256x128xf32>
    %74 = vector.broadcast %0 : vector<1x128xf32> to vector<256x128xf32>
    %75 = arith.addf %73, %74 : vector<256x128xf32>
    %cst_42 = arith.constant 0.000000e+00 : f32
    %76 = vector.broadcast %cst_42 : f32 to vector<256x128xf32>
    %77 = arith.maximumf %75, %76 : vector<256x128xf32>
    %78 = arith.index_cast %6 : i32 to index
    %c0_43 = arith.constant 0 : index
    %79 = vector.load %arg7[%78, %c0_43] : memref<256x128xf32, #tpu.memory_space<vmem>>, vector<256x128xf32>
    tpu.vector_store %arg7[%78, %c0_43], %77 {strides = array<i32>} : memref<256x128xf32, #tpu.memory_space<vmem>>, vector<256x128xf32>,
    %c0_44 = arith.constant 0 : index
    %c0_45 = arith.constant 0 : index
    %80 = vector.load %arg8[%c0_44, %c0_45] : memref<1x128xf32, #tpu.memory_space<vmem>>, vector<1x128xf32>
    %cst_46 = arith.constant dense<0.000000e+00> : vector<128xf32>
    %81 = vector.multi_reduction <add>, %77, %cst_46 [0] : vector<256x128xf32> to vector<128xf32>
    %82 = vector.shape_cast %81 : vector<128xf32> to vector<1x128xf32>
    %83 = arith.addf %80, %82 : vector<1x128xf32>
    %c0_47 = arith.constant 0 : index
    %c0_48 = arith.constant 0 : index
    %84 = vector.load %arg8[%c0_47, %c0_48] : memref<1x128xf32, #tpu.memory_space<vmem>>, vector<1x128xf32>
    tpu.vector_store %arg8[%c0_47, %c0_48], %83 {strides = array<i32>} : memref<1x128xf32, #tpu.memory_space<vmem>>, vector<1x128xf32>,
    %c1_i32_49 = arith.constant 1 : i32
    %c0_50 = arith.constant 0 : index
    %c0_51 = arith.constant 0 : index
    %85 = vector.load %arg8[%c0_50, %c0_51] : memref<1x128xf32, #tpu.memory_space<vmem>>, vector<1x128xf32>
    %cst_52 = arith.constant 3.906250e-03 : f32
    %86 = vector.broadcast %cst_52 : f32 to vector<1x128xf32>
    %87 = arith.mulf %85, %86 : vector<1x128xf32>
    %c0_53 = arith.constant 0 : index
    %c0_54 = arith.constant 0 : index
    %88 = vector.load %arg4[%c0_53, %c0_54] : memref<128x128xf32, #tpu.memory_space<vmem>>, vector<128x128xf32>
    %cst_55 = arith.constant dense<0.000000e+00> : vector<1x128xf32>
    %89 = tpu.matmul %87, %88, %cst_55 {dimension_numbers = #tpu.dot_dimension_numbers<[1], [0], [0], [1], [0, 0, 1, 1], [], []>} : vector<1x128xf32>, vector<128x128xf32>, vector<1x128xf32> -> vector<1x128xf32>
    %c0_56 = arith.constant 0 : index
    %c0_57 = arith.constant 0 : index
    %90 = vector.load %arg5[%c0_56, %c0_57] : memref<1x128xf32, #tpu.memory_space<vmem>>, vector<1x128xf32>
    %91 = arith.addf %89, %90 : vector<1x128xf32>
    %cst_58 = arith.constant 0.000000e+00 : f32
    %92 = vector.broadcast %cst_58 : f32 to vector<1x128xf32>
    %93 = arith.maximumf %91, %92 : vector<1x128xf32>
    %cst_59 = arith.constant 0.000000e+00 : f32
    %94 = vector.broadcast %cst_59 : f32 to vector<1x128xf32>
    %95 = arith.subf %94, %93 : vector<1x128xf32>
    %96 = math.exp %95 : vector<1x128xf32>
    %cst_60 = arith.constant 1.000000e+00 : f32
    %97 = vector.broadcast %cst_60 : f32 to vector<1x128xf32>
    %98 = arith.addf %97, %96 : vector<1x128xf32>
    %99 = tpu.reciprocal %98 : vector<1x128xf32> -> vector<1x128xf32>
    %c0_i32_61 = arith.constant 0 : i32
    %c128_i32 = arith.constant 128 : i32
    %100 = arith.muli %c0_i32_61, %c128_i32 : i32
    %101 = tpu.assume_multiple %100, 128 : i32
    %102 = arith.index_cast %101 : i32 to index
    %c0_62 = arith.constant 0 : index
    %103 = vector.load %arg7[%102, %c0_62] : memref<256x128xf32, #tpu.memory_space<vmem>>, vector<128x128xf32>
    %104 = vector.broadcast %99 : vector<1x128xf32> to vector<128x128xf32>
    %105 = arith.mulf %103, %104 : vector<128x128xf32>
    %c0_63 = arith.constant 0 : index
    %106 = arith.index_cast %101 : i32 to index
    %c0_64 = arith.constant 0 : index
    %107 = vector.load %arg6[%c0_63, %106, %c0_64] : memref<1x256x128xf32, #tpu.memory_space<vmem>>, vector<1x128x128xf32>
    %108 = vector.shape_cast %107 : vector<1x128x128xf32> to vector<128x128xf32>
    %109 = vector.shape_cast %105 : vector<128x128xf32> to vector<1x128x128xf32>
    tpu.vector_store %arg6[%c0_63, %106, %c0_64], %109 {strides = array<i32>} : memref<1x256x128xf32, #tpu.memory_space<vmem>>, vector<1x128x128xf32>,
    %c1_i32_65 = arith.constant 1 : i32
    %c128_i32_66 = arith.constant 128 : i32
    %110 = arith.muli %c1_i32_65, %c128_i32_66 : i32
    %111 = tpu.assume_multiple %110, 128 : i32
    %112 = arith.index_cast %111 : i32 to index
    %c0_67 = arith.constant 0 : index
    %113 = vector.load %arg7[%112, %c0_67] : memref<256x128xf32, #tpu.memory_space<vmem>>, vector<128x128xf32>
    %114 = vector.broadcast %99 : vector<1x128xf32> to vector<128x128xf32>
    %115 = arith.mulf %113, %114 : vector<128x128xf32>
    %c0_68 = arith.constant 0 : index
    %116 = arith.index_cast %111 : i32 to index
    %c0_69 = arith.constant 0 : index
    %117 = vector.load %arg6[%c0_68, %116, %c0_69] : memref<1x256x128xf32, #tpu.memory_space<vmem>>, vector<1x128x128xf32>
    %118 = vector.shape_cast %117 : vector<1x128x128xf32> to vector<128x128xf32>
    %119 = vector.shape_cast %115 : vector<128x128xf32> to vector<1x128x128xf32>
    tpu.vector_store %arg6[%c0_68, %116, %c0_69], %119 {strides = array<i32>} : memref<1x256x128xf32, #tpu.memory_space<vmem>>, vector<1x128x128xf32>,
    %c2_i32_70 = arith.constant 2 : i32
    return
  }
  func.func @transform_0(%arg0: i32) -> (i32, i32, i32, i32) {
    %c0_i32 = arith.constant 0 : i32
    %c0_i32_0 = arith.constant 0 : i32
    %c0_i32_1 = arith.constant 0 : i32
    %c0_i32_2 = arith.constant 0 : i32
    return %arg0, %c0_i32, %c0_i32_0, %c0_i32_1 : i32, i32, i32, i32
  }
  func.func @transform_1(%arg0: i32) -> (i32, i32, i32) {
    %c0_i32 = arith.constant 0 : i32
    %c0_i32_0 = arith.constant 0 : i32
    %c0_i32_1 = arith.constant 0 : i32
    %c0_i32_2 = arith.constant 0 : i32
    return %c0_i32, %c0_i32_0, %c0_i32_1 : i32, i32, i32
  }
  func.func @transform_2(%arg0: i32) -> (i32, i32) {
    %c0_i32 = arith.constant 0 : i32
    %c0_i32_0 = arith.constant 0 : i32
    %c0_i32_1 = arith.constant 0 : i32
    return %c0_i32, %c0_i32_0 : i32, i32
  }
  func.func @transform_3(%arg0: i32) -> (i32, i32) {
    %c0_i32 = arith.constant 0 : i32
    %c0_i32_0 = arith.constant 0 : i32
    %c0_i32_1 = arith.constant 0 : i32
    return %c0_i32, %c0_i32_0 : i32, i32
  }
  func.func @transform_4(%arg0: i32) -> (i32, i32) {
    %c0_i32 = arith.constant 0 : i32
    %c0_i32_0 = arith.constant 0 : i32
    %c0_i32_1 = arith.constant 0 : i32
    return %c0_i32, %c0_i32_0 : i32, i32
  }
  func.func @transform_5(%arg0: i32) -> (i32, i32, i32) {
    %c0_i32 = arith.constant 0 : i32
    %c0_i32_0 = arith.constant 0 : i32
    %c0_i32_1 = arith.constant 0 : i32
    return %arg0, %c0_i32, %c0_i32_0 : i32, i32, i32
  }
}

</mosaic_0001>

<llo_original>
// kernel: attention_refinement.1
$region0: #{attention_refinement.1}
  #allocation0 [shape = 'u32[]', space=smem, size = 0x4, offset = 0x4, fixed_abs, tag = 'smem constant byte address 0x4 - core index']
  #allocation1 [shape = 'u32[144,128]{1,0:T(1,128)}', space=vmem, size = 0x12000, scoped, tag = 'internal scratch']
  #allocation2 [shape = 'f32[256,128]{1,0:T(8,128)}', space=vmem, size = 0x20000, scoped, tag = 'scratch operand']
  #allocation3 [shape = 'f32[1,128]{1,0:T(1,128)}', space=vmem, size = 0x200, scoped, tag = 'scratch operand']
  %s0 = inlined_call_operand.vmem [shape: f32[2,18,18,8], index: 0, kind: input, shape index: {}]
  %s1 = inlined_call_operand.vmem [shape: f32[9,8,128], index: 1, kind: input, shape index: {}]
  %s2 = inlined_call_operand.vmem [shape: f32[1,128], index: 2, kind: input, shape index: {}]
  %s3 = inlined_call_operand.vmem [shape: f32[128,128], index: 3, kind: input, shape index: {}]
  %s4 = inlined_call_operand.vmem [shape: f32[1,128], index: 4, kind: input, shape index: {}]
  %s5 = inlined_call_operand.vmem [shape: f32[2,256,128], index: 5, kind: output, shape index: {}]
  %s6 = sld [smem:[#allocation0]]
  $region53: #{attention_refinement.1} parent=0
    _
  %s8 = ssub.s32 1, %s6
  %s9 = scalar_select 0, %s8, %s6
  loop: start=0, step=1, limit=4
  $region2: #{attention_refinement.1} parent=0 // loop_pre_header
    _
  $region3: #{attention_refinement.1} parent=0 // loop_header
    %s11 = sphi 0, %s15
    %p12 = scmp.ge.s32.totalorder %s11, 4
    %s21 = sphi 0, %s23
    %s24 = sphi 0, %s21
    %s25 = sphi 0, %s24
    %s41 = sphi 0, %s25
    %s45 = sphi 0, %s45
    %s47 = sphi 0, %s45
    %s48 = sphi 0, %s47
    %s62 = sphi 0, %s48
    %s66 = sphi 0, %s66
    %s68 = sphi 0, %s66
    %s69 = sphi 0, %s68
    %s83 = sphi 0, %s69
    %s87 = sphi 0, %s87
    %s89 = sphi 0, %s87
    %s90 = sphi 0, %s89
    %s104 = sphi 0, %s90
    %s108 = sphi 0, %s108
    %s110 = sphi 0, %s108
    %s111 = sphi 0, %s110
    %s125 = sphi 0, %s111
    %s131 = sphi 0, %s133
    %s134 = sphi 0, %s131
    %s135 = sphi 0, %s134
    %s151 = sphi 0, %s135
  $region4: #{attention_refinement.1} parent=0 // loop_header_branch
    %14 = sbr.rel (%p12) target = $region8
  $region5: #{attention_refinement.1} parent=0 // loop_body
    %s16 = ssub.s32 %s11, 1
    %s17 = ssub.s32 %s11, 2
    %s18 = sadd.s32 %s11, 1
    %s19 = ssub.s32 %s11, %s18
    %p20 = scmp.eq.s32.totalorder %s19, 0
    %s22 = sadd.s32 %s21, 1
    %s23 = scalar_select %p20, %s21, %s22
    %p26 = pneg %p20
    %p27 = scmp.eq.s32.totalorder %s11, 1
    %p28 = por %p26, %p27
    %p29 = scmp.ne.s32.totalorder %s21, %s24
    %p30 = scmp.eq.s32.totalorder %s11, 0
    %p31 = por %p29, %p30
    %p32 = scmp.ne.s32.totalorder %s21, %s24
    %p33 = scmp.eq.s32.totalorder %s16, 1
    %p34 = por %p32, %p33
    %p35 = scmp.ne.s32.totalorder %s24, %s25
    %p36 = scmp.eq.s32.totalorder %s16, 0
    %p37 = por %p35, %p36
    %p38 = scmp.ne.s32.totalorder %s24, %s25
    %p39 = scmp.eq.s32.totalorder %s17, 1
    %p40 = por %p38, %p39
    %p42 = scmp.ne.s32.totalorder %s25, %s41
    %p43 = scmp.eq.s32.totalorder %s17, 0
    %p44 = por %p42, %p43
    %s46 = sadd.s32 %s45, 1
    %p49 = scmp.eq.s32.totalorder %s11, 1
    %p50 = scmp.ne.s32.totalorder %s45, %s47
    %p51 = scmp.eq.s32.totalorder %s11, 0
    %p52 = por %p50, %p51
    %p53 = scmp.ne.s32.totalorder %s45, %s47
    %p54 = scmp.eq.s32.totalorder %s16, 1
    %p55 = por %p53, %p54
    %p56 = scmp.ne.s32.totalorder %s47, %s48
    %p57 = scmp.eq.s32.totalorder %s16, 0
    %p58 = por %p56, %p57
    %p59 = scmp.ne.s32.totalorder %s47, %s48
    %p60 = scmp.eq.s32.totalorder %s17, 1
    %p61 = por %p59, %p60
    %p63 = scmp.ne.s32.totalorder %s48, %s62
    %p64 = scmp.eq.s32.totalorder %s17, 0
    %p65 = por %p63, %p64
    %s67 = sadd.s32 %s66, 1
    %p70 = scmp.eq.s32.totalorder %s11, 1
    %p71 = scmp.ne.s32.totalorder %s66, %s68
    %p72 = scmp.eq.s32.totalorder %s11, 0
    %p73 = por %p71, %p72
    %p74 = scmp.ne.s32.totalorder %s66, %s68
    %p75 = scmp.eq.s32.totalorder %s16, 1
    %p76 = por %p74, %p75
    %p77 = scmp.ne.s32.totalorder %s68, %s69
    %p78 = scmp.eq.s32.totalorder %s16, 0
    %p79 = por %p77, %p78
    %p80 = scmp.ne.s32.totalorder %s68, %s69
    %p81 = scmp.eq.s32.totalorder %s17, 1
    %p82 = por %p80, %p81
    %p84 = scmp.ne.s32.totalorder %s69, %s83
    %p85 = scmp.eq.s32.totalorder %s17, 0
    %p86 = por %p84, %p85
    %s88 = sadd.s32 %s87, 1
    %p91 = scmp.eq.s32.totalorder %s11, 1
    %p92 = scmp.ne.s32.totalorder %s87, %s89
    %p93 = scmp.eq.s32.totalorder %s11, 0
    %p94 = por %p92, %p93
    %p95 = scmp.ne.s32.totalorder %s87, %s89
    %p96 = scmp.eq.s32.totalorder %s16, 1
    %p97 = por %p95, %p96
    %p98 = scmp.ne.s32.totalorder %s89, %s90
    %p99 = scmp.eq.s32.totalorder %s16, 0
    %p100 = por %p98, %p99
    %p101 = scmp.ne.s32.totalorder %s89, %s90
    %p102 = scmp.eq.s32.totalorder %s17, 1
    %p103 = por %p101, %p102
    %p105 = scmp.ne.s32.totalorder %s90, %s104
    %p106 = scmp.eq.s32.totalorder %s17, 0
    %p107 = por %p105, %p106
    %s109 = sadd.s32 %s108, 1
    %p112 = scmp.eq.s32.totalorder %s11, 1
    %p113 = scmp.ne.s32.totalorder %s108, %s110
    %p114 = scmp.eq.s32.totalorder %s11, 0
    %p115 = por %p113, %p114
    %p116 = scmp.ne.s32.totalorder %s108, %s110
    %p117 = scmp.eq.s32.totalorder %s16, 1
    %p118 = por %p116, %p117
    %p119 = scmp.ne.s32.totalorder %s110, %s111
    %p120 = scmp.eq.s32.totalorder %s16, 0
    %p121 = por %p119, %p120
    %p122 = scmp.ne.s32.totalorder %s110, %s111
    %p123 = scmp.eq.s32.totalorder %s17, 1
    %p124 = por %p122, %p123
    %p126 = scmp.ne.s32.totalorder %s111, %s125
    %p127 = scmp.eq.s32.totalorder %s17, 0
    %p128 = por %p126, %p127
    %s129 = ssub.s32 %s11, %s18
    %p130 = scmp.eq.s32.totalorder %s129, 0
    %s132 = sadd.s32 %s131, 1
    %s133 = scalar_select %p130, %s131, %s132
    %p136 = pneg %p130
    %p137 = scmp.eq.s32.totalorder %s11, 1
    %p138 = por %p136, %p137
    %p139 = scmp.ne.s32.totalorder %s131, %s134
    %p140 = scmp.eq.s32.totalorder %s11, 0
    %p141 = por %p139, %p140
    %p142 = scmp.ne.s32.totalorder %s131, %s134
    %p143 = scmp.eq.s32.totalorder %s16, 1
    %p144 = por %p142, %p143
    %p145 = scmp.ne.s32.totalorder %s134, %s135
    %p146 = scmp.eq.s32.totalorder %s16, 0
    %p147 = por %p145, %p146
    %p148 = scmp.ne.s32.totalorder %s134, %s135
    %p149 = scmp.eq.s32.totalorder %s17, 1
    %p150 = por %p148, %p149
    %p152 = scmp.ne.s32.totalorder %s135, %s151
    %p153 = scmp.eq.s32.totalorder %s17, 0
    %p154 = por %p152, %p153
    %p155 = scmp.le.s32.totalorder 1, %s11
    %p156 = scmp.lt.s32.totalorder %s11, 3
    %p157 = pnand %p155, %p156
    %p158 = pneg %p157
    // Predicated region
    $region9: #{attention_refinement.1} parent=5 // pred_check
      _
    $region10: #{attention_refinement.1} parent=5 // pred_check_branch
      %160 = sbr.rel (%p157) target = $region12
    $region11: #{attention_refinement.1} parent=5 // pred_region
      %s161 = ssub.s32 %s11, 1
      // Predicated region
      $region13: #{attention_refinement.1} parent=11 // pred_check
        %p162 = pneg %p58
      $region14: #{attention_refinement.1} parent=11 // pred_check_branch
        %164 = sbr.rel (%p162) target = $region16
      $region15: #{attention_refinement.1} parent=11 // pred_region
        _
      $region16: #{attention_refinement.1} parent=11 // pred_fallthru
        _
      // Predicated region
      $region17: #{attention_refinement.1} parent=11 // pred_check
        %p165 = pneg %p79
      $region18: #{attention_refinement.1} parent=11 // pred_check_branch
        %167 = sbr.rel (%p165) target = $region20
      $region19: #{attention_refinement.1} parent=11 // pred_region
        _
      $region20: #{attention_refinement.1} parent=11 // pred_fallthru
        _
      // Predicated region
      $region21: #{attention_refinement.1} parent=11 // pred_check
        %p168 = pneg %p100
      $region22: #{attention_refinement.1} parent=11 // pred_check_branch
        %170 = sbr.rel (%p168) target = $region24
      $region23: #{attention_refinement.1} parent=11 // pred_region
        _
      $region24: #{attention_refinement.1} parent=11 // pred_fallthru
        _
      // Predicated region
      $region25: #{attention_refinement.1} parent=11 // pred_check
        %p171 = pneg %p121
      $region26: #{attention_refinement.1} parent=11 // pred_check_branch
        %173 = sbr.rel (%p171) target = $region28
      $region27: #{attention_refinement.1} parent=11 // pred_region
        _
      $region28: #{attention_refinement.1} parent=11 // pred_fallthru
        _
    $region12: #{attention_refinement.1} parent=5 // pred_fallthru
      _
    %p174 = scmp.lt.s32.totalorder %s11, 2
    // Predicated region
    $region29: #{attention_refinement.1} parent=5 // pred_check
      %p175 = pneg %p174
    $region30: #{attention_refinement.1} parent=5 // pred_check_branch
      %177 = sbr.rel (%p175) target = $region32
    $region31: #{attention_refinement.1} parent=5 // pred_region
      // Predicated region
      $region33: #{attention_refinement.1} parent=31 // pred_check
        %p178 = pneg %p31
      $region34: #{attention_refinement.1} parent=31 // pred_check_branch
        %180 = sbr.rel (%p178) target = $region36
      $region35: #{attention_refinement.1} parent=31 // pred_region
        %p181 = scmp.lt.s32.totalorder %s11, 1
        %s182 = scalar_select %p181, %s11, 1
        %s183 = smul.addr %s182, 54
        %s184 = smul.addr %s183, 8
        %s185 = scalar_lea.vmem %s0, %s184
      $region36: #{attention_refinement.1} parent=31 // pred_fallthru
        _
    $region32: #{attention_refinement.1} parent=5 // pred_fallthru
      _
    %p186 = scmp.le.s32.totalorder 1, %s11
    %p187 = scmp.lt.s32.totalorder %s11, 3
    %p188 = pnand %p186, %p187
    %p189 = pneg %p188
    // Predicated region
    $region37: #{attention_refinement.1} parent=5 // pred_check
      _
    $region38: #{attention_refinement.1} parent=5 // pred_check_branch
      %191 = sbr.rel (%p188) target = $region40
    $region39: #{attention_refinement.1} parent=5 // pred_region
      %s192 = ssub.s32 %s11, 1
      %p193 = scmp.lt.s32.totalorder %s16, 1
      %s194 = scalar_select %p193, %s16, 1
      %s195 = smul.addr %s194, 54
      %s196 = smul.addr %s195, 8
      %s197 = scalar_lea.vmem %s0, %s196
      %p198 = pneg %p37
      %p199 = pneg %p34
      %p200 = pneg %p58
      %p201 = pneg %p55
      %p202 = pneg %p79
      %p203 = pneg %p76
      %p204 = pneg %p100
      %p205 = pneg %p97
      %p206 = pneg %p121
      %p207 = pneg %p118
      %p208 = pneg %p147
      %p209 = pneg %p144
      %p210 = scmp.lt.s32.totalorder %s16, 1
      %s211 = scalar_select %p210, %s16, 1
      %s212 = smul.addr %s211, 32
      %s213 = smul.addr %s212, 8
      %s214 = scalar_lea.vmem %s5, %s213
      %p215 = scmp.lt.s32.totalorder %s16, 1
      %s216 = scalar_select %p215, %s16, 1
      %s217 = smul.addr %s216, 54
      %s218 = smul.addr %s217, 8
      %s219 = scalar_lea.vmem %s0, %s218
      %p220 = scmp.lt.s32.totalorder %s16, 1
      %s221 = scalar_select %p220, %s16, 1
      %s222 = smul.addr %s221, 32
      %s223 = smul.addr %s222, 8
      %s224 = scalar_lea.vmem %s5, %s223
      %v225 = vld [vmem:[%s2] sm:$0x1]
      %226 = vst [vmem:[#allocation3] sm:$0x1] 0.0
      %s227 = smul.u32 0, 24
      %s228 = scalar_lea.vmem %s219, %s227
      %v229 = vld [vmem:[%s228] sm:$0xff]
      %v230 = vld [vmem:[%s228 + $0x8] sm:$0xff]
      %v231 = vld [vmem:[%s228 + $0x10] sm:$0x3]
      %v232 = vld [vmem:[%s228 + $0x18] sm:$0xff]
      %v233 = vld [vmem:[%s228 + $0x20] sm:$0xff]
      %v234 = vld [vmem:[%s228 + $0x28] sm:$0x3]
      %v235 = vld [vmem:[%s228 + $0x30] sm:$0xff]
      %v236 = vld [vmem:[%s228 + $0x38] sm:$0xff]
      %v237 = vld [vmem:[%s228 + $0x40] sm:$0x3]
      %v238 = vld [vmem:[%s228 + $0x48] sm:$0xff]
      %v239 = vld [vmem:[%s228 + $0x50] sm:$0xff]
      %v240 = vld [vmem:[%s228 + $0x58] sm:$0x3]
      %v241 = vld [vmem:[%s228 + $0x60] sm:$0xff]
      %v242 = vld [vmem:[%s228 + $0x68] sm:$0xff]
      %v243 = vld [vmem:[%s228 + $0x70] sm:$0x3]
      %v244 = vld [vmem:[%s228 + $0x78] sm:$0xff]
      %v245 = vld [vmem:[%s228 + $0x80] sm:$0xff]
      %v246 = vld [vmem:[%s228 + $0x88] sm:$0x3]
      %v247 = vld [vmem:[%s228 + $0x90] sm:$0xff]
      %v248 = vld [vmem:[%s228 + $0x98] sm:$0xff]
      %v249 = vld [vmem:[%s228 + $0xa0] sm:$0x3]
      %v250 = vld [vmem:[%s228 + $0xa8] sm:$0xff]
      %v251 = vld [vmem:[%s228 + $0xb0] sm:$0xff]
      %v252 = vld [vmem:[%s228 + $0xb8] sm:$0x3]
      %v253 = vld [vmem:[%s228 + $0xc0] sm:$0xff]
      %v254 = vld [vmem:[%s228 + $0xc8] sm:$0xff]
      %v255 = vld [vmem:[%s228 + $0xd0] sm:$0x3]
      %v256 = vld [vmem:[%s228 + $0xd8] sm:$0xff]
      %v257 = vld [vmem:[%s228 + $0xe0] sm:$0xff]
      %v258 = vld [vmem:[%s228 + $0xe8] sm:$0x3]
      %v259 = vld [vmem:[%s228 + $0xf0] sm:$0xff]
      %v260 = vld [vmem:[%s228 + $0xf8] sm:$0xff]
      %v261 = vld [vmem:[%s228 + $0x100] sm:$0x3]
      %v262 = vld [vmem:[%s228 + $0x108] sm:$0xff]
      %v263 = vld [vmem:[%s228 + $0x110] sm:$0xff]
      %v264 = vld [vmem:[%s228 + $0x118] sm:$0x3]
      %v265 = vld [vmem:[%s228 + $0x120] sm:$0xff]
      %v266 = vld [vmem:[%s228 + $0x128] sm:$0xff]
      %v267 = vld [vmem:[%s228 + $0x130] sm:$0x3]
      %v268 = vld [vmem:[%s228 + $0x138] sm:$0xff]
      %v269 = vld [vmem:[%s228 + $0x140] sm:$0xff]
      %v270 = vld [vmem:[%s228 + $0x148] sm:$0x3]
      %v271 = vld [vmem:[%s228 + $0x150] sm:$0xff]
      %v272 = vld [vmem:[%s228 + $0x158] sm:$0xff]
      %v273 = vld [vmem:[%s228 + $0x160] sm:$0x3]
      %v274 = vld [vmem:[%s228 + $0x168] sm:$0xff]
      %v275 = vld [vmem:[%s228 + $0x170] sm:$0xff]
      %v276 = vld [vmem:[%s228 + $0x178] sm:$0x3]
      %v277 = vld [vmem:[%s1] sm:$0xff]
      %vm326 = vcmask 1046528
      %v327 = vrot.slane %v229, 1
      %v328 = vrot.slane %v230, 1
      %v329 = vsel %vm326, %v327, %v328
      %v330 = vrot.slane %v231, 1
      %v331 = vsel %vm326, %v328, %v330
      %v332 = vrot.slane %v232, 1
      %v333 = vrot.slane %v233, 1
      %v334 = vsel %vm326, %v332, %v333
      %v335 = vrot.slane %v234, 1
      %v336 = vsel %vm326, %v333, %v335
      %v337 = vrot.slane %v235, 1
      %v338 = vrot.slane %v236, 1
      %v339 = vsel %vm326, %v337, %v338
      %v340 = vrot.slane %v237, 1
      %v341 = vsel %vm326, %v338, %v340
      %v342 = vrot.slane %v238, 1
      %v343 = vrot.slane %v239, 1
      %v344 = vsel %vm326, %v342, %v343
      %v345 = vrot.slane %v240, 1
      %v346 = vsel %vm326, %v343, %v345
      %v347 = vrot.slane %v241, 1
      %v348 = vrot.slane %v242, 1
      %v349 = vsel %vm326, %v347, %v348
      %v350 = vrot.slane %v243, 1
      %v351 = vsel %vm326, %v348, %v350
      %v352 = vrot.slane %v244, 1
      %v353 = vrot.slane %v245, 1
      %v354 = vsel %vm326, %v352, %v353
      %v355 = vrot.slane %v246, 1
      %v356 = vsel %vm326, %v353, %v355
      %v357 = vrot.slane %v247, 1
      %v358 = vrot.slane %v248, 1
      %v359 = vsel %vm326, %v357, %v358
      %v360 = vrot.slane %v249, 1
      %v361 = vsel %vm326, %v358, %v360
      %v362 = vrot.slane %v250, 1
      %v363 = vrot.slane %v251, 1
      %v364 = vsel %vm326, %v362, %v363
      %v365 = vrot.slane %v252, 1
      %v366 = vsel %vm326, %v363, %v365
      %v367 = vrot.slane %v253, 1
      %v368 = vrot.slane %v254, 1
      %v369 = vsel %vm326, %v367, %v368
      %v370 = vrot.slane %v255, 1
      %v371 = vsel %vm326, %v368, %v370
      %v372 = vrot.slane %v256, 1
      %v373 = vrot.slane %v257, 1
      %v374 = vsel %vm326, %v372, %v373
      %v375 = vrot.slane %v258, 1
      %v376 = vsel %vm326, %v373, %v375
      %v377 = vrot.slane %v259, 1
      %v378 = vrot.slane %v260, 1
      %v379 = vsel %vm326, %v377, %v378
      %v380 = vrot.slane %v261, 1
      %v381 = vsel %vm326, %v378, %v380
      %v382 = vrot.slane %v262, 1
      %v383 = vrot.slane %v263, 1
      %v384 = vsel %vm326, %v382, %v383
      %v385 = vrot.slane %v264, 1
      %v386 = vsel %vm326, %v383, %v385
      %v387 = vrot.slane %v265, 1
      %v388 = vrot.slane %v266, 1
      %v389 = vsel %vm326, %v387, %v388
      %v390 = vrot.slane %v267, 1
      %v391 = vsel %vm326, %v388, %v390
      %v392 = vrot.slane %v268, 1
      %v393 = vrot.slane %v269, 1
      %v394 = vsel %vm326, %v392, %v393
      %v395 = vrot.slane %v270, 1
      %v396 = vsel %vm326, %v393, %v395
      %v397 = vrot.slane %v271, 1
      %v398 = vrot.slane %v272, 1
      %v399 = vsel %vm326, %v397, %v398
      %v400 = vrot.slane %v273, 1
      %v401 = vsel %vm326, %v398, %v400
      %v402 = vrot.slane %v274, 1
      %v403 = vrot.slane %v275, 1
      %v404 = vsel %vm326, %v402, %v403
      %v405 = vrot.slane %v276, 1
      %v406 = vsel %vm326, %v403, %v405
      %s407 = scalar_lea.vmem %s1, 8
      %v408 = vld [vmem:[%s407] sm:$0xff]
      %vm409 = vcmask 64512
      %v410 = vsel %vm409, %v329, 0
      %v412 = vsel %vm409, %v331, 0
      %v414 = vsel %vm409, %v334, 0
      %v416 = vsel %vm409, %v336, 0
      %v418 = vsel %vm409, %v339, 0
      %v420 = vsel %vm409, %v341, 0
      %v422 = vsel %vm409, %v344, 0
      %v424 = vsel %vm409, %v346, 0
      %v426 = vsel %vm409, %v349, 0
      %v428 = vsel %vm409, %v351, 0
      %v430 = vsel %vm409, %v354, 0
      %v432 = vsel %vm409, %v356, 0
      %v434 = vsel %vm409, %v359, 0
      %v436 = vsel %vm409, %v361, 0
      %v438 = vsel %vm409, %v364, 0
      %v440 = vsel %vm409, %v366, 0
      %v442 = vsel %vm409, %v369, 0
      %v444 = vsel %vm409, %v371, 0
      %v446 = vsel %vm409, %v374, 0
      %v448 = vsel %vm409, %v376, 0
      %v450 = vsel %vm409, %v379, 0
      %v452 = vsel %vm409, %v381, 0
      %v454 = vsel %vm409, %v384, 0
      %v456 = vsel %vm409, %v386, 0
      %v458 = vsel %vm409, %v389, 0
      %v460 = vsel %vm409, %v391, 0
      %v462 = vsel %vm409, %v394, 0
      %v464 = vsel %vm409, %v396, 0
      %v466 = vsel %vm409, %v399, 0
      %v468 = vsel %vm409, %v401, 0
      %v470 = vsel %vm409, %v404, 0
      %v472 = vsel %vm409, %v406, 0
      %474 = vmatprep.subr.mxu0 0.0
      %475 = vmatpush1.msra.mxu0 %v408
      %476 = vmatprep.subr.mxu0 0.0
      %477 = vmatpush1.msra.mxu0 0.0
      %478 = vmatprep.subr.mxu0 0.0
      %479 = vmatpush1.msra.mxu0 0.0
      %480 = vmatprep.subr.mxu0 0.0
      %481 = vmatpush1.msra.mxu0 0.0
      %482 = vmatprep.subr.mxu0 0.0
      %483 = vmatpush1.msra.mxu0 0.0
      %484 = vmatprep.subr.mxu0 0.0
      %485 = vmatpush1.msra.mxu0 0.0
      %486 = vmatprep.subr.mxu0 0.0
      %487 = vmatpush1.msra.mxu0 0.0
      %488 = vmatprep.subr.mxu0 0.0
      %489 = vmatpush1.msra.mxu0 0.0
      %490 = vmatprep.subr.mxu0 0.0
      %491 = vmatpush1.msra.mxu0 0.0
      %492 = vmatprep.subr.mxu0 0.0
      %493 = vmatpush1.msra.mxu0 0.0
      %494 = vmatprep.subr.mxu0 0.0
      %495 = vmatpush1.msra.mxu0 0.0
      %496 = vmatprep.subr.mxu0 0.0
      %497 = vmatpush1.msra.mxu0 0.0
      %498 = vmatprep.subr.mxu0 0.0
      %499 = vmatpush1.msra.mxu0 0.0
      %500 = vmatprep.subr.mxu0 0.0
      %501 = vmatpush1.msra.mxu0 0.0
      %502 = vmatprep.subr.mxu0 0.0
      %503 = vmatpush1.msra.mxu0 0.0
      %504 = vmatprep.subr.mxu0 0.0
      %505 = vmatpush1.msra.mxu0 0.0
      %506 = vmatprep.subr.mxu0 0.0
      %507 = vmatpush1.msra.mxu0 0.0
      %508 = vmatprep.subr.mxu0 0.0
      %509 = vmatpush1.msra.mxu0 0.0
      %510 = vmatprep.subr.mxu0 0.0
      %511 = vmatpush1.msra.mxu0 0.0
      %512 = vmatprep.subr.mxu0 0.0
      %513 = vmatpush1.msra.mxu0 0.0
      %514 = vmatprep.subr.mxu0 0.0
      %515 = vmatpush1.msra.mxu0 0.0
      %516 = vmatprep.subr.mxu0 0.0
      %517 = vmatpush1.msra.mxu0 0.0
      %518 = vmatprep.subr.mxu0 0.0
      %519 = vmatpush1.msra.mxu0 0.0
      %520 = vmatprep.subr.mxu0 0.0
      %521 = vmatpush1.msra.mxu0 0.0
      %522 = vmatprep.subr.mxu0 0.0
      %523 = vmatpush1.msra.mxu0 0.0
      %524 = vmatprep.subr.mxu0 0.0
      %525 = vmatpush1.msra.mxu0 0.0
      %526 = vmatprep.subr.mxu0 0.0
      %527 = vmatpush1.msra.mxu0 0.0
      %528 = vmatprep.subr.mxu0 0.0
      %529 = vmatpush1.msra.mxu0 0.0
      %530 = vmatprep.subr.mxu0 0.0
      %531 = vmatpush1.msra.mxu0 0.0
      %532 = vmatprep.subr.mxu0 0.0
      %533 = vmatpush1.msra.mxu0 0.0
      %534 = vmatprep.subr.mxu0 0.0
      %535 = vmatpush1.msra.mxu0 0.0
      %536 = vmatprep.subr.mxu0 0.0
      %537 = vmatpush1.msra.mxu0 0.0
      %538 = vmatprep.mubr.f32.mxu0 0.0
      %539 = vmatmul.mubr.f32.gmra.mrb[0].mxu0 %v410
      %v540 = vpop.f32.mrb[0].mxu0
      %v541 = vadd.f32 0.0, %v540
      %v542 = vpop.f32.mrb[0].mxu0
      %543 = vmatprep.mubr.f32.mxu0 0.0
      %544 = vmatmul.mubr.f32.gmra.mrb[0].mxu0 %v412
      %v545 = vpop.f32.mrb[0].mxu0
      %v546 = vadd.f32 0.0, %v545
      %v547 = vpop.f32.mrb[0].mxu0
      %548 = vmatprep.mubr.f32.mxu0 0.0
      %549 = vmatmul.mubr.f32.gmra.mrb[0].mxu0 %v414
      %v550 = vpop.f32.mrb[0].mxu0
      %v551 = vadd.f32 0.0, %v550
      %v552 = vpop.f32.mrb[0].mxu0
      %553 = vmatprep.mubr.f32.mxu0 0.0
      %554 = vmatmul.mubr.f32.gmra.mrb[0].mxu0 %v416
      %v555 = vpop.f32.mrb[0].mxu0
      %v556 = vadd.f32 0.0, %v555
      %v557 = vpop.f32.mrb[0].mxu0
      %558 = vmatprep.mubr.f32.mxu0 0.0
      %559 = vmatmul.mubr.f32.gmra.mrb[0].mxu0 %v418
      %v560 = vpop.f32.mrb[0].mxu0
      %v561 = vadd.f32 0.0, %v560
      %v562 = vpop.f32.mrb[0].mxu0
      %563 = vmatprep.mubr.f32.mxu0 0.0
      %564 = vmatmul.mubr.f32.gmra.mrb[0].mxu0 %v420
      %v565 = vpop.f32.mrb[0].mxu0
      %v566 = vadd.f32 0.0, %v565
      %v567 = vpop.f32.mrb[0].mxu0
      %568 = vmatprep.mubr.f32.mxu0 0.0
      %569 = vmatmul.mubr.f32.gmra.mrb[0].mxu0 %v422
      %v570 = vpop.f32.mrb[0].mxu0
      %v571 = vadd.f32 0.0, %v570
      %v572 = vpop.f32.mrb[0].mxu0
      %573 = vmatprep.mubr.f32.mxu0 0.0
      %574 = vmatmul.mubr.f32.gmra.mrb[0].mxu0 %v424
      %v575 = vpop.f32.mrb[0].mxu0
      %v576 = vadd.f32 0.0, %v575
      %v577 = vpop.f32.mrb[0].mxu0
      %578 = vmatprep.mubr.f32.mxu0 0.0
      %579 = vmatmul.mubr.f32.gmra.mrb[0].mxu0 %v426
      %v580 = vpop.f32.mrb[0].mxu0
      %v581 = vadd.f32 0.0, %v580
      %v582 = vpop.f32.mrb[0].mxu0
      %583 = vmatprep.mubr.f32.mxu0 0.0
      %584 = vmatmul.mubr.f32.gmra.mrb[0].mxu0 %v428
      %v585 = vpop.f32.mrb[0].mxu0
      %v586 = vadd.f32 0.0, %v585
      %v587 = vpop.f32.mrb[0].mxu0
      %588 = vmatprep.mubr.f32.mxu0 0.0
      %589 = vmatmul.mubr.f32.gmra.mrb[0].mxu0 %v430
      %v590 = vpop.f32.mrb[0].mxu0
      %v591 = vadd.f32 0.0, %v590
      %v592 = vpop.f32.mrb[0].mxu0
      %593 = vmatprep.mubr.f32.mxu0 0.0
      %594 = vmatmul.mubr.f32.gmra.mrb[0].mxu0 %v432
      %v595 = vpop.f32.mrb[0].mxu0
      %v596 = vadd.f32 0.0, %v595
      %v597 = vpop.f32.mrb[0].mxu0
      %598 = vmatprep.mubr.f32.mxu0 0.0
      %599 = vmatmul.mubr.f32.gmra.mrb[0].mxu0 %v434
      %v600 = vpop.f32.mrb[0].mxu0
      %v601 = vadd.f32 0.0, %v600
      %v602 = vpop.f32.mrb[0].mxu0
      %603 = vmatprep.mubr.f32.mxu0 0.0
      %604 = vmatmul.mubr.f32.gmra.mrb[0].mxu0 %v436
      %v605 = vpop.f32.mrb[0].mxu0
      %v606 = vadd.f32 0.0, %v605
      %v607 = vpop.f32.mrb[0].mxu0
      %608 = vmatprep.mubr.f32.mxu0 0.0
      %609 = vmatmul.mubr.f32.gmra.mrb[0].mxu0 %v438
      %v610 = vpop.f32.mrb[0].mxu0
      %v611 = vadd.f32 0.0, %v610
      %v612 = vpop.f32.mrb[0].mxu0
      %613 = vmatprep.mubr.f32.mxu0 0.0
      %614 = vmatmul.mubr.f32.gmra.mrb[0].mxu0 %v440
      %v615 = vpop.f32.mrb[0].mxu0
      %v616 = vadd.f32 0.0, %v615
      %v617 = vpop.f32.mrb[0].mxu0
      %618 = vmatprep.mubr.f32.mxu0 0.0
      %619 = vmatmul.mubr.f32.gmra.mrb[0].mxu0 %v442
      %v620 = vpop.f32.mrb[0].mxu0
      %v621 = vadd.f32 0.0, %v620
      %v622 = vpop.f32.mrb[0].mxu0
      %623 = vmatprep.mubr.f32.mxu0 0.0
      %624 = vmatmul.mubr.f32.gmra.mrb[0].mxu0 %v444
      %v625 = vpop.f32.mrb[0].mxu0
      %v626 = vadd.f32 0.0, %v625
      %v627 = vpop.f32.mrb[0].mxu0
      %628 = vmatprep.mubr.f32.mxu0 0.0
      %629 = vmatmul.mubr.f32.gmra.mrb[0].mxu0 %v446
      %v630 = vpop.f32.mrb[0].mxu0
      %v631 = vadd.f32 0.0, %v630
      %v632 = vpop.f32.mrb[0].mxu0
      %633 = vmatprep.mubr.f32.mxu0 0.0
      %634 = vmatmul.mubr.f32.gmra.mrb[0].mxu0 %v448
      %v635 = vpop.f32.mrb[0].mxu0
      %v636 = vadd.f32 0.0, %v635
      %v637 = vpop.f32.mrb[0].mxu0
      %638 = vmatprep.mubr.f32.mxu0 0.0
      %639 = vmatmul.mubr.f32.gmra.mrb[0].mxu0 %v450
      %v640 = vpop.f32.mrb[0].mxu0
      %v641 = vadd.f32 0.0, %v640
      %v642 = vpop.f32.mrb[0].mxu0
      %643 = vmatprep.mubr.f32.mxu0 0.0
      %644 = vmatmul.mubr.f32.gmra.mrb[0].mxu0 %v452
      %v645 = vpop.f32.mrb[0].mxu0
      %v646 = vadd.f32 0.0, %v645
      %v647 = vpop.f32.mrb[0].mxu0
      %648 = vmatprep.mubr.f32.mxu0 0.0
      %649 = vmatmul.mubr.f32.gmra.mrb[0].mxu0 %v454
      %v650 = vpop.f32.mrb[0].mxu0
      %v651 = vadd.f32 0.0, %v650
      %v652 = vpop.f32.mrb[0].mxu0
      %653 = vmatprep.mubr.f32.mxu0 0.0
      %654 = vmatmul.mubr.f32.gmra.mrb[0].mxu0 %v456
      %v655 = vpop.f32.mrb[0].mxu0
      %v656 = vadd.f32 0.0, %v655
      %v657 = vpop.f32.mrb[0].mxu0
      %658 = vmatprep.mubr.f32.mxu0 0.0
      %659 = vmatmul.mubr.f32.gmra.mrb[0].mxu0 %v458
      %v660 = vpop.f32.mrb[0].mxu0
      %v661 = vadd.f32 0.0, %v660
      %v662 = vpop.f32.mrb[0].mxu0
      %663 = vmatprep.mubr.f32.mxu0 0.0
      %664 = vmatmul.mubr.f32.gmra.mrb[0].mxu0 %v460
      %v665 = vpop.f32.mrb[0].mxu0
      %v666 = vadd.f32 0.0, %v665
      %v667 = vpop.f32.mrb[0].mxu0
      %668 = vmatprep.mubr.f32.mxu0 0.0
      %669 = vmatmul.mubr.f32.gmra.mrb[0].mxu0 %v462
      %v670 = vpop.f32.mrb[0].mxu0
      %v671 = vadd.f32 0.0, %v670
      %v672 = vpop.f32.mrb[0].mxu0
      %673 = vmatprep.mubr.f32.mxu0 0.0
      %674 = vmatmul.mubr.f32.gmra.mrb[0].mxu0 %v464
      %v675 = vpop.f32.mrb[0].mxu0
      %v676 = vadd.f32 0.0, %v675
      %v677 = vpop.f32.mrb[0].mxu0
      %678 = vmatprep.mubr.f32.mxu0 0.0
      %679 = vmatmul.mubr.f32.gmra.mrb[0].mxu0 %v466
      %v680 = vpop.f32.mrb[0].mxu0
      %v681 = vadd.f32 0.0, %v680
      %v682 = vpop.f32.mrb[0].mxu0
      %683 = vmatprep.mubr.f32.mxu0 0.0
      %684 = vmatmul.mubr.f32.gmra.mrb[0].mxu0 %v468
      %v685 = vpop.f32.mrb[0].mxu0
      %v686 = vadd.f32 0.0, %v685
      %v687 = vpop.f32.mrb[0].mxu0
      %688 = vmatprep.mubr.f32.mxu0 0.0
      %689 = vmatmul.mubr.f32.gmra.mrb[0].mxu0 %v470
      %v690 = vpop.f32.mrb[0].mxu0
      %v691 = vadd.f32 0.0, %v690
      %v692 = vpop.f32.mrb[0].mxu0
      %693 = vmatprep.mubr.f32.mxu0 0.0
      %694 = vmatmul.mubr.f32.gmra.mrb[0].mxu0 %v472
      %v695 = vpop.f32.mrb[0].mxu0
      %v696 = vadd.f32 0.0, %v695
      %v697 = vpop.f32.mrb[0].mxu0
      %698 = vdwg.mxu0
      %v699 = vsel %vm409, %v229, 0
      %v701 = vsel %vm409, %v230, 0
      %v703 = vsel %vm409, %v232, 0
      %v705 = vsel %vm409, %v233, 0
      %v707 = vsel %vm409, %v235, 0
      %v709 = vsel %vm409, %v236, 0
      %v711 = vsel %vm409, %v238, 0
      %v713 = vsel %vm409, %v239, 0
      %v715 = vsel %vm409, %v241, 0
      %v717 = vsel %vm409, %v242, 0
      %v719 = vsel %vm409, %v244, 0
      %v721 = vsel %vm409, %v245, 0
      %v723 = vsel %vm409, %v247, 0
      %v725 = vsel %vm409, %v248, 0
      %v727 = vsel %vm409, %v250, 0
      %v729 = vsel %vm409, %v251, 0
      %v731 = vsel %vm409, %v253, 0
      %v733 = vsel %vm409, %v254, 0
      %v735 = vsel %vm409, %v256, 0
      %v737 = vsel %vm409, %v257, 0
      %v739 = vsel %vm409, %v259, 0
      %v741 = vsel %vm409, %v260, 0
      %v743 = vsel %vm409, %v262, 0
      %v745 = vsel %vm409, %v263, 0
      %v747 = vsel %vm409, %v265, 0
      %v749 = vsel %vm409, %v266, 0
      %v751 = vsel %vm409, %v268, 0
      %v753 = vsel %vm409, %v269, 0
      %v755 = vsel %vm409, %v271, 0
      %v757 = vsel %vm409, %v272, 0
      %v759 = vsel %vm409, %v274, 0
      %v761 = vsel %vm409, %v275, 0
      %763 = vmatprep.subr.mxu0 0.0
      %764 = vmatpush1.msra.mxu0 %v277
      %765 = vmatprep.subr.mxu0 0.0
      %766 = vmatpush1.msra.mxu0 0.0
      %767 = vmatprep.subr.mxu0 0.0
      %768 = vmatpush1.msra.mxu0 0.0
      %769 = vmatprep.subr.mxu0 0.0
      %770 = vmatpush1.msra.mxu0 0.0
      %771 = vmatprep.subr.mxu0 0.0
      %772 = vmatpush1.msra.mxu0 0.0
      %773 = vmatprep.subr.mxu0 0.0
      %774 = vmatpush1.msra.mxu0 0.0
      %775 = vmatprep.subr.mxu0 0.0
      %776 = vmatpush1.msra.mxu0 0.0
      %777 = vmatprep.subr.mxu0 0.0
      %778 = vmatpush1.msra.mxu0 0.0
      %779 = vmatprep.subr.mxu0 0.0
      %780 = vmatpush1.msra.mxu0 0.0
      %781 = vmatprep.subr.mxu0 0.0
      %782 = vmatpush1.msra.mxu0 0.0
      %783 = vmatprep.subr.mxu0 0.0
      %784 = vmatpush1.msra.mxu0 0.0
      %785 = vmatprep.subr.mxu0 0.0
      %786 = vmatpush1.msra.mxu0 0.0
      %787 = vmatprep.subr.mxu0 0.0
      %788 = vmatpush1.msra.mxu0 0.0
      %789 = vmatprep.subr.mxu0 0.0
      %790 = vmatpush1.msra.mxu0 0.0
      %791 = vmatprep.subr.mxu0 0.0
      %792 = vmatpush1.msra.mxu0 0.0
      %793 = vmatprep.subr.mxu0 0.0
      %794 = vmatpush1.msra.mxu0 0.0
      %795 = vmatprep.subr.mxu0 0.0
      %796 = vmatpush1.msra.mxu0 0.0
      %797 = vmatprep.subr.mxu0 0.0
      %798 = vmatpush1.msra.mxu0 0.0
      %799 = vmatprep.subr.mxu0 0.0
      %800 = vmatpush1.msra.mxu0 0.0
      %801 = vmatprep.subr.mxu0 0.0
      %802 = vmatpush1.msra.mxu0 0.0
      %803 = vmatprep.subr.mxu0 0.0
      %804 = vmatpush1.msra.mxu0 0.0
      %805 = vmatprep.subr.mxu0 0.0
      %806 = vmatpush1.msra.mxu0 0.0
      %807 = vmatprep.subr.mxu0 0.0
      %808 = vmatpush1.msra.mxu0 0.0
      %809 = vmatprep.subr.mxu0 0.0
      %810 = vmatpush1.msra.mxu0 0.0
      %811 = vmatprep.subr.mxu0 0.0
      %812 = vmatpush1.msra.mxu0 0.0
      %813 = vmatprep.subr.mxu0 0.0
      %814 = vmatpush1.msra.mxu0 0.0
      %815 = vmatprep.subr.mxu0 0.0
      %816 = vmatpush1.msra.mxu0 0.0
      %817 = vmatprep.subr.mxu0 0.0
      %818 = vmatpush1.msra.mxu0 0.0
      %819 = vmatprep.subr.mxu0 0.0
      %820 = vmatpush1.msra.mxu0 0.0
      %821 = vmatprep.subr.mxu0 0.0
      %822 = vmatpush1.msra.mxu0 0.0
      %823 = vmatprep.subr.mxu0 0.0
      %824 = vmatpush1.msra.mxu0 0.0
      %825 = vmatprep.subr.mxu0 0.0
      %826 = vmatpush1.msra.mxu0 0.0
      %827 = vmatprep.mubr.f32.mxu0 0.0
      %828 = vmatmul.mubr.f32.gmra.mrb[0].mxu0 %v699
      %v829 = vpop.f32.mrb[0].mxu0
      %v830 = vadd.f32 %v541, %v829
      %v831 = vpop.f32.mrb[0].mxu0
      %832 = vmatprep.mubr.f32.mxu0 0.0
      %833 = vmatmul.mubr.f32.gmra.mrb[0].mxu0 %v701
      %v834 = vpop.f32.mrb[0].mxu0
      %v835 = vadd.f32 %v546, %v834
      %v836 = vpop.f32.mrb[0].mxu0
      %837 = vmatprep.mubr.f32.mxu0 0.0
      %838 = vmatmul.mubr.f32.gmra.mrb[0].mxu0 %v703
      %v839 = vpop.f32.mrb[0].mxu0
      %v840 = vadd.f32 %v551, %v839
      %v841 = vpop.f32.mrb[0].mxu0
      %842 = vmatprep.mubr.f32.mxu0 0.0
      %843 = vmatmul.mubr.f32.gmra.mrb[0].mxu0 %v705
      %v844 = vpop.f32.mrb[0].mxu0
      %v845 = vadd.f32 %v556, %v844
      %v846 = vpop.f32.mrb[0].mxu0
      %847 = vmatprep.mubr.f32.mxu0 0.0
      %848 = vmatmul.mubr.f32.gmra.mrb[0].mxu0 %v707
      %v849 = vpop.f32.mrb[0].mxu0
      %v850 = vadd.f32 %v561, %v849
      %v851 = vpop.f32.mrb[0].mxu0
      %852 = vmatprep.mubr.f32.mxu0 0.0
      %853 = vmatmul.mubr.f32.gmra.mrb[0].mxu0 %v709
      %v854 = vpop.f32.mrb[0].mxu0
      %v855 = vadd.f32 %v566, %v854
      %v856 = vpop.f32.mrb[0].mxu0
      %857 = vmatprep.mubr.f32.mxu0 0.0
      %858 = vmatmul.mubr.f32.gmra.mrb[0].mxu0 %v711
      %v859 = vpop.f32.mrb[0].mxu0
      %v860 = vadd.f32 %v571, %v859
      %v861 = vpop.f32.mrb[0].mxu0
      %862 = vmatprep.mubr.f32.mxu0 0.0
      %863 = vmatmul.mubr.f32.gmra.mrb[0].mxu0 %v713
      %v864 = vpop.f32.mrb[0].mxu0
      %v865 = vadd.f32 %v576, %v864
      %v866 = vpop.f32.mrb[0].mxu0
      %867 = vmatprep.mubr.f32.mxu0 0.0
      %868 = vmatmul.mubr.f32.gmra.mrb[0].mxu0 %v715
      %v869 = vpop.f32.mrb[0].mxu0
      %v870 = vadd.f32 %v581, %v869
      %v871 = vpop.f32.mrb[0].mxu0
      %872 = vmatprep.mubr.f32.mxu0 0.0
      %873 = vmatmul.mubr.f32.gmra.mrb[0].mxu0 %v717
      %v874 = vpop.f32.mrb[0].mxu0
      %v875 = vadd.f32 %v586, %v874
      %v876 = vpop.f32.mrb[0].mxu0
      %877 = vmatprep.mubr.f32.mxu0 0.0
      %878 = vmatmul.mubr.f32.gmra.mrb[0].mxu0 %v719
      %v879 = vpop.f32.mrb[0].mxu0
      %v880 = vadd.f32 %v591, %v879
      %v881 = vpop.f32.mrb[0].mxu0
      %882 = vmatprep.mubr.f32.mxu0 0.0
      %883 = vmatmul.mubr.f32.gmra.mrb[0].mxu0 %v721
      %v884 = vpop.f32.mrb[0].mxu0
      %v885 = vadd.f32 %v596, %v884
      %v886 = vpop.f32.mrb[0].mxu0
      %887 = vmatprep.mubr.f32.mxu0 0.0
      %888 = vmatmul.mubr.f32.gmra.mrb[0].mxu0 %v723
      %v889 = vpop.f32.mrb[0].mxu0
      %v890 = vadd.f32 %v601, %v889
      %v891 = vpop.f32.mrb[0].mxu0
      %892 = vmatprep.mubr.f32.mxu0 0.0
      %893 = vmatmul.mubr.f32.gmra.mrb[0].mxu0 %v725
      %v894 = vpop.f32.mrb[0].mxu0
      %v895 = vadd.f32 %v606, %v894
      %v896 = vpop.f32.mrb[0].mxu0
      %897 = vmatprep.mubr.f32.mxu0 0.0
      %898 = vmatmul.mubr.f32.gmra.mrb[0].mxu0 %v727
      %v899 = vpop.f32.mrb[0].mxu0
      %v900 = vadd.f32 %v611, %v899
      %v901 = vpop.f32.mrb[0].mxu0
      %902 = vmatprep.mubr.f32.mxu0 0.0
      %903 = vmatmul.mubr.f32.gmra.mrb[0].mxu0 %v729
      %v904 = vpop.f32.mrb[0].mxu0
      %v905 = vadd.f32 %v616, %v904
      %v906 = vpop.f32.mrb[0].mxu0
      %907 = vmatprep.mubr.f32.mxu0 0.0
      %908 = vmatmul.mubr.f32.gmra.mrb[0].mxu0 %v731
      %v909 = vpop.f32.mrb[0].mxu0
      %v910 = vadd.f32 %v621, %v909
      %v911 = vpop.f32.mrb[0].mxu0
      %912 = vmatprep.mubr.f32.mxu0 0.0
      %913 = vmatmul.mubr.f32.gmra.mrb[0].mxu0 %v733
      %v914 = vpop.f32.mrb[0].mxu0
      %v915 = vadd.f32 %v626, %v914
      %v916 = vpop.f32.mrb[0].mxu0
      %917 = vmatprep.mubr.f32.mxu0 0.0
      %918 = vmatmul.mubr.f32.gmra.mrb[0].mxu0 %v735
      %v919 = vpop.f32.mrb[0].mxu0
      %v920 = vadd.f32 %v631, %v919
      %v921 = vpop.f32.mrb[0].mxu0
      %922 = vmatprep.mubr.f32.mxu0 0.0
      %923 = vmatmul.mubr.f32.gmra.mrb[0].mxu0 %v737
      %v924 = vpop.f32.mrb[0].mxu0
      %v925 = vadd.f32 %v636, %v924
      %v926 = vpop.f32.mrb[0].mxu0
      %927 = vmatprep.mubr.f32.mxu0 0.0
      %928 = vmatmul.mubr.f32.gmra.mrb[0].mxu0 %v739
      %v929 = vpop.f32.mrb[0].mxu0
      %v930 = vadd.f32 %v641, %v929
      %v931 = vpop.f32.mrb[0].mxu0
      %932 = vmatprep.mubr.f32.mxu0 0.0
      %933 = vmatmul.mubr.f32.gmra.mrb[0].mxu0 %v741
      %v934 = vpop.f32.mrb[0].mxu0
      %v935 = vadd.f32 %v646, %v934
      %v936 = vpop.f32.mrb[0].mxu0
      %937 = vmatprep.mubr.f32.mxu0 0.0
      %938 = vmatmul.mubr.f32.gmra.mrb[0].mxu0 %v743
      %v939 = vpop.f32.mrb[0].mxu0
      %v940 = vadd.f32 %v651, %v939
      %v941 = vpop.f32.mrb[0].mxu0
      %942 = vmatprep.mubr.f32.mxu0 0.0
      %943 = vmatmul.mubr.f32.gmra.mrb[0].mxu0 %v745
      %v944 = vpop.f32.mrb[0].mxu0
      %v945 = vadd.f32 %v656, %v944
      %v946 = vpop.f32.mrb[0].mxu0
      %947 = vmatprep.mubr.f32.mxu0 0.0
      %948 = vmatmul.mubr.f32.gmra.mrb[0].mxu0 %v747
      %v949 = vpop.f32.mrb[0].mxu0
      %v950 = vadd.f32 %v661, %v949
      %v951 = vpop.f32.mrb[0].mxu0
      %952 = vmatprep.mubr.f32.mxu0 0.0
      %953 = vmatmul.mubr.f32.gmra.mrb[0].mxu0 %v749
      %v954 = vpop.f32.mrb[0].mxu0
      %v955 = vadd.f32 %v666, %v954
      %v956 = vpop.f32.mrb[0].mxu0
      %957 = vmatprep.mubr.f32.mxu0 0.0
      %958 = vmatmul.mubr.f32.gmra.mrb[0].mxu0 %v751
      %v959 = vpop.f32.mrb[0].mxu0
      %v960 = vadd.f32 %v671, %v959
      %v961 = vpop.f32.mrb[0].mxu0
      %962 = vmatprep.mubr.f32.mxu0 0.0
      %963 = vmatmul.mubr.f32.gmra.mrb[0].mxu0 %v753
      %v964 = vpop.f32.mrb[0].mxu0
      %v965 = vadd.f32 %v676, %v964
      %v966 = vpop.f32.mrb[0].mxu0
      %967 = vmatprep.mubr.f32.mxu0 0.0
      %968 = vmatmul.mubr.f32.gmra.mrb[0].mxu0 %v755
      %v969 = vpop.f32.mrb[0].mxu0
      %v970 = vadd.f32 %v681, %v969
      %v971 = vpop.f32.mrb[0].mxu0
      %972 = vmatprep.mubr.f32.mxu0 0.0
      %973 = vmatmul.mubr.f32.gmra.mrb[0].mxu0 %v757
      %v974 = vpop.f32.mrb[0].mxu0
      %v975 = vadd.f32 %v686, %v974
      %v976 = vpop.f32.mrb[0].mxu0
      %977 = vmatprep.mubr.f32.mxu0 0.0
      %978 = vmatmul.mubr.f32.gmra.mrb[0].mxu0 %v759
      %v979 = vpop.f32.mrb[0].mxu0
      %v980 = vadd.f32 %v691, %v979
      %v981 = vpop.f32.mrb[0].mxu0
      %982 = vmatprep.mubr.f32.mxu0 0.0
      %983 = vmatmul.mubr.f32.gmra.mrb[0].mxu0 %v761
      %v984 = vpop.f32.mrb[0].mxu0
      %v985 = vadd.f32 %v696, %v984
      %v986 = vpop.f32.mrb[0].mxu0
      %987 = vdwg.mxu0
      %vm988 = vcmask 1045504
      %v989 = vrot.slane %v229, 2
      %v990 = vrot.slane %v230, 2
      %v991 = vsel %vm988, %v989, %v990
      %v992 = vrot.slane %v231, 2
      %v993 = vsel %vm988, %v990, %v992
      %v994 = vrot.slane %v232, 2
      %v995 = vrot.slane %v233, 2
      %v996 = vsel %vm988, %v994, %v995
      %v997 = vrot.slane %v234, 2
      %v998 = vsel %vm988, %v995, %v997
      %v999 = vrot.slane %v235, 2
      %v1000 = vrot.slane %v236, 2
      %v1001 = vsel %vm988, %v999, %v1000
      %v1002 = vrot.slane %v237, 2
      %v1003 = vsel %vm988, %v1000, %v1002
      %v1004 = vrot.slane %v238, 2
      %v1005 = vrot.slane %v239, 2
      %v1006 = vsel %vm988, %v1004, %v1005
      %v1007 = vrot.slane %v240, 2
      %v1008 = vsel %vm988, %v1005, %v1007
      %v1009 = vrot.slane %v241, 2
      %v1010 = vrot.slane %v242, 2
      %v1011 = vsel %vm988, %v1009, %v1010
      %v1012 = vrot.slane %v243, 2
      %v1013 = vsel %vm988, %v1010, %v1012
      %v1014 = vrot.slane %v244, 2
      %v1015 = vrot.slane %v245, 2
      %v1016 = vsel %vm988, %v1014, %v1015
      %v1017 = vrot.slane %v246, 2
      %v1018 = vsel %vm988, %v1015, %v1017
      %v1019 = vrot.slane %v247, 2
      %v1020 = vrot.slane %v248, 2
      %v1021 = vsel %vm988, %v1019, %v1020
      %v1022 = vrot.slane %v249, 2
      %v1023 = vsel %vm988, %v1020, %v1022
      %v1024 = vrot.slane %v250, 2
      %v1025 = vrot.slane %v251, 2
      %v1026 = vsel %vm988, %v1024, %v1025
      %v1027 = vrot.slane %v252, 2
      %v1028 = vsel %vm988, %v1025, %v1027
      %v1029 = vrot.slane %v253, 2
      %v1030 = vrot.slane %v254, 2
      %v1031 = vsel %vm988, %v1029, %v1030
      %v1032 = vrot.slane %v255, 2
      %v1033 = vsel %vm988, %v1030, %v1032
      %v1034 = vrot.slane %v256, 2
      %v1035 = vrot.slane %v257, 2
      %v1036 = vsel %vm988, %v1034, %v1035
      %v1037 = vrot.slane %v258, 2
      %v1038 = vsel %vm988, %v1035, %v1037
      %v1039 = vrot.slane %v259, 2
      %v1040 = vrot.slane %v260, 2
      %v1041 = vsel %vm988, %v1039, %v1040
      %v1042 = vrot.slane %v261, 2
      %v1043 = vsel %vm988, %v1040, %v1042
      %v1044 = vrot.slane %v262, 2
      %v1045 = vrot.slane %v263, 2
      %v1046 = vsel %vm988, %v1044, %v1045
      %v1047 = vrot.slane %v264, 2
      %v1048 = vsel %vm988, %v1045, %v1047
      %v1049 = vrot.slane %v265, 2
      %v1050 = vrot.slane %v266, 2
      %v1051 = vsel %vm988, %v1049, %v1050
      %v1052 = vrot.slane %v267, 2
      %v1053 = vsel %vm988, %v1050, %v1052
      %v1054 = vrot.slane %v268, 2
      %v1055 = vrot.slane %v269, 2
      %v1056 = vsel %vm988, %v1054, %v1055
      %v1057 = vrot.slane %v270, 2
      %v1058 = vsel %vm988, %v1055, %v1057
      %v1059 = vrot.slane %v271, 2
      %v1060 = vrot.slane %v272, 2
      %v1061 = vsel %vm988, %v1059, %v1060
      %v1062 = vrot.slane %v273, 2
      %v1063 = vsel %vm988, %v1060, %v1062
      %v1064 = vrot.slane %v274, 2
      %v1065 = vrot.slane %v275, 2
      %v1066 = vsel %vm988, %v1064, %v1065
      %v1067 = vrot.slane %v276, 2
      %v1068 = vsel %vm988, %v1065, %v1067
      %s1069 = scalar_lea.vmem %s1, 16
      %v1070 = vld [vmem:[%s1069] sm:$0xff]
      %v1071 = vsel %vm409, %v991, 0
      %v1073 = vsel %vm409, %v993, 0
      %v1075 = vsel %vm409, %v996, 0
      %v1077 = vsel %vm409, %v998, 0
      %v1079 = vsel %vm409, %v1001, 0
      %v1081 = vsel %vm409, %v1003, 0
      %v1083 = vsel %vm409, %v1006, 0
      %v1085 = vsel %vm409, %v1008, 0
      %v1087 = vsel %vm409, %v1011, 0
      %v1089 = vsel %vm409, %v1013, 0
      %v1091 = vsel %vm409, %v1016, 0
      %v1093 = vsel %vm409, %v1018, 0
      %v1095 = vsel %vm409, %v1021, 0
      %v1097 = vsel %vm409, %v1023, 0
      %v1099 = vsel %vm409, %v1026, 0
      %v1101 = vsel %vm409, %v1028, 0
      %v1103 = vsel %vm409, %v1031, 0
      %v1105 = vsel %vm409, %v1033, 0
      %v1107 = vsel %vm409, %v1036, 0
      %v1109 = vsel %vm409, %v1038, 0
      %v1111 = vsel %vm409, %v1041, 0
      %v1113 = vsel %vm409, %v1043, 0
      %v1115 = vsel %vm409, %v1046, 0
      %v1117 = vsel %vm409, %v1048, 0
      %v1119 = vsel %vm409, %v1051, 0
      %v1121 = vsel %vm409, %v1053, 0
      %v1123 = vsel %vm409, %v1056, 0
      %v1125 = vsel %vm409, %v1058, 0
      %v1127 = vsel %vm409, %v1061, 0
      %v1129 = vsel %vm409, %v1063, 0
      %v1131 = vsel %vm409, %v1066, 0
      %v1133 = vsel %vm409, %v1068, 0
      %1135 = vmatprep.subr.mxu0 0.0
      %1136 = vmatpush1.msra.mxu0 %v1070
      %1137 = vmatprep.subr.mxu0 0.0
      %1138 = vmatpush1.msra.mxu0 0.0
      %1139 = vmatprep.subr.mxu0 0.0
      %1140 = vmatpush1.msra.mxu0 0.0
      %1141 = vmatprep.subr.mxu0 0.0
      %1142 = vmatpush1.msra.mxu0 0.0
      %1143 = vmatprep.subr.mxu0 0.0
      %1144 = vmatpush1.msra.mxu0 0.0
      %1145 = vmatprep.subr.mxu0 0.0
      %1146 = vmatpush1.msra.mxu0 0.0
      %1147 = vmatprep.subr.mxu0 0.0
      %1148 = vmatpush1.msra.mxu0 0.0
      %1149 = vmatprep.subr.mxu0 0.0
      %1150 = vmatpush1.msra.mxu0 0.0
      %1151 = vmatprep.subr.mxu0 0.0
      %1152 = vmatpush1.msra.mxu0 0.0
      %1153 = vmatprep.subr.mxu0 0.0
      %1154 = vmatpush1.msra.mxu0 0.0
      %1155 = vmatprep.subr.mxu0 0.0
      %1156 = vmatpush1.msra.mxu0 0.0
      %1157 = vmatprep.subr.mxu0 0.0
      %1158 = vmatpush1.msra.mxu0 0.0
      %1159 = vmatprep.subr.mxu0 0.0
      %1160 = vmatpush1.msra.mxu0 0.0
      %1161 = vmatprep.subr.mxu0 0.0
      %1162 = vmatpush1.msra.mxu0 0.0
      %1163 = vmatprep.subr.mxu0 0.0
      %1164 = vmatpush1.msra.mxu0 0.0
      %1165 = vmatprep.subr.mxu0 0.0
      %1166 = vmatpush1.msra.mxu0 0.0
      %1167 = vmatprep.subr.mxu0 0.0
      %1168 = vmatpush1.msra.mxu0 0.0
      %1169 = vmatprep.subr.mxu0 0.0
      %1170 = vmatpush1.msra.mxu0 0.0
      %1171 = vmatprep.subr.mxu0 0.0
      %1172 = vmatpush1.msra.mxu0 0.0
      %1173 = vmatprep.subr.mxu0 0.0
      %1174 = vmatpush1.msra.mxu0 0.0
      %1175 = vmatprep.subr.mxu0 0.0
      %1176 = vmatpush1.msra.mxu0 0.0
      %1177 = vmatprep.subr.mxu0 0.0
      %1178 = vmatpush1.msra.mxu0 0.0
      %1179 = vmatprep.subr.mxu0 0.0
      %1180 = vmatpush1.msra.mxu0 0.0
      %1181 = vmatprep.subr.mxu0 0.0
      %1182 = vmatpush1.msra.mxu0 0.0
      %1183 = vmatprep.subr.mxu0 0.0
      %1184 = vmatpush1.msra.mxu0 0.0
      %1185 = vmatprep.subr.mxu0 0.0
      %1186 = vmatpush1.msra.mxu0 0.0
      %1187 = vmatprep.subr.mxu0 0.0
      %1188 = vmatpush1.msra.mxu0 0.0
      %1189 = vmatprep.subr.mxu0 0.0
      %1190 = vmatpush1.msra.mxu0 0.0
      %1191 = vmatprep.subr.mxu0 0.0
      %1192 = vmatpush1.msra.mxu0 0.0
      %1193 = vmatprep.subr.mxu0 0.0
      %1194 = vmatpush1.msra.mxu0 0.0
      %1195 = vmatprep.subr.mxu0 0.0
      %1196 = vmatpush1.msra.mxu0 0.0
      %1197 = vmatprep.subr.mxu0 0.0
      %1198 = vmatpush1.msra.mxu0 0.0
      %1199 = vmatprep.mubr.f32.mxu0 0.0
      %1200 = vmatmul.mubr.f32.gmra.mrb[0].mxu0 %v1071
      %v1201 = vpop.f32.mrb[0].mxu0
      %v1202 = vadd.f32 0.0, %v1201
      %v1203 = vpop.f32.mrb[0].mxu0
      %1204 = vmatprep.mubr.f32.mxu0 0.0
      %1205 = vmatmul.mubr.f32.gmra.mrb[0].mxu0 %v1073
      %v1206 = vpop.f32.mrb[0].mxu0
      %v1207 = vadd.f32 0.0, %v1206
      %v1208 = vpop.f32.mrb[0].mxu0
      %1209 = vmatprep.mubr.f32.mxu0 0.0
      %1210 = vmatmul.mubr.f32.gmra.mrb[0].mxu0 %v1075
      %v1211 = vpop.f32.mrb[0].mxu0
      %v1212 = vadd.f32 0.0, %v1211
      %v1213 = vpop.f32.mrb[0].mxu0
      %1214 = vmatprep.mubr.f32.mxu0 0.0
      %1215 = vmatmul.mubr.f32.gmra.mrb[0].mxu0 %v1077
      %v1216 = vpop.f32.mrb[0].mxu0
      %v1217 = vadd.f32 0.0, %v1216
      %v1218 = vpop.f32.mrb[0].mxu0
      %1219 = vmatprep.mubr.f32.mxu0 0.0
      %1220 = vmatmul.mubr.f32.gmra.mrb[0].mxu0 %v1079
      %v1221 = vpop.f32.mrb[0].mxu0
      %v1222 = vadd.f32 0.0, %v1221
      %v1223 = vpop.f32.mrb[0].mxu0
      %1224 = vmatprep.mubr.f32.mxu0 0.0
      %1225 = vmatmul.mubr.f32.gmra.mrb[0].mxu0 %v1081
      %v1226 = vpop.f32.mrb[0].mxu0
      %v1227 = vadd.f32 0.0, %v1226
      %v1228 = vpop.f32.mrb[0].mxu0
      %1229 = vmatprep.mubr.f32.mxu0 0.0
      %1230 = vmatmul.mubr.f32.gmra.mrb[0].mxu0 %v1083
      %v1231 = vpop.f32.mrb[0].mxu0
      %v1232 = vadd.f32 0.0, %v1231
      %v1233 = vpop.f32.mrb[0].mxu0
      %1234 = vmatprep.mubr.f32.mxu0 0.0
      %1235 = vmatmul.mubr.f32.gmra.mrb[0].mxu0 %v1085
      %v1236 = vpop.f32.mrb[0].mxu0
      %v1237 = vadd.f32 0.0, %v1236
      %v1238 = vpop.f32.mrb[0].mxu0
      %1239 = vmatprep.mubr.f32.mxu0 0.0
      %1240 = vmatmul.mubr.f32.gmra.mrb[0].mxu0 %v1087
      %v1241 = vpop.f32.mrb[0].mxu0
      %v1242 = vadd.f32 0.0, %v1241
      %v1243 = vpop.f32.mrb[0].mxu0
      %1244 = vmatprep.mubr.f32.mxu0 0.0
      %1245 = vmatmul.mubr.f32.gmra.mrb[0].mxu0 %v1089
      %v1246 = vpop.f32.mrb[0].mxu0
      %v1247 = vadd.f32 0.0, %v1246
      %v1248 = vpop.f32.mrb[0].mxu0
      %1249 = vmatprep.mubr.f32.mxu0 0.0
      %1250 = vmatmul.mubr.f32.gmra.mrb[0].mxu0 %v1091
      %v1251 = vpop.f32.mrb[0].mxu0
      %v1252 = vadd.f32 0.0, %v1251
      %v1253 = vpop.f32.mrb[0].mxu0
      %1254 = vmatprep.mubr.f32.mxu0 0.0
      %1255 = vmatmul.mubr.f32.gmra.mrb[0].mxu0 %v1093
      %v1256 = vpop.f32.mrb[0].mxu0
      %v1257 = vadd.f32 0.0, %v1256
      %v1258 = vpop.f32.mrb[0].mxu0
      %1259 = vmatprep.mubr.f32.mxu0 0.0
      %1260 = vmatmul.mubr.f32.gmra.mrb[0].mxu0 %v1095
      %v1261 = vpop.f32.mrb[0].mxu0
      %v1262 = vadd.f32 0.0, %v1261
      %v1263 = vpop.f32.mrb[0].mxu0
      %1264 = vmatprep.mubr.f32.mxu0 0.0
      %1265 = vmatmul.mubr.f32.gmra.mrb[0].mxu0 %v1097
      %v1266 = vpop.f32.mrb[0].mxu0
      %v1267 = vadd.f32 0.0, %v1266
      %v1268 = vpop.f32.mrb[0].mxu0
      %1269 = vmatprep.mubr.f32.mxu0 0.0
      %1270 = vmatmul.mubr.f32.gmra.mrb[0].mxu0 %v1099
      %v1271 = vpop.f32.mrb[0].mxu0
      %v1272 = vadd.f32 0.0, %v1271
      %v1273 = vpop.f32.mrb[0].mxu0
      %1274 = vmatprep.mubr.f32.mxu0 0.0
      %1275 = vmatmul.mubr.f32.gmra.mrb[0].mxu0 %v1101
      %v1276 = vpop.f32.mrb[0].mxu0
      %v1277 = vadd.f32 0.0, %v1276
      %v1278 = vpop.f32.mrb[0].mxu0
      %1279 = vmatprep.mubr.f32.mxu0 0.0
      %1280 = vmatmul.mubr.f32.gmra.mrb[0].mxu0 %v1103
      %v1281 = vpop.f32.mrb[0].mxu0
      %v1282 = vadd.f32 0.0, %v1281
      %v1283 = vpop.f32.mrb[0].mxu0
      %1284 = vmatprep.mubr.f32.mxu0 0.0
      %1285 = vmatmul.mubr.f32.gmra.mrb[0].mxu0 %v1105
      %v1286 = vpop.f32.mrb[0].mxu0
      %v1287 = vadd.f32 0.0, %v1286
      %v1288 = vpop.f32.mrb[0].mxu0
      %1289 = vmatprep.mubr.f32.mxu0 0.0
      %1290 = vmatmul.mubr.f32.gmra.mrb[0].mxu0 %v1107
      %v1291 = vpop.f32.mrb[0].mxu0
      %v1292 = vadd.f32 0.0, %v1291
      %v1293 = vpop.f32.mrb[0].mxu0
      %1294 = vmatprep.mubr.f32.mxu0 0.0
      %1295 = vmatmul.mubr.f32.gmra.mrb[0].mxu0 %v1109
      %v1296 = vpop.f32.mrb[0].mxu0
      %v1297 = vadd.f32 0.0, %v1296
      %v1298 = vpop.f32.mrb[0].mxu0
      %1299 = vmatprep.mubr.f32.mxu0 0.0
      %1300 = vmatmul.mubr.f32.gmra.mrb[0].mxu0 %v1111
      %v1301 = vpop.f32.mrb[0].mxu0
      %v1302 = vadd.f32 0.0, %v1301
      %v1303 = vpop.f32.mrb[0].mxu0
      %1304 = vmatprep.mubr.f32.mxu0 0.0
      %1305 = vmatmul.mubr.f32.gmra.mrb[0].mxu0 %v1113
      %v1306 = vpop.f32.mrb[0].mxu0
      %v1307 = vadd.f32 0.0, %v1306
      %v1308 = vpop.f32.mrb[0].mxu0
      %1309 = vmatprep.mubr.f32.mxu0 0.0
      %1310 = vmatmul.mubr.f32.gmra.mrb[0].mxu0 %v1115
      %v1311 = vpop.f32.mrb[0].mxu0
      %v1312 = vadd.f32 0.0, %v1311
      %v1313 = vpop.f32.mrb[0].mxu0
      %1314 = vmatprep.mubr.f32.mxu0 0.0
      %1315 = vmatmul.mubr.f32.gmra.mrb[0].mxu0 %v1117
      %v1316 = vpop.f32.mrb[0].mxu0
      %v1317 = vadd.f32 0.0, %v1316
      %v1318 = vpop.f32.mrb[0].mxu0
      %1319 = vmatprep.mubr.f32.mxu0 0.0
      %1320 = vmatmul.mubr.f32.gmra.mrb[0].mxu0 %v1119
      %v1321 = vpop.f32.mrb[0].mxu0
      %v1322 = vadd.f32 0.0, %v1321
      %v1323 = vpop.f32.mrb[0].mxu0
      %1324 = vmatprep.mubr.f32.mxu0 0.0
      %1325 = vmatmul.mubr.f32.gmra.mrb[0].mxu0 %v1121
      %v1326 = vpop.f32.mrb[0].mxu0
      %v1327 = vadd.f32 0.0, %v1326
      %v1328 = vpop.f32.mrb[0].mxu0
      %1329 = vmatprep.mubr.f32.mxu0 0.0
      %1330 = vmatmul.mubr.f32.gmra.mrb[0].mxu0 %v1123
      %v1331 = vpop.f32.mrb[0].mxu0
      %v1332 = vadd.f32 0.0, %v1331
      %v1333 = vpop.f32.mrb[0].mxu0
      %1334 = vmatprep.mubr.f32.mxu0 0.0
      %1335 = vmatmul.mubr.f32.gmra.mrb[0].mxu0 %v1125
      %v1336 = vpop.f32.mrb[0].mxu0
      %v1337 = vadd.f32 0.0, %v1336
      %v1338 = vpop.f32.mrb[0].mxu0
      %1339 = vmatprep.mubr.f32.mxu0 0.0
      %1340 = vmatmul.mubr.f32.gmra.mrb[0].mxu0 %v1127
      %v1341 = vpop.f32.mrb[0].mxu0
      %v1342 = vadd.f32 0.0, %v1341
      %v1343 = vpop.f32.mrb[0].mxu0
      %1344 = vmatprep.mubr.f32.mxu0 0.0
      %1345 = vmatmul.mubr.f32.gmra.mrb[0].mxu0 %v1129
      %v1346 = vpop.f32.mrb[0].mxu0
      %v1347 = vadd.f32 0.0, %v1346
      %v1348 = vpop.f32.mrb[0].mxu0
      %1349 = vmatprep.mubr.f32.mxu0 0.0
      %1350 = vmatmul.mubr.f32.gmra.mrb[0].mxu0 %v1131
      %v1351 = vpop.f32.mrb[0].mxu0
      %v1352 = vadd.f32 0.0, %v1351
      %v1353 = vpop.f32.mrb[0].mxu0
      %1354 = vmatprep.mubr.f32.mxu0 0.0
      %1355 = vmatmul.mubr.f32.gmra.mrb[0].mxu0 %v1133
      %v1356 = vpop.f32.mrb[0].mxu0
      %v1357 = vadd.f32 0.0, %v1356
      %v1358 = vpop.f32.mrb[0].mxu0
      %1359 = vdwg.mxu0
      %v1360 = vadd.f32 %v830, %v1202
      %v1361 = vadd.f32 %v835, %v1207
      %v1362 = vadd.f32 %v840, %v1212
      %v1363 = vadd.f32 %v845, %v1217
      %v1364 = vadd.f32 %v850, %v1222
      %v1365 = vadd.f32 %v855, %v1227
      %v1366 = vadd.f32 %v860, %v1232
      %v1367 = vadd.f32 %v865, %v1237
      %v1368 = vadd.f32 %v870, %v1242
      %v1369 = vadd.f32 %v875, %v1247
      %v1370 = vadd.f32 %v880, %v1252
      %v1371 = vadd.f32 %v885, %v1257
      %v1372 = vadd.f32 %v890, %v1262
      %v1373 = vadd.f32 %v895, %v1267
      %v1374 = vadd.f32 %v900, %v1272
      %v1375 = vadd.f32 %v905, %v1277
      %v1376 = vadd.f32 %v910, %v1282
      %v1377 = vadd.f32 %v915, %v1287
      %v1378 = vadd.f32 %v920, %v1292
      %v1379 = vadd.f32 %v925, %v1297
      %v1380 = vadd.f32 %v930, %v1302
      %v1381 = vadd.f32 %v935, %v1307
      %v1382 = vadd.f32 %v940, %v1312
      %v1383 = vadd.f32 %v945, %v1317
      %v1384 = vadd.f32 %v950, %v1322
      %v1385 = vadd.f32 %v955, %v1327
      %v1386 = vadd.f32 %v960, %v1332
      %v1387 = vadd.f32 %v965, %v1337
      %v1388 = vadd.f32 %v970, %v1342
      %v1389 = vadd.f32 %v975, %v1347
      %v1390 = vadd.f32 %v980, %v1352
      %v1391 = vadd.f32 %v985, %v1357
      %s1392 = sadd.s32 0, 1
      %s1393 = smul.u32 %s1392, 24
      %s1394 = scalar_lea.vmem %s219, %s1393
      %v1395 = vld [vmem:[%s1394] sm:$0xff]
      %v1396 = vld [vmem:[%s1394 + $0x8] sm:$0xff]
      %v1397 = vld [vmem:[%s1394 + $0x10] sm:$0x3]
      %v1398 = vld [vmem:[%s1394 + $0x18] sm:$0xff]
      %v1399 = vld [vmem:[%s1394 + $0x20] sm:$0xff]
      %v1400 = vld [vmem:[%s1394 + $0x28] sm:$0x3]
      %v1401 = vld [vmem:[%s1394 + $0x30] sm:$0xff]
      %v1402 = vld [vmem:[%s1394 + $0x38] sm:$0xff]
      %v1403 = vld [vmem:[%s1394 + $0x40] sm:$0x3]
      %v1404 = vld [vmem:[%s1394 + $0x48] sm:$0xff]
      %v1405 = vld [vmem:[%s1394 + $0x50] sm:$0xff]
      %v1406 = vld [vmem:[%s1394 + $0x58] sm:$0x3]
      %v1407 = vld [vmem:[%s1394 + $0x60] sm:$0xff]
      %v1408 = vld [vmem:[%s1394 + $0x68] sm:$0xff]
      %v1409 = vld [vmem:[%s1394 + $0x70] sm:$0x3]
      %v1410 = vld [vmem:[%s1394 + $0x78] sm:$0xff]
      %v1411 = vld [vmem:[%s1394 + $0x80] sm:$0xff]
      %v1412 = vld [vmem:[%s1394 + $0x88] sm:$0x3]
      %v1413 = vld [vmem:[%s1394 + $0x90] sm:$0xff]
      %v1414 = vld [vmem:[%s1394 + $0x98] sm:$0xff]
      %v1415 = vld [vmem:[%s1394 + $0xa0] sm:$0x3]
      %v1416 = vld [vmem:[%s1394 + $0xa8] sm:$0xff]
      %v1417 = vld [vmem:[%s1394 + $0xb0] sm:$0xff]
      %v1418 = vld [vmem:[%s1394 + $0xb8] sm:$0x3]
      %v1419 = vld [vmem:[%s1394 + $0xc0] sm:$0xff]
      %v1420 = vld [vmem:[%s1394 + $0xc8] sm:$0xff]
      %v1421 = vld [vmem:[%s1394 + $0xd0] sm:$0x3]
      %v1422 = vld [vmem:[%s1394 + $0xd8] sm:$0xff]
      %v1423 = vld [vmem:[%s1394 + $0xe0] sm:$0xff]
      %v1424 = vld [vmem:[%s1394 + $0xe8] sm:$0x3]
      %v1425 = vld [vmem:[%s1394 + $0xf0] sm:$0xff]
      %v1426 = vld [vmem:[%s1394 + $0xf8] sm:$0xff]
      %v1427 = vld [vmem:[%s1394 + $0x100] sm:$0x3]
      %v1428 = vld [vmem:[%s1394 + $0x108] sm:$0xff]
      %v1429 = vld [vmem:[%s1394 + $0x110] sm:$0xff]
      %v1430 = vld [vmem:[%s1394 + $0x118] sm:$0x3]
      %v1431 = vld [vmem:[%s1394 + $0x120] sm:$0xff]
      %v1432 = vld [vmem:[%s1394 + $0x128] sm:$0xff]
      %v1433 = vld [vmem:[%s1394 + $0x130] sm:$0x3]
      %v1434 = vld [vmem:[%s1394 + $0x138] sm:$0xff]
      %v1435 = vld [vmem:[%s1394 + $0x140] sm:$0xff]
      %v1436 = vld [vmem:[%s1394 + $0x148] sm:$0x3]
      %v1437 = vld [vmem:[%s1394 + $0x150] sm:$0xff]
      %v1438 = vld [vmem:[%s1394 + $0x158] sm:$0xff]
      %v1439 = vld [vmem:[%s1394 + $0x160] sm:$0x3]
      %v1440 = vld [vmem:[%s1394 + $0x168] sm:$0xff]
      %v1441 = vld [vmem:[%s1394 + $0x170] sm:$0xff]
      %v1442 = vld [vmem:[%s1394 + $0x178] sm:$0x3]
      %s1443 = scalar_lea.vmem %s1, 24
      %v1444 = vld [vmem:[%s1443] sm:$0xff]
      %v1446 = vsel %vm409, %v1395, 0
      %v1449 = vsel %vm409, %v1396, 0
      %v1452 = vsel %vm409, %v1398, 0
      %v1455 = vsel %vm409, %v1399, 0
      %v1458 = vsel %vm409, %v1401, 0
      %v1461 = vsel %vm409, %v1402, 0
      %v1464 = vsel %vm409, %v1404, 0
      %v1467 = vsel %vm409, %v1405, 0
      %v1470 = vsel %vm409, %v1407, 0
      %v1473 = vsel %vm409, %v1408, 0
      %v1476 = vsel %vm409, %v1410, 0
      %v1479 = vsel %vm409, %v1411, 0
      %v1482 = vsel %vm409, %v1413, 0
      %v1485 = vsel %vm409, %v1414, 0
      %v1488 = vsel %vm409, %v1416, 0
      %v1491 = vsel %vm409, %v1417, 0
      %v1494 = vsel %vm409, %v1419, 0
      %v1497 = vsel %vm409, %v1420, 0
      %v1500 = vsel %vm409, %v1422, 0
      %v1503 = vsel %vm409, %v1423, 0
      %v1506 = vsel %vm409, %v1425, 0
      %v1509 = vsel %vm409, %v1426, 0
      %v1512 = vsel %vm409, %v1428, 0
      %v1515 = vsel %vm409, %v1429, 0
      %v1518 = vsel %vm409, %v1431, 0
      %v1521 = vsel %vm409, %v1432, 0
      %v1524 = vsel %vm409, %v1434, 0
      %v1527 = vsel %vm409, %v1435, 0
      %v1530 = vsel %vm409, %v1437, 0
      %v1533 = vsel %vm409, %v1438, 0
      %v1536 = vsel %vm409, %v1440, 0
      %v1539 = vsel %vm409, %v1441, 0
      %1541 = vmatprep.subr.mxu0 0.0
      %1542 = vmatpush1.msra.mxu0 %v1444
      %1543 = vmatprep.subr.mxu0 0.0
      %1544 = vmatpush1.msra.mxu0 0.0
      %1545 = vmatprep.subr.mxu0 0.0
      %1546 = vmatpush1.msra.mxu0 0.0
      %1547 = vmatprep.subr.mxu0 0.0
      %1548 = vmatpush1.msra.mxu0 0.0
      %1549 = vmatprep.subr.mxu0 0.0
      %1550 = vmatpush1.msra.mxu0 0.0
      %1551 = vmatprep.subr.mxu0 0.0
      %1552 = vmatpush1.msra.mxu0 0.0
      %1553 = vmatprep.subr.mxu0 0.0
      %1554 = vmatpush1.msra.mxu0 0.0
      %1555 = vmatprep.subr.mxu0 0.0
      %1556 = vmatpush1.msra.mxu0 0.0
      %1557 = vmatprep.subr.mxu0 0.0
      %1558 = vmatpush1.msra.mxu0 0.0
      %1559 = vmatprep.subr.mxu0 0.0
      %1560 = vmatpush1.msra.mxu0 0.0
      %1561 = vmatprep.subr.mxu0 0.0
      %1562 = vmatpush1.msra.mxu0 0.0
      %1563 = vmatprep.subr.mxu0 0.0
      %1564 = vmatpush1.msra.mxu0 0.0
      %1565 = vmatprep.subr.mxu0 0.0
      %1566 = vmatpush1.msra.mxu0 0.0
      %1567 = vmatprep.subr.mxu0 0.0
      %1568 = vmatpush1.msra.mxu0 0.0
      %1569 = vmatprep.subr.mxu0 0.0
      %1570 = vmatpush1.msra.mxu0 0.0
      %1571 = vmatprep.subr.mxu0 0.0
      %1572 = vmatpush1.msra.mxu0 0.0
      %1573 = vmatprep.subr.mxu0 0.0
      %1574 = vmatpush1.msra.mxu0 0.0
      %1575 = vmatprep.subr.mxu0 0.0
      %1576 = vmatpush1.msra.mxu0 0.0
      %1577 = vmatprep.subr.mxu0 0.0
      %1578 = vmatpush1.msra.mxu0 0.0
      %1579 = vmatprep.subr.mxu0 0.0
      %1580 = vmatpush1.msra.mxu0 0.0
      %1581 = vmatprep.subr.mxu0 0.0
      %1582 = vmatpush1.msra.mxu0 0.0
      %1583 = vmatprep.subr.mxu0 0.0
      %1584 = vmatpush1.msra.mxu0 0.0
      %1585 = vmatprep.subr.mxu0 0.0
      %1586 = vmatpush1.msra.mxu0 0.0
      %1587 = vmatprep.subr.mxu0 0.0
      %1588 = vmatpush1.msra.mxu0 0.0
      %1589 = vmatprep.subr.mxu0 0.0
      %1590 = vmatpush1.msra.mxu0 0.0
      %1591 = vmatprep.subr.mxu0 0.0
      %1592 = vmatpush1.msra.mxu0 0.0
      %1593 = vmatprep.subr.mxu0 0.0
      %1594 = vmatpush1.msra.mxu0 0.0
      %1595 = vmatprep.subr.mxu0 0.0
      %1596 = vmatpush1.msra.mxu0 0.0
      %1597 = vmatprep.subr.mxu0 0.0
      %1598 = vmatpush1.msra.mxu0 0.0
      %1599 = vmatprep.subr.mxu0 0.0
      %1600 = vmatpush1.msra.mxu0 0.0
      %1601 = vmatprep.subr.mxu0 0.0
      %1602 = vmatpush1.msra.mxu0 0.0
      %1603 = vmatprep.subr.mxu0 0.0
      %1604 = vmatpush1.msra.mxu0 0.0
      %1605 = vmatprep.mubr.f32.mxu0 0.0
      %1606 = vmatmul.mubr.f32.gmra.mrb[0].mxu0 %v1446
      %v1607 = vpop.f32.mrb[0].mxu0
      %v1608 = vadd.f32 0.0, %v1607
      %v1609 = vpop.f32.mrb[0].mxu0
      %1610 = vmatprep.mubr.f32.mxu0 0.0
      %1611 = vmatmul.mubr.f32.gmra.mrb[0].mxu0 %v1449
      %v1612 = vpop.f32.mrb[0].mxu0
      %v1613 = vadd.f32 0.0, %v1612
      %v1614 = vpop.f32.mrb[0].mxu0
      %1615 = vmatprep.mubr.f32.mxu0 0.0
      %1616 = vmatmul.mubr.f32.gmra.mrb[0].mxu0 %v1452
      %v1617 = vpop.f32.mrb[0].mxu0
      %v1618 = vadd.f32 0.0, %v1617
      %v1619 = vpop.f32.mrb[0].mxu0
      %1620 = vmatprep.mubr.f32.mxu0 0.0
      %1621 = vmatmul.mubr.f32.gmra.mrb[0].mxu0 %v1455
      %v1622 = vpop.f32.mrb[0].mxu0
      %v1623 = vadd.f32 0.0, %v1622
      %v1624 = vpop.f32.mrb[0].mxu0
      %1625 = vmatprep.mubr.f32.mxu0 0.0
      %1626 = vmatmul.mubr.f32.gmra.mrb[0].mxu0 %v1458
      %v1627 = vpop.f32.mrb[0].mxu0
      %v1628 = vadd.f32 0.0, %v1627
      %v1629 = vpop.f32.mrb[0].mxu0
      %1630 = vmatprep.mubr.f32.mxu0 0.0
      %1631 = vmatmul.mubr.f32.gmra.mrb[0].mxu0 %v1461
      %v1632 = vpop.f32.mrb[0].mxu0
      %v1633 = vadd.f32 0.0, %v1632
      %v1634 = vpop.f32.mrb[0].mxu0
      %1635 = vmatprep.mubr.f32.mxu0 0.0
      %1636 = vmatmul.mubr.f32.gmra.mrb[0].mxu0 %v1464
      %v1637 = vpop.f32.mrb[0].mxu0
      %v1638 = vadd.f32 0.0, %v1637
      %v1639 = vpop.f32.mrb[0].mxu0
      %1640 = vmatprep.mubr.f32.mxu0 0.0
      %1641 = vmatmul.mubr.f32.gmra.mrb[0].mxu0 %v1467
      %v1642 = vpop.f32.mrb[0].mxu0
      %v1643 = vadd.f32 0.0, %v1642
      %v1644 = vpop.f32.mrb[0].mxu0
      %1645 = vmatprep.mubr.f32.mxu0 0.0
      %1646 = vmatmul.mubr.f32.gmra.mrb[0].mxu0 %v1470
      %v1647 = vpop.f32.mrb[0].mxu0
      %v1648 = vadd.f32 0.0, %v1647
      %v1649 = vpop.f32.mrb[0].mxu0
      %1650 = vmatprep.mubr.f32.mxu0 0.0
      %1651 = vmatmul.mubr.f32.gmra.mrb[0].mxu0 %v1473
      %v1652 = vpop.f32.mrb[0].mxu0
      %v1653 = vadd.f32 0.0, %v1652
      %v1654 = vpop.f32.mrb[0].mxu0
      %1655 = vmatprep.mubr.f32.mxu0 0.0
      %1656 = vmatmul.mubr.f32.gmra.mrb[0].mxu0 %v1476
      %v1657 = vpop.f32.mrb[0].mxu0
      %v1658 = vadd.f32 0.0, %v1657
      %v1659 = vpop.f32.mrb[0].mxu0
      %1660 = vmatprep.mubr.f32.mxu0 0.0
      %1661 = vmatmul.mubr.f32.gmra.mrb[0].mxu0 %v1479
      %v1662 = vpop.f32.mrb[0].mxu0
      %v1663 = vadd.f32 0.0, %v1662
      %v1664 = vpop.f32.mrb[0].mxu0
      %1665 = vmatprep.mubr.f32.mxu0 0.0
      %1666 = vmatmul.mubr.f32.gmra.mrb[0].mxu0 %v1482
      %v1667 = vpop.f32.mrb[0].mxu0
      %v1668 = vadd.f32 0.0, %v1667
      %v1669 = vpop.f32.mrb[0].mxu0
      %1670 = vmatprep.mubr.f32.mxu0 0.0
      %1671 = vmatmul.mubr.f32.gmra.mrb[0].mxu0 %v1485
      %v1672 = vpop.f32.mrb[0].mxu0
      %v1673 = vadd.f32 0.0, %v1672
      %v1674 = vpop.f32.mrb[0].mxu0
      %1675 = vmatprep.mubr.f32.mxu0 0.0
      %1676 = vmatmul.mubr.f32.gmra.mrb[0].mxu0 %v1488
      %v1677 = vpop.f32.mrb[0].mxu0
      %v1678 = vadd.f32 0.0, %v1677
      %v1679 = vpop.f32.mrb[0].mxu0
      %1680 = vmatprep.mubr.f32.mxu0 0.0
      %1681 = vmatmul.mubr.f32.gmra.mrb[0].mxu0 %v1491
      %v1682 = vpop.f32.mrb[0].mxu0
      %v1683 = vadd.f32 0.0, %v1682
      %v1684 = vpop.f32.mrb[0].mxu0
      %1685 = vmatprep.mubr.f32.mxu0 0.0
      %1686 = vmatmul.mubr.f32.gmra.mrb[0].mxu0 %v1494
      %v1687 = vpop.f32.mrb[0].mxu0
      %v1688 = vadd.f32 0.0, %v1687
      %v1689 = vpop.f32.mrb[0].mxu0
      %1690 = vmatprep.mubr.f32.mxu0 0.0
      %1691 = vmatmul.mubr.f32.gmra.mrb[0].mxu0 %v1497
      %v1692 = vpop.f32.mrb[0].mxu0
      %v1693 = vadd.f32 0.0, %v1692
      %v1694 = vpop.f32.mrb[0].mxu0
      %1695 = vmatprep.mubr.f32.mxu0 0.0
      %1696 = vmatmul.mubr.f32.gmra.mrb[0].mxu0 %v1500
      %v1697 = vpop.f32.mrb[0].mxu0
      %v1698 = vadd.f32 0.0, %v1697
      %v1699 = vpop.f32.mrb[0].mxu0
      %1700 = vmatprep.mubr.f32.mxu0 0.0
      %1701 = vmatmul.mubr.f32.gmra.mrb[0].mxu0 %v1503
      %v1702 = vpop.f32.mrb[0].mxu0
      %v1703 = vadd.f32 0.0, %v1702
      %v1704 = vpop.f32.mrb[0].mxu0
      %1705 = vmatprep.mubr.f32.mxu0 0.0
      %1706 = vmatmul.mubr.f32.gmra.mrb[0].mxu0 %v1506
      %v1707 = vpop.f32.mrb[0].mxu0
      %v1708 = vadd.f32 0.0, %v1707
      %v1709 = vpop.f32.mrb[0].mxu0
      %1710 = vmatprep.mubr.f32.mxu0 0.0
      %1711 = vmatmul.mubr.f32.gmra.mrb[0].mxu0 %v1509
      %v1712 = vpop.f32.mrb[0].mxu0
      %v1713 = vadd.f32 0.0, %v1712
      %v1714 = vpop.f32.mrb[0].mxu0
      %1715 = vmatprep.mubr.f32.mxu0 0.0
      %1716 = vmatmul.mubr.f32.gmra.mrb[0].mxu0 %v1512
      %v1717 = vpop.f32.mrb[0].mxu0
      %v1718 = vadd.f32 0.0, %v1717
      %v1719 = vpop.f32.mrb[0].mxu0
      %1720 = vmatprep.mubr.f32.mxu0 0.0
      %1721 = vmatmul.mubr.f32.gmra.mrb[0].mxu0 %v1515
      %v1722 = vpop.f32.mrb[0].mxu0
      %v1723 = vadd.f32 0.0, %v1722
      %v1724 = vpop.f32.mrb[0].mxu0
      %1725 = vmatprep.mubr.f32.mxu0 0.0
      %1726 = vmatmul.mubr.f32.gmra.mrb[0].mxu0 %v1518
      %v1727 = vpop.f32.mrb[0].mxu0
      %v1728 = vadd.f32 0.0, %v1727
      %v1729 = vpop.f32.mrb[0].mxu0
      %1730 = vmatprep.mubr.f32.mxu0 0.0
      %1731 = vmatmul.mubr.f32.gmra.mrb[0].mxu0 %v1521
      %v1732 = vpop.f32.mrb[0].mxu0
      %v1733 = vadd.f32 0.0, %v1732
      %v1734 = vpop.f32.mrb[0].mxu0
      %1735 = vmatprep.mubr.f32.mxu0 0.0
      %1736 = vmatmul.mubr.f32.gmra.mrb[0].mxu0 %v1524
      %v1737 = vpop.f32.mrb[0].mxu0
      %v1738 = vadd.f32 0.0, %v1737
      %v1739 = vpop.f32.mrb[0].mxu0
      %1740 = vmatprep.mubr.f32.mxu0 0.0
      %1741 = vmatmul.mubr.f32.gmra.mrb[0].mxu0 %v1527
      %v1742 = vpop.f32.mrb[0].mxu0
      %v1743 = vadd.f32 0.0, %v1742
      %v1744 = vpop.f32.mrb[0].mxu0
      %1745 = vmatprep.mubr.f32.mxu0 0.0
      %1746 = vmatmul.mubr.f32.gmra.mrb[0].mxu0 %v1530
      %v1747 = vpop.f32.mrb[0].mxu0
      %v1748 = vadd.f32 0.0, %v1747
      %v1749 = vpop.f32.mrb[0].mxu0
      %1750 = vmatprep.mubr.f32.mxu0 0.0
      %1751 = vmatmul.mubr.f32.gmra.mrb[0].mxu0 %v1533
      %v1752 = vpop.f32.mrb[0].mxu0
      %v1753 = vadd.f32 0.0, %v1752
      %v1754 = vpop.f32.mrb[0].mxu0
      %1755 = vmatprep.mubr.f32.mxu0 0.0
      %1756 = vmatmul.mubr.f32.gmra.mrb[0].mxu0 %v1536
      %v1757 = vpop.f32.mrb[0].mxu0
      %v1758 = vadd.f32 0.0, %v1757
      %v1759 = vpop.f32.mrb[0].mxu0
      %1760 = vmatprep.mubr.f32.mxu0 0.0
      %1761 = vmatmul.mubr.f32.gmra.mrb[0].mxu0 %v1539
      %v1762 = vpop.f32.mrb[0].mxu0
      %v1763 = vadd.f32 0.0, %v1762
      %v1764 = vpop.f32.mrb[0].mxu0
      %1765 = vdwg.mxu0
      %v1766 = vadd.f32 %v1360, %v1608
      %v1767 = vadd.f32 %v1361, %v1613
      %v1768 = vadd.f32 %v1362, %v1618
      %v1769 = vadd.f32 %v1363, %v1623
      %v1770 = vadd.f32 %v1364, %v1628
      %v1771 = vadd.f32 %v1365, %v1633
      %v1772 = vadd.f32 %v1366, %v1638
      %v1773 = vadd.f32 %v1367, %v1643
      %v1774 = vadd.f32 %v1368, %v1648
      %v1775 = vadd.f32 %v1369, %v1653
      %v1776 = vadd.f32 %v1370, %v1658
      %v1777 = vadd.f32 %v1371, %v1663
      %v1778 = vadd.f32 %v1372, %v1668
      %v1779 = vadd.f32 %v1373, %v1673
      %v1780 = vadd.f32 %v1374, %v1678
      %v1781 = vadd.f32 %v1375, %v1683
      %v1782 = vadd.f32 %v1376, %v1688
      %v1783 = vadd.f32 %v1377, %v1693
      %v1784 = vadd.f32 %v1378, %v1698
      %v1785 = vadd.f32 %v1379, %v1703
      %v1786 = vadd.f32 %v1380, %v1708
      %v1787 = vadd.f32 %v1381, %v1713
      %v1788 = vadd.f32 %v1382, %v1718
      %v1789 = vadd.f32 %v1383, %v1723
      %v1790 = vadd.f32 %v1384, %v1728
      %v1791 = vadd.f32 %v1385, %v1733
      %v1792 = vadd.f32 %v1386, %v1738
      %v1793 = vadd.f32 %v1387, %v1743
      %v1794 = vadd.f32 %v1388, %v1748
      %v1795 = vadd.f32 %v1389, %v1753
      %v1796 = vadd.f32 %v1390, %v1758
      %v1797 = vadd.f32 %v1391, %v1763
      %v1814 = vrot.slane %v1395, 1
      %v1815 = vrot.slane %v1396, 1
      %v1816 = vsel %vm326, %v1814, %v1815
      %v1817 = vrot.slane %v1397, 1
      %v1818 = vsel %vm326, %v1815, %v1817
      %v1819 = vrot.slane %v1398, 1
      %v1820 = vrot.slane %v1399, 1
      %v1821 = vsel %vm326, %v1819, %v1820
      %v1822 = vrot.slane %v1400, 1
      %v1823 = vsel %vm326, %v1820, %v1822
      %v1824 = vrot.slane %v1401, 1
      %v1825 = vrot.slane %v1402, 1
      %v1826 = vsel %vm326, %v1824, %v1825
      %v1827 = vrot.slane %v1403, 1
      %v1828 = vsel %vm326, %v1825, %v1827
      %v1829 = vrot.slane %v1404, 1
      %v1830 = vrot.slane %v1405, 1
      %v1831 = vsel %vm326, %v1829, %v1830
      %v1832 = vrot.slane %v1406, 1
      %v1833 = vsel %vm326, %v1830, %v1832
      %v1834 = vrot.slane %v1407, 1
      %v1835 = vrot.slane %v1408, 1
      %v1836 = vsel %vm326, %v1834, %v1835
      %v1837 = vrot.slane %v1409, 1
      %v1838 = vsel %vm326, %v1835, %v1837
      %v1839 = vrot.slane %v1410, 1
      %v1840 = vrot.slane %v1411, 1
      %v1841 = vsel %vm326, %v1839, %v1840
      %v1842 = vrot.slane %v1412, 1
      %v1843 = vsel %vm326, %v1840, %v1842
      %v1844 = vrot.slane %v1413, 1
      %v1845 = vrot.slane %v1414, 1
      %v1846 = vsel %vm326, %v1844, %v1845
      %v1847 = vrot.slane %v1415, 1
      %v1848 = vsel %vm326, %v1845, %v1847
      %v1849 = vrot.slane %v1416, 1
      %v1850 = vrot.slane %v1417, 1
      %v1851 = vsel %vm326, %v1849, %v1850
      %v1852 = vrot.slane %v1418, 1
      %v1853 = vsel %vm326, %v1850, %v1852
      %v1854 = vrot.slane %v1419, 1
      %v1855 = vrot.slane %v1420, 1
      %v1856 = vsel %vm326, %v1854, %v1855
      %v1857 = vrot.slane %v1421, 1
      %v1858 = vsel %vm326, %v1855, %v1857
      %v1859 = vrot.slane %v1422, 1
      %v1860 = vrot.slane %v1423, 1
      %v1861 = vsel %vm326, %v1859, %v1860
      %v1862 = vrot.slane %v1424, 1
      %v1863 = vsel %vm326, %v1860, %v1862
      %v1864 = vrot.slane %v1425, 1
      %v1865 = vrot.slane %v1426, 1
      %v1866 = vsel %vm326, %v1864, %v1865
      %v1867 = vrot.slane %v1427, 1
      %v1868 = vsel %vm326, %v1865, %v1867
      %v1869 = vrot.slane %v1428, 1
      %v1870 = vrot.slane %v1429, 1
      %v1871 = vsel %vm326, %v1869, %v1870
      %v1872 = vrot.slane %v1430, 1
      %v1873 = vsel %vm326, %v1870, %v1872
      %v1874 = vrot.slane %v1431, 1
      %v1875 = vrot.slane %v1432, 1
      %v1876 = vsel %vm326, %v1874, %v1875
      %v1877 = vrot.slane %v1433, 1
      %v1878 = vsel %vm326, %v1875, %v1877
      %v1879 = vrot.slane %v1434, 1
      %v1880 = vrot.slane %v1435, 1
      %v1881 = vsel %vm326, %v1879, %v1880
      %v1882 = vrot.slane %v1436, 1
      %v1883 = vsel %vm326, %v1880, %v1882
      %v1884 = vrot.slane %v1437, 1
      %v1885 = vrot.slane %v1438, 1
      %v1886 = vsel %vm326, %v1884, %v1885
      %v1887 = vrot.slane %v1439, 1
      %v1888 = vsel %vm326, %v1885, %v1887
      %v1889 = vrot.slane %v1440, 1
      %v1890 = vrot.slane %v1441, 1
      %v1891 = vsel %vm326, %v1889, %v1890
      %v1892 = vrot.slane %v1442, 1
      %v1893 = vsel %vm326, %v1890, %v1892
      %s1894 = scalar_lea.vmem %s1, 32
      %v1895 = vld [vmem:[%s1894] sm:$0xff]
      %v1896 = vsel %vm409, %v1816, 0
      %v1898 = vsel %vm409, %v1818, 0
      %v1900 = vsel %vm409, %v1821, 0
      %v1902 = vsel %vm409, %v1823, 0
      %v1904 = vsel %vm409, %v1826, 0
      %v1906 = vsel %vm409, %v1828, 0
      %v1908 = vsel %vm409, %v1831, 0
      %v1910 = vsel %vm409, %v1833, 0
      %v1912 = vsel %vm409, %v1836, 0
      %v1914 = vsel %vm409, %v1838, 0
      %v1916 = vsel %vm409, %v1841, 0
      %v1918 = vsel %vm409, %v1843, 0
      %v1920 = vsel %vm409, %v1846, 0
      %v1922 = vsel %vm409, %v1848, 0
      %v1924 = vsel %vm409, %v1851, 0
      %v1926 = vsel %vm409, %v1853, 0
      %v1928 = vsel %vm409, %v1856, 0
      %v1930 = vsel %vm409, %v1858, 0
      %v1932 = vsel %vm409, %v1861, 0
      %v1934 = vsel %vm409, %v1863, 0
      %v1936 = vsel %vm409, %v1866, 0
      %v1938 = vsel %vm409, %v1868, 0
      %v1940 = vsel %vm409, %v1871, 0
      %v1942 = vsel %vm409, %v1873, 0
      %v1944 = vsel %vm409, %v1876, 0
      %v1946 = vsel %vm409, %v1878, 0
      %v1948 = vsel %vm409, %v1881, 0
      %v1950 = vsel %vm409, %v1883, 0
      %v1952 = vsel %vm409, %v1886, 0
      %v1954 = vsel %vm409, %v1888, 0
      %v1956 = vsel %vm409, %v1891, 0
      %v1958 = vsel %vm409, %v1893, 0
      %1960 = vmatprep.subr.mxu0 0.0
      %1961 = vmatpush1.msra.mxu0 %v1895
      %1962 = vmatprep.subr.mxu0 0.0
      %1963 = vmatpush1.msra.mxu0 0.0
      %1964 = vmatprep.subr.mxu0 0.0
      %1965 = vmatpush1.msra.mxu0 0.0
      %1966 = vmatprep.subr.mxu0 0.0
      %1967 = vmatpush1.msra.mxu0 0.0
      %1968 = vmatprep.subr.mxu0 0.0
      %1969 = vmatpush1.msra.mxu0 0.0
      %1970 = vmatprep.subr.mxu0 0.0
      %1971 = vmatpush1.msra.mxu0 0.0
      %1972 = vmatprep.subr.mxu0 0.0
      %1973 = vmatpush1.msra.mxu0 0.0
      %1974 = vmatprep.subr.mxu0 0.0
      %1975 = vmatpush1.msra.mxu0 0.0
      %1976 = vmatprep.subr.mxu0 0.0
      %1977 = vmatpush1.msra.mxu0 0.0
      %1978 = vmatprep.subr.mxu0 0.0
      %1979 = vmatpush1.msra.mxu0 0.0
      %1980 = vmatprep.subr.mxu0 0.0
      %1981 = vmatpush1.msra.mxu0 0.0
      %1982 = vmatprep.subr.mxu0 0.0
      %1983 = vmatpush1.msra.mxu0 0.0
      %1984 = vmatprep.subr.mxu0 0.0
      %1985 = vmatpush1.msra.mxu0 0.0
      %1986 = vmatprep.subr.mxu0 0.0
      %1987 = vmatpush1.msra.mxu0 0.0
      %1988 = vmatprep.subr.mxu0 0.0
      %1989 = vmatpush1.msra.mxu0 0.0
      %1990 = vmatprep.subr.mxu0 0.0
      %1991 = vmatpush1.msra.mxu0 0.0
      %1992 = vmatprep.subr.mxu0 0.0
      %1993 = vmatpush1.msra.mxu0 0.0
      %1994 = vmatprep.subr.mxu0 0.0
      %1995 = vmatpush1.msra.mxu0 0.0
      %1996 = vmatprep.subr.mxu0 0.0
      %1997 = vmatpush1.msra.mxu0 0.0
      %1998 = vmatprep.subr.mxu0 0.0
      %1999 = vmatpush1.msra.mxu0 0.0
      %2000 = vmatprep.subr.mxu0 0.0
      %2001 = vmatpush1.msra.mxu0 0.0
      %2002 = vmatprep.subr.mxu0 0.0
      %2003 = vmatpush1.msra.mxu0 0.0
      %2004 = vmatprep.subr.mxu0 0.0
      %2005 = vmatpush1.msra.mxu0 0.0
      %2006 = vmatprep.subr.mxu0 0.0
      %2007 = vmatpush1.msra.mxu0 0.0
      %2008 = vmatprep.subr.mxu0 0.0
      %2009 = vmatpush1.msra.mxu0 0.0
      %2010 = vmatprep.subr.mxu0 0.0
      %2011 = vmatpush1.msra.mxu0 0.0
      %2012 = vmatprep.subr.mxu0 0.0
      %2013 = vmatpush1.msra.mxu0 0.0
      %2014 = vmatprep.subr.mxu0 0.0
      %2015 = vmatpush1.msra.mxu0 0.0
      %2016 = vmatprep.subr.mxu0 0.0
      %2017 = vmatpush1.msra.mxu0 0.0
      %2018 = vmatprep.subr.mxu0 0.0
      %2019 = vmatpush1.msra.mxu0 0.0
      %2020 = vmatprep.subr.mxu0 0.0
      %2021 = vmatpush1.msra.mxu0 0.0
      %2022 = vmatprep.subr.mxu0 0.0
      %2023 = vmatpush1.msra.mxu0 0.0
      %2024 = vmatprep.mubr.f32.mxu0 0.0
      %2025 = vmatmul.mubr.f32.gmra.mrb[0].mxu0 %v1896
      %v2026 = vpop.f32.mrb[0].mxu0
      %v2027 = vadd.f32 0.0, %v2026
      %v2028 = vpop.f32.mrb[0].mxu0
      %2029 = vmatprep.mubr.f32.mxu0 0.0
      %2030 = vmatmul.mubr.f32.gmra.mrb[0].mxu0 %v1898
      %v2031 = vpop.f32.mrb[0].mxu0
      %v2032 = vadd.f32 0.0, %v2031
      %v2033 = vpop.f32.mrb[0].mxu0
      %2034 = vmatprep.mubr.f32.mxu0 0.0
      %2035 = vmatmul.mubr.f32.gmra.mrb[0].mxu0 %v1900
      %v2036 = vpop.f32.mrb[0].mxu0
      %v2037 = vadd.f32 0.0, %v2036
      %v2038 = vpop.f32.mrb[0].mxu0
      %2039 = vmatprep.mubr.f32.mxu0 0.0
      %2040 = vmatmul.mubr.f32.gmra.mrb[0].mxu0 %v1902
      %v2041 = vpop.f32.mrb[0].mxu0
      %v2042 = vadd.f32 0.0, %v2041
      %v2043 = vpop.f32.mrb[0].mxu0
      %2044 = vmatprep.mubr.f32.mxu0 0.0
      %2045 = vmatmul.mubr.f32.gmra.mrb[0].mxu0 %v1904
      %v2046 = vpop.f32.mrb[0].mxu0
      %v2047 = vadd.f32 0.0, %v2046
      %v2048 = vpop.f32.mrb[0].mxu0
      %2049 = vmatprep.mubr.f32.mxu0 0.0
      %2050 = vmatmul.mubr.f32.gmra.mrb[0].mxu0 %v1906
      %v2051 = vpop.f32.mrb[0].mxu0
      %v2052 = vadd.f32 0.0, %v2051
      %v2053 = vpop.f32.mrb[0].mxu0
      %2054 = vmatprep.mubr.f32.mxu0 0.0
      %2055 = vmatmul.mubr.f32.gmra.mrb[0].mxu0 %v1908
      %v2056 = vpop.f32.mrb[0].mxu0
      %v2057 = vadd.f32 0.0, %v2056
      %v2058 = vpop.f32.mrb[0].mxu0
      %2059 = vmatprep.mubr.f32.mxu0 0.0
      %2060 = vmatmul.mubr.f32.gmra.mrb[0].mxu0 %v1910
      %v2061 = vpop.f32.mrb[0].mxu0
      %v2062 = vadd.f32 0.0, %v2061
      %v2063 = vpop.f32.mrb[0].mxu0
      %2064 = vmatprep.mubr.f32.mxu0 0.0
      %2065 = vmatmul.mubr.f32.gmra.mrb[0].mxu0 %v1912
      %v2066 = vpop.f32.mrb[0].mxu0
      %v2067 = vadd.f32 0.0, %v2066
      %v2068 = vpop.f32.mrb[0].mxu0
      %2069 = vmatprep.mubr.f32.mxu0 0.0
      %2070 = vmatmul.mubr.f32.gmra.mrb[0].mxu0 %v1914
      %v2071 = vpop.f32.mrb[0].mxu0
      %v2072 = vadd.f32 0.0, %v2071
      %v2073 = vpop.f32.mrb[0].mxu0
      %2074 = vmatprep.mubr.f32.mxu0 0.0
      %2075 = vmatmul.mubr.f32.gmra.mrb[0].mxu0 %v1916
      %v2076 = vpop.f32.mrb[0].mxu0
      %v2077 = vadd.f32 0.0, %v2076
      %v2078 = vpop.f32.mrb[0].mxu0
      %2079 = vmatprep.mubr.f32.mxu0 0.0
      %2080 = vmatmul.mubr.f32.gmra.mrb[0].mxu0 %v1918
      %v2081 = vpop.f32.mrb[0].mxu0
      %v2082 = vadd.f32 0.0, %v2081
      %v2083 = vpop.f32.mrb[0].mxu0
      %2084 = vmatprep.mubr.f32.mxu0 0.0
      %2085 = vmatmul.mubr.f32.gmra.mrb[0].mxu0 %v1920
      %v2086 = vpop.f32.mrb[0].mxu0
      %v2087 = vadd.f32 0.0, %v2086
      %v2088 = vpop.f32.mrb[0].mxu0
      %2089 = vmatprep.mubr.f32.mxu0 0.0
      %2090 = vmatmul.mubr.f32.gmra.mrb[0].mxu0 %v1922
      %v2091 = vpop.f32.mrb[0].mxu0
      %v2092 = vadd.f32 0.0, %v2091
      %v2093 = vpop.f32.mrb[0].mxu0
      %2094 = vmatprep.mubr.f32.mxu0 0.0
      %2095 = vmatmul.mubr.f32.gmra.mrb[0].mxu0 %v1924
      %v2096 = vpop.f32.mrb[0].mxu0
      %v2097 = vadd.f32 0.0, %v2096
      %v2098 = vpop.f32.mrb[0].mxu0
      %2099 = vmatprep.mubr.f32.mxu0 0.0
      %2100 = vmatmul.mubr.f32.gmra.mrb[0].mxu0 %v1926
      %v2101 = vpop.f32.mrb[0].mxu0
      %v2102 = vadd.f32 0.0, %v2101
      %v2103 = vpop.f32.mrb[0].mxu0
      %2104 = vmatprep.mubr.f32.mxu0 0.0
      %2105 = vmatmul.mubr.f32.gmra.mrb[0].mxu0 %v1928
      %v2106 = vpop.f32.mrb[0].mxu0
      %v2107 = vadd.f32 0.0, %v2106
      %v2108 = vpop.f32.mrb[0].mxu0
      %2109 = vmatprep.mubr.f32.mxu0 0.0
      %2110 = vmatmul.mubr.f32.gmra.mrb[0].mxu0 %v1930
      %v2111 = vpop.f32.mrb[0].mxu0
      %v2112 = vadd.f32 0.0, %v2111
      %v2113 = vpop.f32.mrb[0].mxu0
      %2114 = vmatprep.mubr.f32.mxu0 0.0
      %2115 = vmatmul.mubr.f32.gmra.mrb[0].mxu0 %v1932
      %v2116 = vpop.f32.mrb[0].mxu0
      %v2117 = vadd.f32 0.0, %v2116
      %v2118 = vpop.f32.mrb[0].mxu0
      %2119 = vmatprep.mubr.f32.mxu0 0.0
      %2120 = vmatmul.mubr.f32.gmra.mrb[0].mxu0 %v1934
      %v2121 = vpop.f32.mrb[0].mxu0
      %v2122 = vadd.f32 0.0, %v2121
      %v2123 = vpop.f32.mrb[0].mxu0
      %2124 = vmatprep.mubr.f32.mxu0 0.0
      %2125 = vmatmul.mubr.f32.gmra.mrb[0].mxu0 %v1936
      %v2126 = vpop.f32.mrb[0].mxu0
      %v2127 = vadd.f32 0.0, %v2126
      %v2128 = vpop.f32.mrb[0].mxu0
      %2129 = vmatprep.mubr.f32.mxu0 0.0
      %2130 = vmatmul.mubr.f32.gmra.mrb[0].mxu0 %v1938
      %v2131 = vpop.f32.mrb[0].mxu0
      %v2132 = vadd.f32 0.0, %v2131
      %v2133 = vpop.f32.mrb[0].mxu0
      %2134 = vmatprep.mubr.f32.mxu0 0.0
      %2135 = vmatmul.mubr.f32.gmra.mrb[0].mxu0 %v1940
      %v2136 = vpop.f32.mrb[0].mxu0
      %v2137 = vadd.f32 0.0, %v2136
      %v2138 = vpop.f32.mrb[0].mxu0
      %2139 = vmatprep.mubr.f32.mxu0 0.0
      %2140 = vmatmul.mubr.f32.gmra.mrb[0].mxu0 %v1942
      %v2141 = vpop.f32.mrb[0].mxu0
      %v2142 = vadd.f32 0.0, %v2141
      %v2143 = vpop.f32.mrb[0].mxu0
      %2144 = vmatprep.mubr.f32.mxu0 0.0
      %2145 = vmatmul.mubr.f32.gmra.mrb[0].mxu0 %v1944
      %v2146 = vpop.f32.mrb[0].mxu0
      %v2147 = vadd.f32 0.0, %v2146
      %v2148 = vpop.f32.mrb[0].mxu0
      %2149 = vmatprep.mubr.f32.mxu0 0.0
      %2150 = vmatmul.mubr.f32.gmra.mrb[0].mxu0 %v1946
      %v2151 = vpop.f32.mrb[0].mxu0
      %v2152 = vadd.f32 0.0, %v2151
      %v2153 = vpop.f32.mrb[0].mxu0
      %2154 = vmatprep.mubr.f32.mxu0 0.0
      %2155 = vmatmul.mubr.f32.gmra.mrb[0].mxu0 %v1948
      %v2156 = vpop.f32.mrb[0].mxu0
      %v2157 = vadd.f32 0.0, %v2156
      %v2158 = vpop.f32.mrb[0].mxu0
      %2159 = vmatprep.mubr.f32.mxu0 0.0
      %2160 = vmatmul.mubr.f32.gmra.mrb[0].mxu0 %v1950
      %v2161 = vpop.f32.mrb[0].mxu0
      %v2162 = vadd.f32 0.0, %v2161
      %v2163 = vpop.f32.mrb[0].mxu0
      %2164 = vmatprep.mubr.f32.mxu0 0.0
      %2165 = vmatmul.mubr.f32.gmra.mrb[0].mxu0 %v1952
      %v2166 = vpop.f32.mrb[0].mxu0
      %v2167 = vadd.f32 0.0, %v2166
      %v2168 = vpop.f32.mrb[0].mxu0
      %2169 = vmatprep.mubr.f32.mxu0 0.0
      %2170 = vmatmul.mubr.f32.gmra.mrb[0].mxu0 %v1954
      %v2171 = vpop.f32.mrb[0].mxu0
      %v2172 = vadd.f32 0.0, %v2171
      %v2173 = vpop.f32.mrb[0].mxu0
      %2174 = vmatprep.mubr.f32.mxu0 0.0
      %2175 = vmatmul.mubr.f32.gmra.mrb[0].mxu0 %v1956
      %v2176 = vpop.f32.mrb[0].mxu0
      %v2177 = vadd.f32 0.0, %v2176
      %v2178 = vpop.f32.mrb[0].mxu0
      %2179 = vmatprep.mubr.f32.mxu0 0.0
      %2180 = vmatmul.mubr.f32.gmra.mrb[0].mxu0 %v1958
      %v2181 = vpop.f32.mrb[0].mxu0
      %v2182 = vadd.f32 0.0, %v2181
      %v2183 = vpop.f32.mrb[0].mxu0
      %2184 = vdwg.mxu0
      %v2185 = vadd.f32 %v1766, %v2027
      %v2186 = vadd.f32 %v1767, %v2032
      %v2187 = vadd.f32 %v1768, %v2037
      %v2188 = vadd.f32 %v1769, %v2042
      %v2189 = vadd.f32 %v1770, %v2047
      %v2190 = vadd.f32 %v1771, %v2052
      %v2191 = vadd.f32 %v1772, %v2057
      %v2192 = vadd.f32 %v1773, %v2062
      %v2193 = vadd.f32 %v1774, %v2067
      %v2194 = vadd.f32 %v1775, %v2072
      %v2195 = vadd.f32 %v1776, %v2077
      %v2196 = vadd.f32 %v1777, %v2082
      %v2197 = vadd.f32 %v1778, %v2087
      %v2198 = vadd.f32 %v1779, %v2092
      %v2199 = vadd.f32 %v1780, %v2097
      %v2200 = vadd.f32 %v1781, %v2102
      %v2201 = vadd.f32 %v1782, %v2107
      %v2202 = vadd.f32 %v1783, %v2112
      %v2203 = vadd.f32 %v1784, %v2117
      %v2204 = vadd.f32 %v1785, %v2122
      %v2205 = vadd.f32 %v1786, %v2127
      %v2206 = vadd.f32 %v1787, %v2132
      %v2207 = vadd.f32 %v1788, %v2137
      %v2208 = vadd.f32 %v1789, %v2142
      %v2209 = vadd.f32 %v1790, %v2147
      %v2210 = vadd.f32 %v1791, %v2152
      %v2211 = vadd.f32 %v1792, %v2157
      %v2212 = vadd.f32 %v1793, %v2162
      %v2213 = vadd.f32 %v1794, %v2167
      %v2214 = vadd.f32 %v1795, %v2172
      %v2215 = vadd.f32 %v1796, %v2177
      %v2216 = vadd.f32 %v1797, %v2182
      %v2217 = vrot.slane %v1395, 2
      %v2218 = vrot.slane %v1396, 2
      %v2219 = vsel %vm988, %v2217, %v2218
      %v2220 = vrot.slane %v1397, 2
      %v2221 = vsel %vm988, %v2218, %v2220
      %v2222 = vrot.slane %v1398, 2
      %v2223 = vrot.slane %v1399, 2
      %v2224 = vsel %vm988, %v2222, %v2223
      %v2225 = vrot.slane %v1400, 2
      %v2226 = vsel %vm988, %v2223, %v2225
      %v2227 = vrot.slane %v1401, 2
      %v2228 = vrot.slane %v1402, 2
      %v2229 = vsel %vm988, %v2227, %v2228
      %v2230 = vrot.slane %v1403, 2
      %v2231 = vsel %vm988, %v2228, %v2230
      %v2232 = vrot.slane %v1404, 2
      %v2233 = vrot.slane %v1405, 2
      %v2234 = vsel %vm988, %v2232, %v2233
      %v2235 = vrot.slane %v1406, 2
      %v2236 = vsel %vm988, %v2233, %v2235
      %v2237 = vrot.slane %v1407, 2
      %v2238 = vrot.slane %v1408, 2
      %v2239 = vsel %vm988, %v2237, %v2238
      %v2240 = vrot.slane %v1409, 2
      %v2241 = vsel %vm988, %v2238, %v2240
      %v2242 = vrot.slane %v1410, 2
      %v2243 = vrot.slane %v1411, 2
      %v2244 = vsel %vm988, %v2242, %v2243
      %v2245 = vrot.slane %v1412, 2
      %v2246 = vsel %vm988, %v2243, %v2245
      %v2247 = vrot.slane %v1413, 2
      %v2248 = vrot.slane %v1414, 2
      %v2249 = vsel %vm988, %v2247, %v2248
      %v2250 = vrot.slane %v1415, 2
      %v2251 = vsel %vm988, %v2248, %v2250
      %v2252 = vrot.slane %v1416, 2
      %v2253 = vrot.slane %v1417, 2
      %v2254 = vsel %vm988, %v2252, %v2253
      %v2255 = vrot.slane %v1418, 2
      %v2256 = vsel %vm988, %v2253, %v2255
      %v2257 = vrot.slane %v1419, 2
      %v2258 = vrot.slane %v1420, 2
      %v2259 = vsel %vm988, %v2257, %v2258
      %v2260 = vrot.slane %v1421, 2
      %v2261 = vsel %vm988, %v2258, %v2260
      %v2262 = vrot.slane %v1422, 2
      %v2263 = vrot.slane %v1423, 2
      %v2264 = vsel %vm988, %v2262, %v2263
      %v2265 = vrot.slane %v1424, 2
      %v2266 = vsel %vm988, %v2263, %v2265
      %v2267 = vrot.slane %v1425, 2
      %v2268 = vrot.slane %v1426, 2
      %v2269 = vsel %vm988, %v2267, %v2268
      %v2270 = vrot.slane %v1427, 2
      %v2271 = vsel %vm988, %v2268, %v2270
      %v2272 = vrot.slane %v1428, 2
      %v2273 = vrot.slane %v1429, 2
      %v2274 = vsel %vm988, %v2272, %v2273
      %v2275 = vrot.slane %v1430, 2
      %v2276 = vsel %vm988, %v2273, %v2275
      %v2277 = vrot.slane %v1431, 2
      %v2278 = vrot.slane %v1432, 2
      %v2279 = vsel %vm988, %v2277, %v2278
      %v2280 = vrot.slane %v1433, 2
      %v2281 = vsel %vm988, %v2278, %v2280
      %v2282 = vrot.slane %v1434, 2
      %v2283 = vrot.slane %v1435, 2
      %v2284 = vsel %vm988, %v2282, %v2283
      %v2285 = vrot.slane %v1436, 2
      %v2286 = vsel %vm988, %v2283, %v2285
      %v2287 = vrot.slane %v1437, 2
      %v2288 = vrot.slane %v1438, 2
      %v2289 = vsel %vm988, %v2287, %v2288
      %v2290 = vrot.slane %v1439, 2
      %v2291 = vsel %vm988, %v2288, %v2290
      %v2292 = vrot.slane %v1440, 2
      %v2293 = vrot.slane %v1441, 2
      %v2294 = vsel %vm988, %v2292, %v2293
      %v2295 = vrot.slane %v1442, 2
      %v2296 = vsel %vm988, %v2293, %v2295
      %s2297 = scalar_lea.vmem %s1, 40
      %v2298 = vld [vmem:[%s2297] sm:$0xff]
      %v2299 = vsel %vm409, %v2219, 0
      %v2301 = vsel %vm409, %v2221, 0
      %v2303 = vsel %vm409, %v2224, 0
      %v2305 = vsel %vm409, %v2226, 0
      %v2307 = vsel %vm409, %v2229, 0
      %v2309 = vsel %vm409, %v2231, 0
      %v2311 = vsel %vm409, %v2234, 0
      %v2313 = vsel %vm409, %v2236, 0
      %v2315 = vsel %vm409, %v2239, 0
      %v2317 = vsel %vm409, %v2241, 0
      %v2319 = vsel %vm409, %v2244, 0
      %v2321 = vsel %vm409, %v2246, 0
      %v2323 = vsel %vm409, %v2249, 0
      %v2325 = vsel %vm409, %v2251, 0
      %v2327 = vsel %vm409, %v2254, 0
      %v2329 = vsel %vm409, %v2256, 0
      %v2331 = vsel %vm409, %v2259, 0
      %v2333 = vsel %vm409, %v2261, 0
      %v2335 = vsel %vm409, %v2264, 0
      %v2337 = vsel %vm409, %v2266, 0
      %v2339 = vsel %vm409, %v2269, 0
      %v2341 = vsel %vm409, %v2271, 0
      %v2343 = vsel %vm409, %v2274, 0
      %v2345 = vsel %vm409, %v2276, 0
      %v2347 = vsel %vm409, %v2279, 0
      %v2349 = vsel %vm409, %v2281, 0
      %v2351 = vsel %vm409, %v2284, 0
      %v2353 = vsel %vm409, %v2286, 0
      %v2355 = vsel %vm409, %v2289, 0
      %v2357 = vsel %vm409, %v2291, 0
      %v2359 = vsel %vm409, %v2294, 0
      %v2361 = vsel %vm409, %v2296, 0
      %2363 = vmatprep.subr.mxu0 0.0
      %2364 = vmatpush1.msra.mxu0 %v2298
      %2365 = vmatprep.subr.mxu0 0.0
      %2366 = vmatpush1.msra.mxu0 0.0
      %2367 = vmatprep.subr.mxu0 0.0
      %2368 = vmatpush1.msra.mxu0 0.0
      %2369 = vmatprep.subr.mxu0 0.0
      %2370 = vmatpush1.msra.mxu0 0.0
      %2371 = vmatprep.subr.mxu0 0.0
      %2372 = vmatpush1.msra.mxu0 0.0
      %2373 = vmatprep.subr.mxu0 0.0
      %2374 = vmatpush1.msra.mxu0 0.0
      %2375 = vmatprep.subr.mxu0 0.0
      %2376 = vmatpush1.msra.mxu0 0.0
      %2377 = vmatprep.subr.mxu0 0.0
      %2378 = vmatpush1.msra.mxu0 0.0
      %2379 = vmatprep.subr.mxu0 0.0
      %2380 = vmatpush1.msra.mxu0 0.0
      %2381 = vmatprep.subr.mxu0 0.0
      %2382 = vmatpush1.msra.mxu0 0.0
      %2383 = vmatprep.subr.mxu0 0.0
      %2384 = vmatpush1.msra.mxu0 0.0
      %2385 = vmatprep.subr.mxu0 0.0
      %2386 = vmatpush1.msra.mxu0 0.0
      %2387 = vmatprep.subr.mxu0 0.0
      %2388 = vmatpush1.msra.mxu0 0.0
      %2389 = vmatprep.subr.mxu0 0.0
      %2390 = vmatpush1.msra.mxu0 0.0
      %2391 = vmatprep.subr.mxu0 0.0
      %2392 = vmatpush1.msra.mxu0 0.0
      %2393 = vmatprep.subr.mxu0 0.0
      %2394 = vmatpush1.msra.mxu0 0.0
      %2395 = vmatprep.subr.mxu0 0.0
      %2396 = vmatpush1.msra.mxu0 0.0
      %2397 = vmatprep.subr.mxu0 0.0
      %2398 = vmatpush1.msra.mxu0 0.0
      %2399 = vmatprep.subr.mxu0 0.0
      %2400 = vmatpush1.msra.mxu0 0.0
      %2401 = vmatprep.subr.mxu0 0.0
      %2402 = vmatpush1.msra.mxu0 0.0
      %2403 = vmatprep.subr.mxu0 0.0
      %2404 = vmatpush1.msra.mxu0 0.0
      %2405 = vmatprep.subr.mxu0 0.0
      %2406 = vmatpush1.msra.mxu0 0.0
      %2407 = vmatprep.subr.mxu0 0.0
      %2408 = vmatpush1.msra.mxu0 0.0
      %2409 = vmatprep.subr.mxu0 0.0
      %2410 = vmatpush1.msra.mxu0 0.0
      %2411 = vmatprep.subr.mxu0 0.0
      %2412 = vmatpush1.msra.mxu0 0.0
      %2413 = vmatprep.subr.mxu0 0.0
      %2414 = vmatpush1.msra.mxu0 0.0
      %2415 = vmatprep.subr.mxu0 0.0
      %2416 = vmatpush1.msra.mxu0 0.0
      %2417 = vmatprep.subr.mxu0 0.0
      %2418 = vmatpush1.msra.mxu0 0.0
      %2419 = vmatprep.subr.mxu0 0.0
      %2420 = vmatpush1.msra.mxu0 0.0
      %2421 = vmatprep.subr.mxu0 0.0
      %2422 = vmatpush1.msra.mxu0 0.0
      %2423 = vmatprep.subr.mxu0 0.0
      %2424 = vmatpush1.msra.mxu0 0.0
      %2425 = vmatprep.subr.mxu0 0.0
      %2426 = vmatpush1.msra.mxu0 0.0
      %2427 = vmatprep.mubr.f32.mxu0 0.0
      %2428 = vmatmul.mubr.f32.gmra.mrb[0].mxu0 %v2299
      %v2429 = vpop.f32.mrb[0].mxu0
      %v2430 = vadd.f32 0.0, %v2429
      %v2431 = vpop.f32.mrb[0].mxu0
      %2432 = vmatprep.mubr.f32.mxu0 0.0
      %2433 = vmatmul.mubr.f32.gmra.mrb[0].mxu0 %v2301
      %v2434 = vpop.f32.mrb[0].mxu0
      %v2435 = vadd.f32 0.0, %v2434
      %v2436 = vpop.f32.mrb[0].mxu0
      %2437 = vmatprep.mubr.f32.mxu0 0.0
      %2438 = vmatmul.mubr.f32.gmra.mrb[0].mxu0 %v2303
      %v2439 = vpop.f32.mrb[0].mxu0
      %v2440 = vadd.f32 0.0, %v2439
      %v2441 = vpop.f32.mrb[0].mxu0
      %2442 = vmatprep.mubr.f32.mxu0 0.0
      %2443 = vmatmul.mubr.f32.gmra.mrb[0].mxu0 %v2305
      %v2444 = vpop.f32.mrb[0].mxu0
      %v2445 = vadd.f32 0.0, %v2444
      %v2446 = vpop.f32.mrb[0].mxu0
      %2447 = vmatprep.mubr.f32.mxu0 0.0
      %2448 = vmatmul.mubr.f32.gmra.mrb[0].mxu0 %v2307
      %v2449 = vpop.f32.mrb[0].mxu0
      %v2450 = vadd.f32 0.0, %v2449
      %v2451 = vpop.f32.mrb[0].mxu0
      %2452 = vmatprep.mubr.f32.mxu0 0.0
      %2453 = vmatmul.mubr.f32.gmra.mrb[0].mxu0 %v2309
      %v2454 = vpop.f32.mrb[0].mxu0
      %v2455 = vadd.f32 0.0, %v2454
      %v2456 = vpop.f32.mrb[0].mxu0
      %2457 = vmatprep.mubr.f32.mxu0 0.0
      %2458 = vmatmul.mubr.f32.gmra.mrb[0].mxu0 %v2311
      %v2459 = vpop.f32.mrb[0].mxu0
      %v2460 = vadd.f32 0.0, %v2459
      %v2461 = vpop.f32.mrb[0].mxu0
      %2462 = vmatprep.mubr.f32.mxu0 0.0
      %2463 = vmatmul.mubr.f32.gmra.mrb[0].mxu0 %v2313
      %v2464 = vpop.f32.mrb[0].mxu0
      %v2465 = vadd.f32 0.0, %v2464
      %v2466 = vpop.f32.mrb[0].mxu0
      %2467 = vmatprep.mubr.f32.mxu0 0.0
      %2468 = vmatmul.mubr.f32.gmra.mrb[0].mxu0 %v2315
      %v2469 = vpop.f32.mrb[0].mxu0
      %v2470 = vadd.f32 0.0, %v2469
      %v2471 = vpop.f32.mrb[0].mxu0
      %2472 = vmatprep.mubr.f32.mxu0 0.0
      %2473 = vmatmul.mubr.f32.gmra.mrb[0].mxu0 %v2317
      %v2474 = vpop.f32.mrb[0].mxu0
      %v2475 = vadd.f32 0.0, %v2474
      %v2476 = vpop.f32.mrb[0].mxu0
      %2477 = vmatprep.mubr.f32.mxu0 0.0
      %2478 = vmatmul.mubr.f32.gmra.mrb[0].mxu0 %v2319
      %v2479 = vpop.f32.mrb[0].mxu0
      %v2480 = vadd.f32 0.0, %v2479
      %v2481 = vpop.f32.mrb[0].mxu0
      %2482 = vmatprep.mubr.f32.mxu0 0.0
      %2483 = vmatmul.mubr.f32.gmra.mrb[0].mxu0 %v2321
      %v2484 = vpop.f32.mrb[0].mxu0
      %v2485 = vadd.f32 0.0, %v2484
      %v2486 = vpop.f32.mrb[0].mxu0
      %2487 = vmatprep.mubr.f32.mxu0 0.0
      %2488 = vmatmul.mubr.f32.gmra.mrb[0].mxu0 %v2323
      %v2489 = vpop.f32.mrb[0].mxu0
      %v2490 = vadd.f32 0.0, %v2489
      %v2491 = vpop.f32.mrb[0].mxu0
      %2492 = vmatprep.mubr.f32.mxu0 0.0
      %2493 = vmatmul.mubr.f32.gmra.mrb[0].mxu0 %v2325
      %v2494 = vpop.f32.mrb[0].mxu0
      %v2495 = vadd.f32 0.0, %v2494
      %v2496 = vpop.f32.mrb[0].mxu0
      %2497 = vmatprep.mubr.f32.mxu0 0.0
      %2498 = vmatmul.mubr.f32.gmra.mrb[0].mxu0 %v2327
      %v2499 = vpop.f32.mrb[0].mxu0
      %v2500 = vadd.f32 0.0, %v2499
      %v2501 = vpop.f32.mrb[0].mxu0
      %2502 = vmatprep.mubr.f32.mxu0 0.0
      %2503 = vmatmul.mubr.f32.gmra.mrb[0].mxu0 %v2329
      %v2504 = vpop.f32.mrb[0].mxu0
      %v2505 = vadd.f32 0.0, %v2504
      %v2506 = vpop.f32.mrb[0].mxu0
      %2507 = vmatprep.mubr.f32.mxu0 0.0
      %2508 = vmatmul.mubr.f32.gmra.mrb[0].mxu0 %v2331
      %v2509 = vpop.f32.mrb[0].mxu0
      %v2510 = vadd.f32 0.0, %v2509
      %v2511 = vpop.f32.mrb[0].mxu0
      %2512 = vmatprep.mubr.f32.mxu0 0.0
      %2513 = vmatmul.mubr.f32.gmra.mrb[0].mxu0 %v2333
      %v2514 = vpop.f32.mrb[0].mxu0
      %v2515 = vadd.f32 0.0, %v2514
      %v2516 = vpop.f32.mrb[0].mxu0
      %2517 = vmatprep.mubr.f32.mxu0 0.0
      %2518 = vmatmul.mubr.f32.gmra.mrb[0].mxu0 %v2335
      %v2519 = vpop.f32.mrb[0].mxu0
      %v2520 = vadd.f32 0.0, %v2519
      %v2521 = vpop.f32.mrb[0].mxu0
      %2522 = vmatprep.mubr.f32.mxu0 0.0
      %2523 = vmatmul.mubr.f32.gmra.mrb[0].mxu0 %v2337
      %v2524 = vpop.f32.mrb[0].mxu0
      %v2525 = vadd.f32 0.0, %v2524
      %v2526 = vpop.f32.mrb[0].mxu0
      %2527 = vmatprep.mubr.f32.mxu0 0.0
      %2528 = vmatmul.mubr.f32.gmra.mrb[0].mxu0 %v2339
      %v2529 = vpop.f32.mrb[0].mxu0
      %v2530 = vadd.f32 0.0, %v2529
      %v2531 = vpop.f32.mrb[0].mxu0
      %2532 = vmatprep.mubr.f32.mxu0 0.0
      %2533 = vmatmul.mubr.f32.gmra.mrb[0].mxu0 %v2341
      %v2534 = vpop.f32.mrb[0].mxu0
      %v2535 = vadd.f32 0.0, %v2534
      %v2536 = vpop.f32.mrb[0].mxu0
      %2537 = vmatprep.mubr.f32.mxu0 0.0
      %2538 = vmatmul.mubr.f32.gmra.mrb[0].mxu0 %v2343
      %v2539 = vpop.f32.mrb[0].mxu0
      %v2540 = vadd.f32 0.0, %v2539
      %v2541 = vpop.f32.mrb[0].mxu0
      %2542 = vmatprep.mubr.f32.mxu0 0.0
      %2543 = vmatmul.mubr.f32.gmra.mrb[0].mxu0 %v2345
      %v2544 = vpop.f32.mrb[0].mxu0
      %v2545 = vadd.f32 0.0, %v2544
      %v2546 = vpop.f32.mrb[0].mxu0
      %2547 = vmatprep.mubr.f32.mxu0 0.0
      %2548 = vmatmul.mubr.f32.gmra.mrb[0].mxu0 %v2347
      %v2549 = vpop.f32.mrb[0].mxu0
      %v2550 = vadd.f32 0.0, %v2549
      %v2551 = vpop.f32.mrb[0].mxu0
      %2552 = vmatprep.mubr.f32.mxu0 0.0
      %2553 = vmatmul.mubr.f32.gmra.mrb[0].mxu0 %v2349
      %v2554 = vpop.f32.mrb[0].mxu0
      %v2555 = vadd.f32 0.0, %v2554
      %v2556 = vpop.f32.mrb[0].mxu0
      %2557 = vmatprep.mubr.f32.mxu0 0.0
      %2558 = vmatmul.mubr.f32.gmra.mrb[0].mxu0 %v2351
      %v2559 = vpop.f32.mrb[0].mxu0
      %v2560 = vadd.f32 0.0, %v2559
      %v2561 = vpop.f32.mrb[0].mxu0
      %2562 = vmatprep.mubr.f32.mxu0 0.0
      %2563 = vmatmul.mubr.f32.gmra.mrb[0].mxu0 %v2353
      %v2564 = vpop.f32.mrb[0].mxu0
      %v2565 = vadd.f32 0.0, %v2564
      %v2566 = vpop.f32.mrb[0].mxu0
      %2567 = vmatprep.mubr.f32.mxu0 0.0
      %2568 = vmatmul.mubr.f32.gmra.mrb[0].mxu0 %v2355
      %v2569 = vpop.f32.mrb[0].mxu0
      %v2570 = vadd.f32 0.0, %v2569
      %v2571 = vpop.f32.mrb[0].mxu0
      %2572 = vmatprep.mubr.f32.mxu0 0.0
      %2573 = vmatmul.mubr.f32.gmra.mrb[0].mxu0 %v2357
      %v2574 = vpop.f32.mrb[0].mxu0
      %v2575 = vadd.f32 0.0, %v2574
      %v2576 = vpop.f32.mrb[0].mxu0
      %2577 = vmatprep.mubr.f32.mxu0 0.0
      %2578 = vmatmul.mubr.f32.gmra.mrb[0].mxu0 %v2359
      %v2579 = vpop.f32.mrb[0].mxu0
      %v2580 = vadd.f32 0.0, %v2579
      %v2581 = vpop.f32.mrb[0].mxu0
      %2582 = vmatprep.mubr.f32.mxu0 0.0
      %2583 = vmatmul.mubr.f32.gmra.mrb[0].mxu0 %v2361
      %v2584 = vpop.f32.mrb[0].mxu0
      %v2585 = vadd.f32 0.0, %v2584
      %v2586 = vpop.f32.mrb[0].mxu0
      %2587 = vdwg.mxu0
      %v2588 = vadd.f32 %v2185, %v2430
      %v2589 = vadd.f32 %v2186, %v2435
      %v2590 = vadd.f32 %v2187, %v2440
      %v2591 = vadd.f32 %v2188, %v2445
      %v2592 = vadd.f32 %v2189, %v2450
      %v2593 = vadd.f32 %v2190, %v2455
      %v2594 = vadd.f32 %v2191, %v2460
      %v2595 = vadd.f32 %v2192, %v2465
      %v2596 = vadd.f32 %v2193, %v2470
      %v2597 = vadd.f32 %v2194, %v2475
      %v2598 = vadd.f32 %v2195, %v2480
      %v2599 = vadd.f32 %v2196, %v2485
      %v2600 = vadd.f32 %v2197, %v2490
      %v2601 = vadd.f32 %v2198, %v2495
      %v2602 = vadd.f32 %v2199, %v2500
      %v2603 = vadd.f32 %v2200, %v2505
      %v2604 = vadd.f32 %v2201, %v2510
      %v2605 = vadd.f32 %v2202, %v2515
      %v2606 = vadd.f32 %v2203, %v2520
      %v2607 = vadd.f32 %v2204, %v2525
      %v2608 = vadd.f32 %v2205, %v2530
      %v2609 = vadd.f32 %v2206, %v2535
      %v2610 = vadd.f32 %v2207, %v2540
      %v2611 = vadd.f32 %v2208, %v2545
      %v2612 = vadd.f32 %v2209, %v2550
      %v2613 = vadd.f32 %v2210, %v2555
      %v2614 = vadd.f32 %v2211, %v2560
      %v2615 = vadd.f32 %v2212, %v2565
      %v2616 = vadd.f32 %v2213, %v2570
      %v2617 = vadd.f32 %v2214, %v2575
      %v2618 = vadd.f32 %v2215, %v2580
      %v2619 = vadd.f32 %v2216, %v2585
      %s2620 = sadd.s32 0, 2
      %s2621 = smul.u32 %s2620, 24
      %s2622 = scalar_lea.vmem %s219, %s2621
      %v2623 = vld [vmem:[%s2622] sm:$0xff]
      %v2624 = vld [vmem:[%s2622 + $0x8] sm:$0xff]
      %v2625 = vld [vmem:[%s2622 + $0x10] sm:$0x3]
      %v2626 = vld [vmem:[%s2622 + $0x18] sm:$0xff]
      %v2627 = vld [vmem:[%s2622 + $0x20] sm:$0xff]
      %v2628 = vld [vmem:[%s2622 + $0x28] sm:$0x3]
      %v2629 = vld [vmem:[%s2622 + $0x30] sm:$0xff]
      %v2630 = vld [vmem:[%s2622 + $0x38] sm:$0xff]
      %v2631 = vld [vmem:[%s2622 + $0x40] sm:$0x3]
      %v2632 = vld [vmem:[%s2622 + $0x48] sm:$0xff]
      %v2633 = vld [vmem:[%s2622 + $0x50] sm:$0xff]
      %v2634 = vld [vmem:[%s2622 + $0x58] sm:$0x3]
      %v2635 = vld [vmem:[%s2622 + $0x60] sm:$0xff]
      %v2636 = vld [vmem:[%s2622 + $0x68] sm:$0xff]
      %v2637 = vld [vmem:[%s2622 + $0x70] sm:$0x3]
      %v2638 = vld [vmem:[%s2622 + $0x78] sm:$0xff]
      %v2639 = vld [vmem:[%s2622 + $0x80] sm:$0xff]
      %v2640 = vld [vmem:[%s2622 + $0x88] sm:$0x3]
      %v2641 = vld [vmem:[%s2622 + $0x90] sm:$0xff]
      %v2642 = vld [vmem:[%s2622 + $0x98] sm:$0xff]
      %v2643 = vld [vmem:[%s2622 + $0xa0] sm:$0x3]
      %v2644 = vld [vmem:[%s2622 + $0xa8] sm:$0xff]
      %v2645 = vld [vmem:[%s2622 + $0xb0] sm:$0xff]
      %v2646 = vld [vmem:[%s2622 + $0xb8] sm:$0x3]
      %v2647 = vld [vmem:[%s2622 + $0xc0] sm:$0xff]
      %v2648 = vld [vmem:[%s2622 + $0xc8] sm:$0xff]
      %v2649 = vld [vmem:[%s2622 + $0xd0] sm:$0x3]
      %v2650 = vld [vmem:[%s2622 + $0xd8] sm:$0xff]
      %v2651 = vld [vmem:[%s2622 + $0xe0] sm:$0xff]
      %v2652 = vld [vmem:[%s2622 + $0xe8] sm:$0x3]
      %v2653 = vld [vmem:[%s2622 + $0xf0] sm:$0xff]
      %v2654 = vld [vmem:[%s2622 + $0xf8] sm:$0xff]
      %v2655 = vld [vmem:[%s2622 + $0x100] sm:$0x3]
      %v2656 = vld [vmem:[%s2622 + $0x108] sm:$0xff]
      %v2657 = vld [vmem:[%s2622 + $0x110] sm:$0xff]
      %v2658 = vld [vmem:[%s2622 + $0x118] sm:$0x3]
      %v2659 = vld [vmem:[%s2622 + $0x120] sm:$0xff]
      %v2660 = vld [vmem:[%s2622 + $0x128] sm:$0xff]
      %v2661 = vld [vmem:[%s2622 + $0x130] sm:$0x3]
      %v2662 = vld [vmem:[%s2622 + $0x138] sm:$0xff]
      %v2663 = vld [vmem:[%s2622 + $0x140] sm:$0xff]
      %v2664 = vld [vmem:[%s2622 + $0x148] sm:$0x3]
      %v2665 = vld [vmem:[%s2622 + $0x150] sm:$0xff]
      %v2666 = vld [vmem:[%s2622 + $0x158] sm:$0xff]
      %v2667 = vld [vmem:[%s2622 + $0x160] sm:$0x3]
      %v2668 = vld [vmem:[%s2622 + $0x168] sm:$0xff]
      %v2669 = vld [vmem:[%s2622 + $0x170] sm:$0xff]
      %v2670 = vld [vmem:[%s2622 + $0x178] sm:$0x3]
      %s2671 = scalar_lea.vmem %s1, 48
      %v2672 = vld [vmem:[%s2671] sm:$0xff]
      %v2674 = vsel %vm409, %v2623, 0
      %v2677 = vsel %vm409, %v2624, 0
      %v2680 = vsel %vm409, %v2626, 0
      %v2683 = vsel %vm409, %v2627, 0
      %v2686 = vsel %vm409, %v2629, 0
      %v2689 = vsel %vm409, %v2630, 0
      %v2692 = vsel %vm409, %v2632, 0
      %v2695 = vsel %vm409, %v2633, 0
      %v2698 = vsel %vm409, %v2635, 0
      %v2701 = vsel %vm409, %v2636, 0
      %v2704 = vsel %vm409, %v2638, 0
      %v2707 = vsel %vm409, %v2639, 0
      %v2710 = vsel %vm409, %v2641, 0
      %v2713 = vsel %vm409, %v2642, 0
      %v2716 = vsel %vm409, %v2644, 0
      %v2719 = vsel %vm409, %v2645, 0
      %v2722 = vsel %vm409, %v2647, 0
      %v2725 = vsel %vm409, %v2648, 0
      %v2728 = vsel %vm409, %v2650, 0
      %v2731 = vsel %vm409, %v2651, 0
      %v2734 = vsel %vm409, %v2653, 0
      %v2737 = vsel %vm409, %v2654, 0
      %v2740 = vsel %vm409, %v2656, 0
      %v2743 = vsel %vm409, %v2657, 0
      %v2746 = vsel %vm409, %v2659, 0
      %v2749 = vsel %vm409, %v2660, 0
      %v2752 = vsel %vm409, %v2662, 0
      %v2755 = vsel %vm409, %v2663, 0
      %v2758 = vsel %vm409, %v2665, 0
      %v2761 = vsel %vm409, %v2666, 0
      %v2764 = vsel %vm409, %v2668, 0
      %v2767 = vsel %vm409, %v2669, 0
      %2769 = vmatprep.subr.mxu0 0.0
      %2770 = vmatpush1.msra.mxu0 %v2672
      %2771 = vmatprep.subr.mxu0 0.0
      %2772 = vmatpush1.msra.mxu0 0.0
      %2773 = vmatprep.subr.mxu0 0.0
      %2774 = vmatpush1.msra.mxu0 0.0
      %2775 = vmatprep.subr.mxu0 0.0
      %2776 = vmatpush1.msra.mxu0 0.0
      %2777 = vmatprep.subr.mxu0 0.0
      %2778 = vmatpush1.msra.mxu0 0.0
      %2779 = vmatprep.subr.mxu0 0.0
      %2780 = vmatpush1.msra.mxu0 0.0
      %2781 = vmatprep.subr.mxu0 0.0
      %2782 = vmatpush1.msra.mxu0 0.0
      %2783 = vmatprep.subr.mxu0 0.0
      %2784 = vmatpush1.msra.mxu0 0.0
      %2785 = vmatprep.subr.mxu0 0.0
      %2786 = vmatpush1.msra.mxu0 0.0
      %2787 = vmatprep.subr.mxu0 0.0
      %2788 = vmatpush1.msra.mxu0 0.0
      %2789 = vmatprep.subr.mxu0 0.0
      %2790 = vmatpush1.msra.mxu0 0.0
      %2791 = vmatprep.subr.mxu0 0.0
      %2792 = vmatpush1.msra.mxu0 0.0
      %2793 = vmatprep.subr.mxu0 0.0
      %2794 = vmatpush1.msra.mxu0 0.0
      %2795 = vmatprep.subr.mxu0 0.0
      %2796 = vmatpush1.msra.mxu0 0.0
      %2797 = vmatprep.subr.mxu0 0.0
      %2798 = vmatpush1.msra.mxu0 0.0
      %2799 = vmatprep.subr.mxu0 0.0
      %2800 = vmatpush1.msra.mxu0 0.0
      %2801 = vmatprep.subr.mxu0 0.0
      %2802 = vmatpush1.msra.mxu0 0.0
      %2803 = vmatprep.subr.mxu0 0.0
      %2804 = vmatpush1.msra.mxu0 0.0
      %2805 = vmatprep.subr.mxu0 0.0
      %2806 = vmatpush1.msra.mxu0 0.0
      %2807 = vmatprep.subr.mxu0 0.0
      %2808 = vmatpush1.msra.mxu0 0.0
      %2809 = vmatprep.subr.mxu0 0.0
      %2810 = vmatpush1.msra.mxu0 0.0
      %2811 = vmatprep.subr.mxu0 0.0
      %2812 = vmatpush1.msra.mxu0 0.0
      %2813 = vmatprep.subr.mxu0 0.0
      %2814 = vmatpush1.msra.mxu0 0.0
      %2815 = vmatprep.subr.mxu0 0.0
      %2816 = vmatpush1.msra.mxu0 0.0
      %2817 = vmatprep.subr.mxu0 0.0
      %2818 = vmatpush1.msra.mxu0 0.0
      %2819 = vmatprep.subr.mxu0 0.0
      %2820 = vmatpush1.msra.mxu0 0.0
      %2821 = vmatprep.subr.mxu0 0.0
      %2822 = vmatpush1.msra.mxu0 0.0
      %2823 = vmatprep.subr.mxu0 0.0
      %2824 = vmatpush1.msra.mxu0 0.0
      %2825 = vmatprep.subr.mxu0 0.0
      %2826 = vmatpush1.msra.mxu0 0.0
      %2827 = vmatprep.subr.mxu0 0.0
      %2828 = vmatpush1.msra.mxu0 0.0
      %2829 = vmatprep.subr.mxu0 0.0
      %2830 = vmatpush1.msra.mxu0 0.0
      %2831 = vmatprep.subr.mxu0 0.0
      %2832 = vmatpush1.msra.mxu0 0.0
      %2833 = vmatprep.mubr.f32.mxu0 0.0
      %2834 = vmatmul.mubr.f32.gmra.mrb[0].mxu0 %v2674
      %v2835 = vpop.f32.mrb[0].mxu0
      %v2836 = vadd.f32 0.0, %v2835
      %v2837 = vpop.f32.mrb[0].mxu0
      %2838 = vmatprep.mubr.f32.mxu0 0.0
      %2839 = vmatmul.mubr.f32.gmra.mrb[0].mxu0 %v2677
      %v2840 = vpop.f32.mrb[0].mxu0
      %v2841 = vadd.f32 0.0, %v2840
      %v2842 = vpop.f32.mrb[0].mxu0
      %2843 = vmatprep.mubr.f32.mxu0 0.0
      %2844 = vmatmul.mubr.f32.gmra.mrb[0].mxu0 %v2680
      %v2845 = vpop.f32.mrb[0].mxu0
      %v2846 = vadd.f32 0.0, %v2845
      %v2847 = vpop.f32.mrb[0].mxu0
      %2848 = vmatprep.mubr.f32.mxu0 0.0
      %2849 = vmatmul.mubr.f32.gmra.mrb[0].mxu0 %v2683
      %v2850 = vpop.f32.mrb[0].mxu0
      %v2851 = vadd.f32 0.0, %v2850
      %v2852 = vpop.f32.mrb[0].mxu0
      %2853 = vmatprep.mubr.f32.mxu0 0.0
      %2854 = vmatmul.mubr.f32.gmra.mrb[0].mxu0 %v2686
      %v2855 = vpop.f32.mrb[0].mxu0
      %v2856 = vadd.f32 0.0, %v2855
      %v2857 = vpop.f32.mrb[0].mxu0
      %2858 = vmatprep.mubr.f32.mxu0 0.0
      %2859 = vmatmul.mubr.f32.gmra.mrb[0].mxu0 %v2689
      %v2860 = vpop.f32.mrb[0].mxu0
      %v2861 = vadd.f32 0.0, %v2860
      %v2862 = vpop.f32.mrb[0].mxu0
      %2863 = vmatprep.mubr.f32.mxu0 0.0
      %2864 = vmatmul.mubr.f32.gmra.mrb[0].mxu0 %v2692
      %v2865 = vpop.f32.mrb[0].mxu0
      %v2866 = vadd.f32 0.0, %v2865
      %v2867 = vpop.f32.mrb[0].mxu0
      %2868 = vmatprep.mubr.f32.mxu0 0.0
      %2869 = vmatmul.mubr.f32.gmra.mrb[0].mxu0 %v2695
      %v2870 = vpop.f32.mrb[0].mxu0
      %v2871 = vadd.f32 0.0, %v2870
      %v2872 = vpop.f32.mrb[0].mxu0
      %2873 = vmatprep.mubr.f32.mxu0 0.0
      %2874 = vmatmul.mubr.f32.gmra.mrb[0].mxu0 %v2698
      %v2875 = vpop.f32.mrb[0].mxu0
      %v2876 = vadd.f32 0.0, %v2875
      %v2877 = vpop.f32.mrb[0].mxu0
      %2878 = vmatprep.mubr.f32.mxu0 0.0
      %2879 = vmatmul.mubr.f32.gmra.mrb[0].mxu0 %v2701
      %v2880 = vpop.f32.mrb[0].mxu0
      %v2881 = vadd.f32 0.0, %v2880
      %v2882 = vpop.f32.mrb[0].mxu0
      %2883 = vmatprep.mubr.f32.mxu0 0.0
      %2884 = vmatmul.mubr.f32.gmra.mrb[0].mxu0 %v2704
      %v2885 = vpop.f32.mrb[0].mxu0
      %v2886 = vadd.f32 0.0, %v2885
      %v2887 = vpop.f32.mrb[0].mxu0
      %2888 = vmatprep.mubr.f32.mxu0 0.0
      %2889 = vmatmul.mubr.f32.gmra.mrb[0].mxu0 %v2707
      %v2890 = vpop.f32.mrb[0].mxu0
      %v2891 = vadd.f32 0.0, %v2890
      %v2892 = vpop.f32.mrb[0].mxu0
      %2893 = vmatprep.mubr.f32.mxu0 0.0
      %2894 = vmatmul.mubr.f32.gmra.mrb[0].mxu0 %v2710
      %v2895 = vpop.f32.mrb[0].mxu0
      %v2896 = vadd.f32 0.0, %v2895
      %v2897 = vpop.f32.mrb[0].mxu0
      %2898 = vmatprep.mubr.f32.mxu0 0.0
      %2899 = vmatmul.mubr.f32.gmra.mrb[0].mxu0 %v2713
      %v2900 = vpop.f32.mrb[0].mxu0
      %v2901 = vadd.f32 0.0, %v2900
      %v2902 = vpop.f32.mrb[0].mxu0
      %2903 = vmatprep.mubr.f32.mxu0 0.0
      %2904 = vmatmul.mubr.f32.gmra.mrb[0].mxu0 %v2716
      %v2905 = vpop.f32.mrb[0].mxu0
      %v2906 = vadd.f32 0.0, %v2905
      %v2907 = vpop.f32.mrb[0].mxu0
      %2908 = vmatprep.mubr.f32.mxu0 0.0
      %2909 = vmatmul.mubr.f32.gmra.mrb[0].mxu0 %v2719
      %v2910 = vpop.f32.mrb[0].mxu0
      %v2911 = vadd.f32 0.0, %v2910
      %v2912 = vpop.f32.mrb[0].mxu0
      %2913 = vmatprep.mubr.f32.mxu0 0.0
      %2914 = vmatmul.mubr.f32.gmra.mrb[0].mxu0 %v2722
      %v2915 = vpop.f32.mrb[0].mxu0
      %v2916 = vadd.f32 0.0, %v2915
      %v2917 = vpop.f32.mrb[0].mxu0
      %2918 = vmatprep.mubr.f32.mxu0 0.0
      %2919 = vmatmul.mubr.f32.gmra.mrb[0].mxu0 %v2725
      %v2920 = vpop.f32.mrb[0].mxu0
      %v2921 = vadd.f32 0.0, %v2920
      %v2922 = vpop.f32.mrb[0].mxu0
      %2923 = vmatprep.mubr.f32.mxu0 0.0
      %2924 = vmatmul.mubr.f32.gmra.mrb[0].mxu0 %v2728
      %v2925 = vpop.f32.mrb[0].mxu0
      %v2926 = vadd.f32 0.0, %v2925
      %v2927 = vpop.f32.mrb[0].mxu0
      %2928 = vmatprep.mubr.f32.mxu0 0.0
      %2929 = vmatmul.mubr.f32.gmra.mrb[0].mxu0 %v2731
      %v2930 = vpop.f32.mrb[0].mxu0
      %v2931 = vadd.f32 0.0, %v2930
      %v2932 = vpop.f32.mrb[0].mxu0
      %2933 = vmatprep.mubr.f32.mxu0 0.0
      %2934 = vmatmul.mubr.f32.gmra.mrb[0].mxu0 %v2734
      %v2935 = vpop.f32.mrb[0].mxu0
      %v2936 = vadd.f32 0.0, %v2935
      %v2937 = vpop.f32.mrb[0].mxu0
      %2938 = vmatprep.mubr.f32.mxu0 0.0
      %2939 = vmatmul.mubr.f32.gmra.mrb[0].mxu0 %v2737
      %v2940 = vpop.f32.mrb[0].mxu0
      %v2941 = vadd.f32 0.0, %v2940
      %v2942 = vpop.f32.mrb[0].mxu0
      %2943 = vmatprep.mubr.f32.mxu0 0.0
      %2944 = vmatmul.mubr.f32.gmra.mrb[0].mxu0 %v2740
      %v2945 = vpop.f32.mrb[0].mxu0
      %v2946 = vadd.f32 0.0, %v2945
      %v2947 = vpop.f32.mrb[0].mxu0
      %2948 = vmatprep.mubr.f32.mxu0 0.0
      %2949 = vmatmul.mubr.f32.gmra.mrb[0].mxu0 %v2743
      %v2950 = vpop.f32.mrb[0].mxu0
      %v2951 = vadd.f32 0.0, %v2950
      %v2952 = vpop.f32.mrb[0].mxu0
      %2953 = vmatprep.mubr.f32.mxu0 0.0
      %2954 = vmatmul.mubr.f32.gmra.mrb[0].mxu0 %v2746
      %v2955 = vpop.f32.mrb[0].mxu0
      %v2956 = vadd.f32 0.0, %v2955
      %v2957 = vpop.f32.mrb[0].mxu0
      %2958 = vmatprep.mubr.f32.mxu0 0.0
      %2959 = vmatmul.mubr.f32.gmra.mrb[0].mxu0 %v2749
      %v2960 = vpop.f32.mrb[0].mxu0
      %v2961 = vadd.f32 0.0, %v2960
      %v2962 = vpop.f32.mrb[0].mxu0
      %2963 = vmatprep.mubr.f32.mxu0 0.0
      %2964 = vmatmul.mubr.f32.gmra.mrb[0].mxu0 %v2752
      %v2965 = vpop.f32.mrb[0].mxu0
      %v2966 = vadd.f32 0.0, %v2965
      %v2967 = vpop.f32.mrb[0].mxu0
      %2968 = vmatprep.mubr.f32.mxu0 0.0
      %2969 = vmatmul.mubr.f32.gmra.mrb[0].mxu0 %v2755
      %v2970 = vpop.f32.mrb[0].mxu0
      %v2971 = vadd.f32 0.0, %v2970
      %v2972 = vpop.f32.mrb[0].mxu0
      %2973 = vmatprep.mubr.f32.mxu0 0.0
      %2974 = vmatmul.mubr.f32.gmra.mrb[0].mxu0 %v2758
      %v2975 = vpop.f32.mrb[0].mxu0
      %v2976 = vadd.f32 0.0, %v2975
      %v2977 = vpop.f32.mrb[0].mxu0
      %2978 = vmatprep.mubr.f32.mxu0 0.0
      %2979 = vmatmul.mubr.f32.gmra.mrb[0].mxu0 %v2761
      %v2980 = vpop.f32.mrb[0].mxu0
      %v2981 = vadd.f32 0.0, %v2980
      %v2982 = vpop.f32.mrb[0].mxu0
      %2983 = vmatprep.mubr.f32.mxu0 0.0
      %2984 = vmatmul.mubr.f32.gmra.mrb[0].mxu0 %v2764
      %v2985 = vpop.f32.mrb[0].mxu0
      %v2986 = vadd.f32 0.0, %v2985
      %v2987 = vpop.f32.mrb[0].mxu0
      %2988 = vmatprep.mubr.f32.mxu0 0.0
      %2989 = vmatmul.mubr.f32.gmra.mrb[0].mxu0 %v2767
      %v2990 = vpop.f32.mrb[0].mxu0
      %v2991 = vadd.f32 0.0, %v2990
      %v2992 = vpop.f32.mrb[0].mxu0
      %2993 = vdwg.mxu0
      %v2994 = vadd.f32 %v2588, %v2836
      %v2995 = vadd.f32 %v2589, %v2841
      %v2996 = vadd.f32 %v2590, %v2846
      %v2997 = vadd.f32 %v2591, %v2851
      %v2998 = vadd.f32 %v2592, %v2856
      %v2999 = vadd.f32 %v2593, %v2861
      %v3000 = vadd.f32 %v2594, %v2866
      %v3001 = vadd.f32 %v2595, %v2871
      %v3002 = vadd.f32 %v2596, %v2876
      %v3003 = vadd.f32 %v2597, %v2881
      %v3004 = vadd.f32 %v2598, %v2886
      %v3005 = vadd.f32 %v2599, %v2891
      %v3006 = vadd.f32 %v2600, %v2896
      %v3007 = vadd.f32 %v2601, %v2901
      %v3008 = vadd.f32 %v2602, %v2906
      %v3009 = vadd.f32 %v2603, %v2911
      %v3010 = vadd.f32 %v2604, %v2916
      %v3011 = vadd.f32 %v2605, %v2921
      %v3012 = vadd.f32 %v2606, %v2926
      %v3013 = vadd.f32 %v2607, %v2931
      %v3014 = vadd.f32 %v2608, %v2936
      %v3015 = vadd.f32 %v2609, %v2941
      %v3016 = vadd.f32 %v2610, %v2946
      %v3017 = vadd.f32 %v2611, %v2951
      %v3018 = vadd.f32 %v2612, %v2956
      %v3019 = vadd.f32 %v2613, %v2961
      %v3020 = vadd.f32 %v2614, %v2966
      %v3021 = vadd.f32 %v2615, %v2971
      %v3022 = vadd.f32 %v2616, %v2976
      %v3023 = vadd.f32 %v2617, %v2981
      %v3024 = vadd.f32 %v2618, %v2986
      %v3025 = vadd.f32 %v2619, %v2991
      %v3042 = vrot.slane %v2623, 1
      %v3043 = vrot.slane %v2624, 1
      %v3044 = vsel %vm326, %v3042, %v3043
      %v3045 = vrot.slane %v2625, 1
      %v3046 = vsel %vm326, %v3043, %v3045
      %v3047 = vrot.slane %v2626, 1
      %v3048 = vrot.slane %v2627, 1
      %v3049 = vsel %vm326, %v3047, %v3048
      %v3050 = vrot.slane %v2628, 1
      %v3051 = vsel %vm326, %v3048, %v3050
      %v3052 = vrot.slane %v2629, 1
      %v3053 = vrot.slane %v2630, 1
      %v3054 = vsel %vm326, %v3052, %v3053
      %v3055 = vrot.slane %v2631, 1
      %v3056 = vsel %vm326, %v3053, %v3055
      %v3057 = vrot.slane %v2632, 1
      %v3058 = vrot.slane %v2633, 1
      %v3059 = vsel %vm326, %v3057, %v3058
      %v3060 = vrot.slane %v2634, 1
      %v3061 = vsel %vm326, %v3058, %v3060
      %v3062 = vrot.slane %v2635, 1
      %v3063 = vrot.slane %v2636, 1
      %v3064 = vsel %vm326, %v3062, %v3063
      %v3065 = vrot.slane %v2637, 1
      %v3066 = vsel %vm326, %v3063, %v3065
      %v3067 = vrot.slane %v2638, 1
      %v3068 = vrot.slane %v2639, 1
      %v3069 = vsel %vm326, %v3067, %v3068
      %v3070 = vrot.slane %v2640, 1
      %v3071 = vsel %vm326, %v3068, %v3070
      %v3072 = vrot.slane %v2641, 1
      %v3073 = vrot.slane %v2642, 1
      %v3074 = vsel %vm326, %v3072, %v3073
      %v3075 = vrot.slane %v2643, 1
      %v3076 = vsel %vm326, %v3073, %v3075
      %v3077 = vrot.slane %v2644, 1
      %v3078 = vrot.slane %v2645, 1
      %v3079 = vsel %vm326, %v3077, %v3078
      %v3080 = vrot.slane %v2646, 1
      %v3081 = vsel %vm326, %v3078, %v3080
      %v3082 = vrot.slane %v2647, 1
      %v3083 = vrot.slane %v2648, 1
      %v3084 = vsel %vm326, %v3082, %v3083
      %v3085 = vrot.slane %v2649, 1
      %v3086 = vsel %vm326, %v3083, %v3085
      %v3087 = vrot.slane %v2650, 1
      %v3088 = vrot.slane %v2651, 1
      %v3089 = vsel %vm326, %v3087, %v3088
      %v3090 = vrot.slane %v2652, 1
      %v3091 = vsel %vm326, %v3088, %v3090
      %v3092 = vrot.slane %v2653, 1
      %v3093 = vrot.slane %v2654, 1
      %v3094 = vsel %vm326, %v3092, %v3093
      %v3095 = vrot.slane %v2655, 1
      %v3096 = vsel %vm326, %v3093, %v3095
      %v3097 = vrot.slane %v2656, 1
      %v3098 = vrot.slane %v2657, 1
      %v3099 = vsel %vm326, %v3097, %v3098
      %v3100 = vrot.slane %v2658, 1
      %v3101 = vsel %vm326, %v3098, %v3100
      %v3102 = vrot.slane %v2659, 1
      %v3103 = vrot.slane %v2660, 1
      %v3104 = vsel %vm326, %v3102, %v3103
      %v3105 = vrot.slane %v2661, 1
      %v3106 = vsel %vm326, %v3103, %v3105
      %v3107 = vrot.slane %v2662, 1
      %v3108 = vrot.slane %v2663, 1
      %v3109 = vsel %vm326, %v3107, %v3108
      %v3110 = vrot.slane %v2664, 1
      %v3111 = vsel %vm326, %v3108, %v3110
      %v3112 = vrot.slane %v2665, 1
      %v3113 = vrot.slane %v2666, 1
      %v3114 = vsel %vm326, %v3112, %v3113
      %v3115 = vrot.slane %v2667, 1
      %v3116 = vsel %vm326, %v3113, %v3115
      %v3117 = vrot.slane %v2668, 1
      %v3118 = vrot.slane %v2669, 1
      %v3119 = vsel %vm326, %v3117, %v3118
      %v3120 = vrot.slane %v2670, 1
      %v3121 = vsel %vm326, %v3118, %v3120
      %s3122 = scalar_lea.vmem %s1, 56
      %v3123 = vld [vmem:[%s3122] sm:$0xff]
      %v3124 = vsel %vm409, %v3044, 0
      %v3126 = vsel %vm409, %v3046, 0
      %v3128 = vsel %vm409, %v3049, 0
      %v3130 = vsel %vm409, %v3051, 0
      %v3132 = vsel %vm409, %v3054, 0
      %v3134 = vsel %vm409, %v3056, 0
      %v3136 = vsel %vm409, %v3059, 0
      %v3138 = vsel %vm409, %v3061, 0
      %v3140 = vsel %vm409, %v3064, 0
      %v3142 = vsel %vm409, %v3066, 0
      %v3144 = vsel %vm409, %v3069, 0
      %v3146 = vsel %vm409, %v3071, 0
      %v3148 = vsel %vm409, %v3074, 0
      %v3150 = vsel %vm409, %v3076, 0
      %v3152 = vsel %vm409, %v3079, 0
      %v3154 = vsel %vm409, %v3081, 0
      %v3156 = vsel %vm409, %v3084, 0
      %v3158 = vsel %vm409, %v3086, 0
      %v3160 = vsel %vm409, %v3089, 0
      %v3162 = vsel %vm409, %v3091, 0
      %v3164 = vsel %vm409, %v3094, 0
      %v3166 = vsel %vm409, %v3096, 0
      %v3168 = vsel %vm409, %v3099, 0
      %v3170 = vsel %vm409, %v3101, 0
      %v3172 = vsel %vm409, %v3104, 0
      %v3174 = vsel %vm409, %v3106, 0
      %v3176 = vsel %vm409, %v3109, 0
      %v3178 = vsel %vm409, %v3111, 0
      %v3180 = vsel %vm409, %v3114, 0
      %v3182 = vsel %vm409, %v3116, 0
      %v3184 = vsel %vm409, %v3119, 0
      %v3186 = vsel %vm409, %v3121, 0
      %3188 = vmatprep.subr.mxu0 0.0
      %3189 = vmatpush1.msra.mxu0 %v3123
      %3190 = vmatprep.subr.mxu0 0.0
      %3191 = vmatpush1.msra.mxu0 0.0
      %3192 = vmatprep.subr.mxu0 0.0
      %3193 = vmatpush1.msra.mxu0 0.0
      %3194 = vmatprep.subr.mxu0 0.0
      %3195 = vmatpush1.msra.mxu0 0.0
      %3196 = vmatprep.subr.mxu0 0.0
      %3197 = vmatpush1.msra.mxu0 0.0
      %3198 = vmatprep.subr.mxu0 0.0
      %3199 = vmatpush1.msra.mxu0 0.0
      %3200 = vmatprep.subr.mxu0 0.0
      %3201 = vmatpush1.msra.mxu0 0.0
      %3202 = vmatprep.subr.mxu0 0.0
      %3203 = vmatpush1.msra.mxu0 0.0
      %3204 = vmatprep.subr.mxu0 0.0
      %3205 = vmatpush1.msra.mxu0 0.0
      %3206 = vmatprep.subr.mxu0 0.0
      %3207 = vmatpush1.msra.mxu0 0.0
      %3208 = vmatprep.subr.mxu0 0.0
      %3209 = vmatpush1.msra.mxu0 0.0
      %3210 = vmatprep.subr.mxu0 0.0
      %3211 = vmatpush1.msra.mxu0 0.0
      %3212 = vmatprep.subr.mxu0 0.0
      %3213 = vmatpush1.msra.mxu0 0.0
      %3214 = vmatprep.subr.mxu0 0.0
      %3215 = vmatpush1.msra.mxu0 0.0
      %3216 = vmatprep.subr.mxu0 0.0
      %3217 = vmatpush1.msra.mxu0 0.0
      %3218 = vmatprep.subr.mxu0 0.0
      %3219 = vmatpush1.msra.mxu0 0.0
      %3220 = vmatprep.subr.mxu0 0.0
      %3221 = vmatpush1.msra.mxu0 0.0
      %3222 = vmatprep.subr.mxu0 0.0
      %3223 = vmatpush1.msra.mxu0 0.0
      %3224 = vmatprep.subr.mxu0 0.0
      %3225 = vmatpush1.msra.mxu0 0.0
      %3226 = vmatprep.subr.mxu0 0.0
      %3227 = vmatpush1.msra.mxu0 0.0
      %3228 = vmatprep.subr.mxu0 0.0
      %3229 = vmatpush1.msra.mxu0 0.0
      %3230 = vmatprep.subr.mxu0 0.0
      %3231 = vmatpush1.msra.mxu0 0.0
      %3232 = vmatprep.subr.mxu0 0.0
      %3233 = vmatpush1.msra.mxu0 0.0
      %3234 = vmatprep.subr.mxu0 0.0
      %3235 = vmatpush1.msra.mxu0 0.0
      %3236 = vmatprep.subr.mxu0 0.0
      %3237 = vmatpush1.msra.mxu0 0.0
      %3238 = vmatprep.subr.mxu0 0.0
      %3239 = vmatpush1.msra.mxu0 0.0
      %3240 = vmatprep.subr.mxu0 0.0
      %3241 = vmatpush1.msra.mxu0 0.0
      %3242 = vmatprep.subr.mxu0 0.0
      %3243 = vmatpush1.msra.mxu0 0.0
      %3244 = vmatprep.subr.mxu0 0.0
      %3245 = vmatpush1.msra.mxu0 0.0
      %3246 = vmatprep.subr.mxu0 0.0
      %3247 = vmatpush1.msra.mxu0 0.0
      %3248 = vmatprep.subr.mxu0 0.0
      %3249 = vmatpush1.msra.mxu0 0.0
      %3250 = vmatprep.subr.mxu0 0.0
      %3251 = vmatpush1.msra.mxu0 0.0
      %3252 = vmatprep.mubr.f32.mxu0 0.0
      %3253 = vmatmul.mubr.f32.gmra.mrb[0].mxu0 %v3124
      %v3254 = vpop.f32.mrb[0].mxu0
      %v3255 = vadd.f32 0.0, %v3254
      %v3256 = vpop.f32.mrb[0].mxu0
      %3257 = vmatprep.mubr.f32.mxu0 0.0
      %3258 = vmatmul.mubr.f32.gmra.mrb[0].mxu0 %v3126
      %v3259 = vpop.f32.mrb[0].mxu0
      %v3260 = vadd.f32 0.0, %v3259
      %v3261 = vpop.f32.mrb[0].mxu0
      %3262 = vmatprep.mubr.f32.mxu0 0.0
      %3263 = vmatmul.mubr.f32.gmra.mrb[0].mxu0 %v3128
      %v3264 = vpop.f32.mrb[0].mxu0
      %v3265 = vadd.f32 0.0, %v3264
      %v3266 = vpop.f32.mrb[0].mxu0
      %3267 = vmatprep.mubr.f32.mxu0 0.0
      %3268 = vmatmul.mubr.f32.gmra.mrb[0].mxu0 %v3130
      %v3269 = vpop.f32.mrb[0].mxu0
      %v3270 = vadd.f32 0.0, %v3269
      %v3271 = vpop.f32.mrb[0].mxu0
      %3272 = vmatprep.mubr.f32.mxu0 0.0
      %3273 = vmatmul.mubr.f32.gmra.mrb[0].mxu0 %v3132
      %v3274 = vpop.f32.mrb[0].mxu0
      %v3275 = vadd.f32 0.0, %v3274
      %v3276 = vpop.f32.mrb[0].mxu0
      %3277 = vmatprep.mubr.f32.mxu0 0.0
      %3278 = vmatmul.mubr.f32.gmra.mrb[0].mxu0 %v3134
      %v3279 = vpop.f32.mrb[0].mxu0
      %v3280 = vadd.f32 0.0, %v3279
      %v3281 = vpop.f32.mrb[0].mxu0
      %3282 = vmatprep.mubr.f32.mxu0 0.0
      %3283 = vmatmul.mubr.f32.gmra.mrb[0].mxu0 %v3136
      %v3284 = vpop.f32.mrb[0].mxu0
      %v3285 = vadd.f32 0.0, %v3284
      %v3286 = vpop.f32.mrb[0].mxu0
      %3287 = vmatprep.mubr.f32.mxu0 0.0
      %3288 = vmatmul.mubr.f32.gmra.mrb[0].mxu0 %v3138
      %v3289 = vpop.f32.mrb[0].mxu0
      %v3290 = vadd.f32 0.0, %v3289
      %v3291 = vpop.f32.mrb[0].mxu0
      %3292 = vmatprep.mubr.f32.mxu0 0.0
      %3293 = vmatmul.mubr.f32.gmra.mrb[0].mxu0 %v3140
      %v3294 = vpop.f32.mrb[0].mxu0
      %v3295 = vadd.f32 0.0, %v3294
      %v3296 = vpop.f32.mrb[0].mxu0
      %3297 = vmatprep.mubr.f32.mxu0 0.0
      %3298 = vmatmul.mubr.f32.gmra.mrb[0].mxu0 %v3142
      %v3299 = vpop.f32.mrb[0].mxu0
      %v3300 = vadd.f32 0.0, %v3299
      %v3301 = vpop.f32.mrb[0].mxu0
      %3302 = vmatprep.mubr.f32.mxu0 0.0
      %3303 = vmatmul.mubr.f32.gmra.mrb[0].mxu0 %v3144
      %v3304 = vpop.f32.mrb[0].mxu0
      %v3305 = vadd.f32 0.0, %v3304
      %v3306 = vpop.f32.mrb[0].mxu0
      %3307 = vmatprep.mubr.f32.mxu0 0.0
      %3308 = vmatmul.mubr.f32.gmra.mrb[0].mxu0 %v3146
      %v3309 = vpop.f32.mrb[0].mxu0
      %v3310 = vadd.f32 0.0, %v3309
      %v3311 = vpop.f32.mrb[0].mxu0
      %3312 = vmatprep.mubr.f32.mxu0 0.0
      %3313 = vmatmul.mubr.f32.gmra.mrb[0].mxu0 %v3148
      %v3314 = vpop.f32.mrb[0].mxu0
      %v3315 = vadd.f32 0.0, %v3314
      %v3316 = vpop.f32.mrb[0].mxu0
      %3317 = vmatprep.mubr.f32.mxu0 0.0
      %3318 = vmatmul.mubr.f32.gmra.mrb[0].mxu0 %v3150
      %v3319 = vpop.f32.mrb[0].mxu0
      %v3320 = vadd.f32 0.0, %v3319
      %v3321 = vpop.f32.mrb[0].mxu0
      %3322 = vmatprep.mubr.f32.mxu0 0.0
      %3323 = vmatmul.mubr.f32.gmra.mrb[0].mxu0 %v3152
      %v3324 = vpop.f32.mrb[0].mxu0
      %v3325 = vadd.f32 0.0, %v3324
      %v3326 = vpop.f32.mrb[0].mxu0
      %3327 = vmatprep.mubr.f32.mxu0 0.0
      %3328 = vmatmul.mubr.f32.gmra.mrb[0].mxu0 %v3154
      %v3329 = vpop.f32.mrb[0].mxu0
      %v3330 = vadd.f32 0.0, %v3329
      %v3331 = vpop.f32.mrb[0].mxu0
      %3332 = vmatprep.mubr.f32.mxu0 0.0
      %3333 = vmatmul.mubr.f32.gmra.mrb[0].mxu0 %v3156
      %v3334 = vpop.f32.mrb[0].mxu0
      %v3335 = vadd.f32 0.0, %v3334
      %v3336 = vpop.f32.mrb[0].mxu0
      %3337 = vmatprep.mubr.f32.mxu0 0.0
      %3338 = vmatmul.mubr.f32.gmra.mrb[0].mxu0 %v3158
      %v3339 = vpop.f32.mrb[0].mxu0
      %v3340 = vadd.f32 0.0, %v3339
      %v3341 = vpop.f32.mrb[0].mxu0
      %3342 = vmatprep.mubr.f32.mxu0 0.0
      %3343 = vmatmul.mubr.f32.gmra.mrb[0].mxu0 %v3160
      %v3344 = vpop.f32.mrb[0].mxu0
      %v3345 = vadd.f32 0.0, %v3344
      %v3346 = vpop.f32.mrb[0].mxu0
      %3347 = vmatprep.mubr.f32.mxu0 0.0
      %3348 = vmatmul.mubr.f32.gmra.mrb[0].mxu0 %v3162
      %v3349 = vpop.f32.mrb[0].mxu0
      %v3350 = vadd.f32 0.0, %v3349
      %v3351 = vpop.f32.mrb[0].mxu0
      %3352 = vmatprep.mubr.f32.mxu0 0.0
      %3353 = vmatmul.mubr.f32.gmra.mrb[0].mxu0 %v3164
      %v3354 = vpop.f32.mrb[0].mxu0
      %v3355 = vadd.f32 0.0, %v3354
      %v3356 = vpop.f32.mrb[0].mxu0
      %3357 = vmatprep.mubr.f32.mxu0 0.0
      %3358 = vmatmul.mubr.f32.gmra.mrb[0].mxu0 %v3166
      %v3359 = vpop.f32.mrb[0].mxu0
      %v3360 = vadd.f32 0.0, %v3359
      %v3361 = vpop.f32.mrb[0].mxu0
      %3362 = vmatprep.mubr.f32.mxu0 0.0
      %3363 = vmatmul.mubr.f32.gmra.mrb[0].mxu0 %v3168
      %v3364 = vpop.f32.mrb[0].mxu0
      %v3365 = vadd.f32 0.0, %v3364
      %v3366 = vpop.f32.mrb[0].mxu0
      %3367 = vmatprep.mubr.f32.mxu0 0.0
      %3368 = vmatmul.mubr.f32.gmra.mrb[0].mxu0 %v3170
      %v3369 = vpop.f32.mrb[0].mxu0
      %v3370 = vadd.f32 0.0, %v3369
      %v3371 = vpop.f32.mrb[0].mxu0
      %3372 = vmatprep.mubr.f32.mxu0 0.0
      %3373 = vmatmul.mubr.f32.gmra.mrb[0].mxu0 %v3172
      %v3374 = vpop.f32.mrb[0].mxu0
      %v3375 = vadd.f32 0.0, %v3374
      %v3376 = vpop.f32.mrb[0].mxu0
      %3377 = vmatprep.mubr.f32.mxu0 0.0
      %3378 = vmatmul.mubr.f32.gmra.mrb[0].mxu0 %v3174
      %v3379 = vpop.f32.mrb[0].mxu0
      %v3380 = vadd.f32 0.0, %v3379
      %v3381 = vpop.f32.mrb[0].mxu0
      %3382 = vmatprep.mubr.f32.mxu0 0.0
      %3383 = vmatmul.mubr.f32.gmra.mrb[0].mxu0 %v3176
      %v3384 = vpop.f32.mrb[0].mxu0
      %v3385 = vadd.f32 0.0, %v3384
      %v3386 = vpop.f32.mrb[0].mxu0
      %3387 = vmatprep.mubr.f32.mxu0 0.0
      %3388 = vmatmul.mubr.f32.gmra.mrb[0].mxu0 %v3178
      %v3389 = vpop.f32.mrb[0].mxu0
      %v3390 = vadd.f32 0.0, %v3389
      %v3391 = vpop.f32.mrb[0].mxu0
      %3392 = vmatprep.mubr.f32.mxu0 0.0
      %3393 = vmatmul.mubr.f32.gmra.mrb[0].mxu0 %v3180
      %v3394 = vpop.f32.mrb[0].mxu0
      %v3395 = vadd.f32 0.0, %v3394
      %v3396 = vpop.f32.mrb[0].mxu0
      %3397 = vmatprep.mubr.f32.mxu0 0.0
      %3398 = vmatmul.mubr.f32.gmra.mrb[0].mxu0 %v3182
      %v3399 = vpop.f32.mrb[0].mxu0
      %v3400 = vadd.f32 0.0, %v3399
      %v3401 = vpop.f32.mrb[0].mxu0
      %3402 = vmatprep.mubr.f32.mxu0 0.0
      %3403 = vmatmul.mubr.f32.gmra.mrb[0].mxu0 %v3184
      %v3404 = vpop.f32.mrb[0].mxu0
      %v3405 = vadd.f32 0.0, %v3404
      %v3406 = vpop.f32.mrb[0].mxu0
      %3407 = vmatprep.mubr.f32.mxu0 0.0
      %3408 = vmatmul.mubr.f32.gmra.mrb[0].mxu0 %v3186
      %v3409 = vpop.f32.mrb[0].mxu0
      %v3410 = vadd.f32 0.0, %v3409
      %v3411 = vpop.f32.mrb[0].mxu0
      %3412 = vdwg.mxu0
      %v3413 = vadd.f32 %v2994, %v3255
      %v3414 = vadd.f32 %v2995, %v3260
      %v3415 = vadd.f32 %v2996, %v3265
      %v3416 = vadd.f32 %v2997, %v3270
      %v3417 = vadd.f32 %v2998, %v3275
      %v3418 = vadd.f32 %v2999, %v3280
      %v3419 = vadd.f32 %v3000, %v3285
      %v3420 = vadd.f32 %v3001, %v3290
      %v3421 = vadd.f32 %v3002, %v3295
      %v3422 = vadd.f32 %v3003, %v3300
      %v3423 = vadd.f32 %v3004, %v3305
      %v3424 = vadd.f32 %v3005, %v3310
      %v3425 = vadd.f32 %v3006, %v3315
      %v3426 = vadd.f32 %v3007, %v3320
      %v3427 = vadd.f32 %v3008, %v3325
      %v3428 = vadd.f32 %v3009, %v3330
      %v3429 = vadd.f32 %v3010, %v3335
      %v3430 = vadd.f32 %v3011, %v3340
      %v3431 = vadd.f32 %v3012, %v3345
      %v3432 = vadd.f32 %v3013, %v3350
      %v3433 = vadd.f32 %v3014, %v3355
      %v3434 = vadd.f32 %v3015, %v3360
      %v3435 = vadd.f32 %v3016, %v3365
      %v3436 = vadd.f32 %v3017, %v3370
      %v3437 = vadd.f32 %v3018, %v3375
      %v3438 = vadd.f32 %v3019, %v3380
      %v3439 = vadd.f32 %v3020, %v3385
      %v3440 = vadd.f32 %v3021, %v3390
      %v3441 = vadd.f32 %v3022, %v3395
      %v3442 = vadd.f32 %v3023, %v3400
      %v3443 = vadd.f32 %v3024, %v3405
      %v3444 = vadd.f32 %v3025, %v3410
      %v3445 = vrot.slane %v2623, 2
      %v3446 = vrot.slane %v2624, 2
      %v3447 = vsel %vm988, %v3445, %v3446
      %v3448 = vrot.slane %v2625, 2
      %v3449 = vsel %vm988, %v3446, %v3448
      %v3450 = vrot.slane %v2626, 2
      %v3451 = vrot.slane %v2627, 2
      %v3452 = vsel %vm988, %v3450, %v3451
      %v3453 = vrot.slane %v2628, 2
      %v3454 = vsel %vm988, %v3451, %v3453
      %v3455 = vrot.slane %v2629, 2
      %v3456 = vrot.slane %v2630, 2
      %v3457 = vsel %vm988, %v3455, %v3456
      %v3458 = vrot.slane %v2631, 2
      %v3459 = vsel %vm988, %v3456, %v3458
      %v3460 = vrot.slane %v2632, 2
      %v3461 = vrot.slane %v2633, 2
      %v3462 = vsel %vm988, %v3460, %v3461
      %v3463 = vrot.slane %v2634, 2
      %v3464 = vsel %vm988, %v3461, %v3463
      %v3465 = vrot.slane %v2635, 2
      %v3466 = vrot.slane %v2636, 2
      %v3467 = vsel %vm988, %v3465, %v3466
      %v3468 = vrot.slane %v2637, 2
      %v3469 = vsel %vm988, %v3466, %v3468
      %v3470 = vrot.slane %v2638, 2
      %v3471 = vrot.slane %v2639, 2
      %v3472 = vsel %vm988, %v3470, %v3471
      %v3473 = vrot.slane %v2640, 2
      %v3474 = vsel %vm988, %v3471, %v3473
      %v3475 = vrot.slane %v2641, 2
      %v3476 = vrot.slane %v2642, 2
      %v3477 = vsel %vm988, %v3475, %v3476
      %v3478 = vrot.slane %v2643, 2
      %v3479 = vsel %vm988, %v3476, %v3478
      %v3480 = vrot.slane %v2644, 2
      %v3481 = vrot.slane %v2645, 2
      %v3482 = vsel %vm988, %v3480, %v3481
      %v3483 = vrot.slane %v2646, 2
      %v3484 = vsel %vm988, %v3481, %v3483
      %v3485 = vrot.slane %v2647, 2
      %v3486 = vrot.slane %v2648, 2
      %v3487 = vsel %vm988, %v3485, %v3486
      %v3488 = vrot.slane %v2649, 2
      %v3489 = vsel %vm988, %v3486, %v3488
      %v3490 = vrot.slane %v2650, 2
      %v3491 = vrot.slane %v2651, 2
      %v3492 = vsel %vm988, %v3490, %v3491
      %v3493 = vrot.slane %v2652, 2
      %v3494 = vsel %vm988, %v3491, %v3493
      %v3495 = vrot.slane %v2653, 2
      %v3496 = vrot.slane %v2654, 2
      %v3497 = vsel %vm988, %v3495, %v3496
      %v3498 = vrot.slane %v2655, 2
      %v3499 = vsel %vm988, %v3496, %v3498
      %v3500 = vrot.slane %v2656, 2
      %v3501 = vrot.slane %v2657, 2
      %v3502 = vsel %vm988, %v3500, %v3501
      %v3503 = vrot.slane %v2658, 2
      %v3504 = vsel %vm988, %v3501, %v3503
      %v3505 = vrot.slane %v2659, 2
      %v3506 = vrot.slane %v2660, 2
      %v3507 = vsel %vm988, %v3505, %v3506
      %v3508 = vrot.slane %v2661, 2
      %v3509 = vsel %vm988, %v3506, %v3508
      %v3510 = vrot.slane %v2662, 2
      %v3511 = vrot.slane %v2663, 2
      %v3512 = vsel %vm988, %v3510, %v3511
      %v3513 = vrot.slane %v2664, 2
      %v3514 = vsel %vm988, %v3511, %v3513
      %v3515 = vrot.slane %v2665, 2
      %v3516 = vrot.slane %v2666, 2
      %v3517 = vsel %vm988, %v3515, %v3516
      %v3518 = vrot.slane %v2667, 2
      %v3519 = vsel %vm988, %v3516, %v3518
      %v3520 = vrot.slane %v2668, 2
      %v3521 = vrot.slane %v2669, 2
      %v3522 = vsel %vm988, %v3520, %v3521
      %v3523 = vrot.slane %v2670, 2
      %v3524 = vsel %vm988, %v3521, %v3523
      %s3525 = scalar_lea.vmem %s1, 64
      %v3526 = vld [vmem:[%s3525] sm:$0xff]
      %v3527 = vsel %vm409, %v3447, 0
      %v3529 = vsel %vm409, %v3449, 0
      %v3531 = vsel %vm409, %v3452, 0
      %v3533 = vsel %vm409, %v3454, 0
      %v3535 = vsel %vm409, %v3457, 0
      %v3537 = vsel %vm409, %v3459, 0
      %v3539 = vsel %vm409, %v3462, 0
      %v3541 = vsel %vm409, %v3464, 0
      %v3543 = vsel %vm409, %v3467, 0
      %v3545 = vsel %vm409, %v3469, 0
      %v3547 = vsel %vm409, %v3472, 0
      %v3549 = vsel %vm409, %v3474, 0
      %v3551 = vsel %vm409, %v3477, 0
      %v3553 = vsel %vm409, %v3479, 0
      %v3555 = vsel %vm409, %v3482, 0
      %v3557 = vsel %vm409, %v3484, 0
      %v3559 = vsel %vm409, %v3487, 0
      %v3561 = vsel %vm409, %v3489, 0
      %v3563 = vsel %vm409, %v3492, 0
      %v3565 = vsel %vm409, %v3494, 0
      %v3567 = vsel %vm409, %v3497, 0
      %v3569 = vsel %vm409, %v3499, 0
      %v3571 = vsel %vm409, %v3502, 0
      %v3573 = vsel %vm409, %v3504, 0
      %v3575 = vsel %vm409, %v3507, 0
      %v3577 = vsel %vm409, %v3509, 0
      %v3579 = vsel %vm409, %v3512, 0
      %v3581 = vsel %vm409, %v3514, 0
      %v3583 = vsel %vm409, %v3517, 0
      %v3585 = vsel %vm409, %v3519, 0
      %v3587 = vsel %vm409, %v3522, 0
      %v3589 = vsel %vm409, %v3524, 0
      %3591 = vmatprep.subr.mxu0 0.0
      %3592 = vmatpush1.msra.mxu0 %v3526
      %3593 = vmatprep.subr.mxu0 0.0
      %3594 = vmatpush1.msra.mxu0 0.0
      %3595 = vmatprep.subr.mxu0 0.0
      %3596 = vmatpush1.msra.mxu0 0.0
      %3597 = vmatprep.subr.mxu0 0.0
      %3598 = vmatpush1.msra.mxu0 0.0
      %3599 = vmatprep.subr.mxu0 0.0
      %3600 = vmatpush1.msra.mxu0 0.0
      %3601 = vmatprep.subr.mxu0 0.0
      %3602 = vmatpush1.msra.mxu0 0.0
      %3603 = vmatprep.subr.mxu0 0.0
      %3604 = vmatpush1.msra.mxu0 0.0
      %3605 = vmatprep.subr.mxu0 0.0
      %3606 = vmatpush1.msra.mxu0 0.0
      %3607 = vmatprep.subr.mxu0 0.0
      %3608 = vmatpush1.msra.mxu0 0.0
      %3609 = vmatprep.subr.mxu0 0.0
      %3610 = vmatpush1.msra.mxu0 0.0
      %3611 = vmatprep.subr.mxu0 0.0
      %3612 = vmatpush1.msra.mxu0 0.0
      %3613 = vmatprep.subr.mxu0 0.0
      %3614 = vmatpush1.msra.mxu0 0.0
      %3615 = vmatprep.subr.mxu0 0.0
      %3616 = vmatpush1.msra.mxu0 0.0
      %3617 = vmatprep.subr.mxu0 0.0
      %3618 = vmatpush1.msra.mxu0 0.0
      %3619 = vmatprep.subr.mxu0 0.0
      %3620 = vmatpush1.msra.mxu0 0.0
      %3621 = vmatprep.subr.mxu0 0.0
      %3622 = vmatpush1.msra.mxu0 0.0
      %3623 = vmatprep.subr.mxu0 0.0
      %3624 = vmatpush1.msra.mxu0 0.0
      %3625 = vmatprep.subr.mxu0 0.0
      %3626 = vmatpush1.msra.mxu0 0.0
      %3627 = vmatprep.subr.mxu0 0.0
      %3628 = vmatpush1.msra.mxu0 0.0
      %3629 = vmatprep.subr.mxu0 0.0
      %3630 = vmatpush1.msra.mxu0 0.0
      %3631 = vmatprep.subr.mxu0 0.0
      %3632 = vmatpush1.msra.mxu0 0.0
      %3633 = vmatprep.subr.mxu0 0.0
      %3634 = vmatpush1.msra.mxu0 0.0
      %3635 = vmatprep.subr.mxu0 0.0
      %3636 = vmatpush1.msra.mxu0 0.0
      %3637 = vmatprep.subr.mxu0 0.0
      %3638 = vmatpush1.msra.mxu0 0.0
      %3639 = vmatprep.subr.mxu0 0.0
      %3640 = vmatpush1.msra.mxu0 0.0
      %3641 = vmatprep.subr.mxu0 0.0
      %3642 = vmatpush1.msra.mxu0 0.0
      %3643 = vmatprep.subr.mxu0 0.0
      %3644 = vmatpush1.msra.mxu0 0.0
      %3645 = vmatprep.subr.mxu0 0.0
      %3646 = vmatpush1.msra.mxu0 0.0
      %3647 = vmatprep.subr.mxu0 0.0
      %3648 = vmatpush1.msra.mxu0 0.0
      %3649 = vmatprep.subr.mxu0 0.0
      %3650 = vmatpush1.msra.mxu0 0.0
      %3651 = vmatprep.subr.mxu0 0.0
      %3652 = vmatpush1.msra.mxu0 0.0
      %3653 = vmatprep.subr.mxu0 0.0
      %3654 = vmatpush1.msra.mxu0 0.0
      %3655 = vmatprep.mubr.f32.mxu0 0.0
      %3656 = vmatmul.mubr.f32.gmra.mrb[0].mxu0 %v3527
      %v3657 = vpop.f32.mrb[0].mxu0
      %v3658 = vadd.f32 0.0, %v3657
      %v3659 = vpop.f32.mrb[0].mxu0
      %3660 = vmatprep.mubr.f32.mxu0 0.0
      %3661 = vmatmul.mubr.f32.gmra.mrb[0].mxu0 %v3529
      %v3662 = vpop.f32.mrb[0].mxu0
      %v3663 = vadd.f32 0.0, %v3662
      %v3664 = vpop.f32.mrb[0].mxu0
      %3665 = vmatprep.mubr.f32.mxu0 0.0
      %3666 = vmatmul.mubr.f32.gmra.mrb[0].mxu0 %v3531
      %v3667 = vpop.f32.mrb[0].mxu0
      %v3668 = vadd.f32 0.0, %v3667
      %v3669 = vpop.f32.mrb[0].mxu0
      %3670 = vmatprep.mubr.f32.mxu0 0.0
      %3671 = vmatmul.mubr.f32.gmra.mrb[0].mxu0 %v3533
      %v3672 = vpop.f32.mrb[0].mxu0
      %v3673 = vadd.f32 0.0, %v3672
      %v3674 = vpop.f32.mrb[0].mxu0
      %3675 = vmatprep.mubr.f32.mxu0 0.0
      %3676 = vmatmul.mubr.f32.gmra.mrb[0].mxu0 %v3535
      %v3677 = vpop.f32.mrb[0].mxu0
      %v3678 = vadd.f32 0.0, %v3677
      %v3679 = vpop.f32.mrb[0].mxu0
      %3680 = vmatprep.mubr.f32.mxu0 0.0
      %3681 = vmatmul.mubr.f32.gmra.mrb[0].mxu0 %v3537
      %v3682 = vpop.f32.mrb[0].mxu0
      %v3683 = vadd.f32 0.0, %v3682
      %v3684 = vpop.f32.mrb[0].mxu0
      %3685 = vmatprep.mubr.f32.mxu0 0.0
      %3686 = vmatmul.mubr.f32.gmra.mrb[0].mxu0 %v3539
      %v3687 = vpop.f32.mrb[0].mxu0
      %v3688 = vadd.f32 0.0, %v3687
      %v3689 = vpop.f32.mrb[0].mxu0
      %3690 = vmatprep.mubr.f32.mxu0 0.0
      %3691 = vmatmul.mubr.f32.gmra.mrb[0].mxu0 %v3541
      %v3692 = vpop.f32.mrb[0].mxu0
      %v3693 = vadd.f32 0.0, %v3692
      %v3694 = vpop.f32.mrb[0].mxu0
      %3695 = vmatprep.mubr.f32.mxu0 0.0
      %3696 = vmatmul.mubr.f32.gmra.mrb[0].mxu0 %v3543
      %v3697 = vpop.f32.mrb[0].mxu0
      %v3698 = vadd.f32 0.0, %v3697
      %v3699 = vpop.f32.mrb[0].mxu0
      %3700 = vmatprep.mubr.f32.mxu0 0.0
      %3701 = vmatmul.mubr.f32.gmra.mrb[0].mxu0 %v3545
      %v3702 = vpop.f32.mrb[0].mxu0
      %v3703 = vadd.f32 0.0, %v3702
      %v3704 = vpop.f32.mrb[0].mxu0
      %3705 = vmatprep.mubr.f32.mxu0 0.0
      %3706 = vmatmul.mubr.f32.gmra.mrb[0].mxu0 %v3547
      %v3707 = vpop.f32.mrb[0].mxu0
      %v3708 = vadd.f32 0.0, %v3707
      %v3709 = vpop.f32.mrb[0].mxu0
      %3710 = vmatprep.mubr.f32.mxu0 0.0
      %3711 = vmatmul.mubr.f32.gmra.mrb[0].mxu0 %v3549
      %v3712 = vpop.f32.mrb[0].mxu0
      %v3713 = vadd.f32 0.0, %v3712
      %v3714 = vpop.f32.mrb[0].mxu0
      %3715 = vmatprep.mubr.f32.mxu0 0.0
      %3716 = vmatmul.mubr.f32.gmra.mrb[0].mxu0 %v3551
      %v3717 = vpop.f32.mrb[0].mxu0
      %v3718 = vadd.f32 0.0, %v3717
      %v3719 = vpop.f32.mrb[0].mxu0
      %3720 = vmatprep.mubr.f32.mxu0 0.0
      %3721 = vmatmul.mubr.f32.gmra.mrb[0].mxu0 %v3553
      %v3722 = vpop.f32.mrb[0].mxu0
      %v3723 = vadd.f32 0.0, %v3722
      %v3724 = vpop.f32.mrb[0].mxu0
      %3725 = vmatprep.mubr.f32.mxu0 0.0
      %3726 = vmatmul.mubr.f32.gmra.mrb[0].mxu0 %v3555
      %v3727 = vpop.f32.mrb[0].mxu0
      %v3728 = vadd.f32 0.0, %v3727
      %v3729 = vpop.f32.mrb[0].mxu0
      %3730 = vmatprep.mubr.f32.mxu0 0.0
      %3731 = vmatmul.mubr.f32.gmra.mrb[0].mxu0 %v3557
      %v3732 = vpop.f32.mrb[0].mxu0
      %v3733 = vadd.f32 0.0, %v3732
      %v3734 = vpop.f32.mrb[0].mxu0
      %3735 = vmatprep.mubr.f32.mxu0 0.0
      %3736 = vmatmul.mubr.f32.gmra.mrb[0].mxu0 %v3559
      %v3737 = vpop.f32.mrb[0].mxu0
      %v3738 = vadd.f32 0.0, %v3737
      %v3739 = vpop.f32.mrb[0].mxu0
      %3740 = vmatprep.mubr.f32.mxu0 0.0
      %3741 = vmatmul.mubr.f32.gmra.mrb[0].mxu0 %v3561
      %v3742 = vpop.f32.mrb[0].mxu0
      %v3743 = vadd.f32 0.0, %v3742
      %v3744 = vpop.f32.mrb[0].mxu0
      %3745 = vmatprep.mubr.f32.mxu0 0.0
      %3746 = vmatmul.mubr.f32.gmra.mrb[0].mxu0 %v3563
      %v3747 = vpop.f32.mrb[0].mxu0
      %v3748 = vadd.f32 0.0, %v3747
      %v3749 = vpop.f32.mrb[0].mxu0
      %3750 = vmatprep.mubr.f32.mxu0 0.0
      %3751 = vmatmul.mubr.f32.gmra.mrb[0].mxu0 %v3565
      %v3752 = vpop.f32.mrb[0].mxu0
      %v3753 = vadd.f32 0.0, %v3752
      %v3754 = vpop.f32.mrb[0].mxu0
      %3755 = vmatprep.mubr.f32.mxu0 0.0
      %3756 = vmatmul.mubr.f32.gmra.mrb[0].mxu0 %v3567
      %v3757 = vpop.f32.mrb[0].mxu0
      %v3758 = vadd.f32 0.0, %v3757
      %v3759 = vpop.f32.mrb[0].mxu0
      %3760 = vmatprep.mubr.f32.mxu0 0.0
      %3761 = vmatmul.mubr.f32.gmra.mrb[0].mxu0 %v3569
      %v3762 = vpop.f32.mrb[0].mxu0
      %v3763 = vadd.f32 0.0, %v3762
      %v3764 = vpop.f32.mrb[0].mxu0
      %3765 = vmatprep.mubr.f32.mxu0 0.0
      %3766 = vmatmul.mubr.f32.gmra.mrb[0].mxu0 %v3571
      %v3767 = vpop.f32.mrb[0].mxu0
      %v3768 = vadd.f32 0.0, %v3767
      %v3769 = vpop.f32.mrb[0].mxu0
      %3770 = vmatprep.mubr.f32.mxu0 0.0
      %3771 = vmatmul.mubr.f32.gmra.mrb[0].mxu0 %v3573
      %v3772 = vpop.f32.mrb[0].mxu0
      %v3773 = vadd.f32 0.0, %v3772
      %v3774 = vpop.f32.mrb[0].mxu0
      %3775 = vmatprep.mubr.f32.mxu0 0.0
      %3776 = vmatmul.mubr.f32.gmra.mrb[0].mxu0 %v3575
      %v3777 = vpop.f32.mrb[0].mxu0
      %v3778 = vadd.f32 0.0, %v3777
      %v3779 = vpop.f32.mrb[0].mxu0
      %3780 = vmatprep.mubr.f32.mxu0 0.0
      %3781 = vmatmul.mubr.f32.gmra.mrb[0].mxu0 %v3577
      %v3782 = vpop.f32.mrb[0].mxu0
      %v3783 = vadd.f32 0.0, %v3782
      %v3784 = vpop.f32.mrb[0].mxu0
      %3785 = vmatprep.mubr.f32.mxu0 0.0
      %3786 = vmatmul.mubr.f32.gmra.mrb[0].mxu0 %v3579
      %v3787 = vpop.f32.mrb[0].mxu0
      %v3788 = vadd.f32 0.0, %v3787
      %v3789 = vpop.f32.mrb[0].mxu0
      %3790 = vmatprep.mubr.f32.mxu0 0.0
      %3791 = vmatmul.mubr.f32.gmra.mrb[0].mxu0 %v3581
      %v3792 = vpop.f32.mrb[0].mxu0
      %v3793 = vadd.f32 0.0, %v3792
      %v3794 = vpop.f32.mrb[0].mxu0
      %3795 = vmatprep.mubr.f32.mxu0 0.0
      %3796 = vmatmul.mubr.f32.gmra.mrb[0].mxu0 %v3583
      %v3797 = vpop.f32.mrb[0].mxu0
      %v3798 = vadd.f32 0.0, %v3797
      %v3799 = vpop.f32.mrb[0].mxu0
      %3800 = vmatprep.mubr.f32.mxu0 0.0
      %3801 = vmatmul.mubr.f32.gmra.mrb[0].mxu0 %v3585
      %v3802 = vpop.f32.mrb[0].mxu0
      %v3803 = vadd.f32 0.0, %v3802
      %v3804 = vpop.f32.mrb[0].mxu0
      %3805 = vmatprep.mubr.f32.mxu0 0.0
      %3806 = vmatmul.mubr.f32.gmra.mrb[0].mxu0 %v3587
      %v3807 = vpop.f32.mrb[0].mxu0
      %v3808 = vadd.f32 0.0, %v3807
      %v3809 = vpop.f32.mrb[0].mxu0
      %3810 = vmatprep.mubr.f32.mxu0 0.0
      %3811 = vmatmul.mubr.f32.gmra.mrb[0].mxu0 %v3589
      %v3812 = vpop.f32.mrb[0].mxu0
      %v3813 = vadd.f32 0.0, %v3812
      %v3814 = vpop.f32.mrb[0].mxu0
      %3815 = vdwg.mxu0
      %v3816 = vadd.f32 %v3413, %v3658
      %v3817 = vadd.f32 %v3414, %v3663
      %v3818 = vadd.f32 %v3415, %v3668
      %v3819 = vadd.f32 %v3416, %v3673
      %v3820 = vadd.f32 %v3417, %v3678
      %v3821 = vadd.f32 %v3418, %v3683
      %v3822 = vadd.f32 %v3419, %v3688
      %v3823 = vadd.f32 %v3420, %v3693
      %v3824 = vadd.f32 %v3421, %v3698
      %v3825 = vadd.f32 %v3422, %v3703
      %v3826 = vadd.f32 %v3423, %v3708
      %v3827 = vadd.f32 %v3424, %v3713
      %v3828 = vadd.f32 %v3425, %v3718
      %v3829 = vadd.f32 %v3426, %v3723
      %v3830 = vadd.f32 %v3427, %v3728
      %v3831 = vadd.f32 %v3428, %v3733
      %v3832 = vadd.f32 %v3429, %v3738
      %v3833 = vadd.f32 %v3430, %v3743
      %v3834 = vadd.f32 %v3431, %v3748
      %v3835 = vadd.f32 %v3432, %v3753
      %v3836 = vadd.f32 %v3433, %v3758
      %v3837 = vadd.f32 %v3434, %v3763
      %v3838 = vadd.f32 %v3435, %v3768
      %v3839 = vadd.f32 %v3436, %v3773
      %v3840 = vadd.f32 %v3437, %v3778
      %v3841 = vadd.f32 %v3438, %v3783
      %v3842 = vadd.f32 %v3439, %v3788
      %v3843 = vadd.f32 %v3440, %v3793
      %v3844 = vadd.f32 %v3441, %v3798
      %v3845 = vadd.f32 %v3442, %v3803
      %v3846 = vadd.f32 %v3443, %v3808
      %v3847 = vadd.f32 %v3444, %v3813
      %v3849 = vlaneseq
      %v3850 = vshrl.u32 %v3849, 7
      %v3851 = vsub.s32 0, %v3850
      %v3852 = vrot.slane %v225, %v3851
      %v3854 = vadd.f32 %v3816, %v3852
      %v3855 = vadd.f32 %v3817, %v3852
      %v3856 = vadd.f32 %v3818, %v3852
      %v3857 = vadd.f32 %v3819, %v3852
      %v3858 = vadd.f32 %v3820, %v3852
      %v3859 = vadd.f32 %v3821, %v3852
      %v3860 = vadd.f32 %v3822, %v3852
      %v3861 = vadd.f32 %v3823, %v3852
      %v3862 = vadd.f32 %v3824, %v3852
      %v3863 = vadd.f32 %v3825, %v3852
      %v3864 = vadd.f32 %v3826, %v3852
      %v3865 = vadd.f32 %v3827, %v3852
      %v3866 = vadd.f32 %v3828, %v3852
      %v3867 = vadd.f32 %v3829, %v3852
      %v3868 = vadd.f32 %v3830, %v3852
      %v3869 = vadd.f32 %v3831, %v3852
      %v3870 = vadd.f32 %v3832, %v3852
      %v3871 = vadd.f32 %v3833, %v3852
      %v3872 = vadd.f32 %v3834, %v3852
      %v3873 = vadd.f32 %v3835, %v3852
      %v3874 = vadd.f32 %v3836, %v3852
      %v3875 = vadd.f32 %v3837, %v3852
      %v3876 = vadd.f32 %v3838, %v3852
      %v3877 = vadd.f32 %v3839, %v3852
      %v3878 = vadd.f32 %v3840, %v3852
      %v3879 = vadd.f32 %v3841, %v3852
      %v3880 = vadd.f32 %v3842, %v3852
      %v3881 = vadd.f32 %v3843, %v3852
      %v3882 = vadd.f32 %v3844, %v3852
      %v3883 = vadd.f32 %v3845, %v3852
      %v3884 = vadd.f32 %v3846, %v3852
      %v3885 = vadd.f32 %v3847, %v3852
      %v3886 = vmax.f32 %v3854, 0.0
      %v3887 = vmax.f32 %v3855, 0.0
      %v3888 = vmax.f32 %v3856, 0.0
      %v3889 = vmax.f32 %v3857, 0.0
      %v3890 = vmax.f32 %v3858, 0.0
      %v3891 = vmax.f32 %v3859, 0.0
      %v3892 = vmax.f32 %v3860, 0.0
      %v3893 = vmax.f32 %v3861, 0.0
      %v3894 = vmax.f32 %v3862, 0.0
      %v3895 = vmax.f32 %v3863, 0.0
      %v3896 = vmax.f32 %v3864, 0.0
      %v3897 = vmax.f32 %v3865, 0.0
      %v3898 = vmax.f32 %v3866, 0.0
      %v3899 = vmax.f32 %v3867, 0.0
      %v3900 = vmax.f32 %v3868, 0.0
      %v3901 = vmax.f32 %v3869, 0.0
      %v3902 = vmax.f32 %v3870, 0.0
      %v3903 = vmax.f32 %v3871, 0.0
      %v3904 = vmax.f32 %v3872, 0.0
      %v3905 = vmax.f32 %v3873, 0.0
      %v3906 = vmax.f32 %v3874, 0.0
      %v3907 = vmax.f32 %v3875, 0.0
      %v3908 = vmax.f32 %v3876, 0.0
      %v3909 = vmax.f32 %v3877, 0.0
      %v3910 = vmax.f32 %v3878, 0.0
      %v3911 = vmax.f32 %v3879, 0.0
      %v3912 = vmax.f32 %v3880, 0.0
      %v3913 = vmax.f32 %v3881, 0.0
      %v3914 = vmax.f32 %v3882, 0.0
      %v3915 = vmax.f32 %v3883, 0.0
      %v3916 = vmax.f32 %v3884, 0.0
      %v3917 = vmax.f32 %v3885, 0.0
      %3918 = vst [vmem:[#allocation2] sm:$0xff] %v3886
      %3919 = vst [vmem:[#allocation2 + $0x8] sm:$0xff] %v3887
      %3920 = vst [vmem:[#allocation2 + $0x10] sm:$0xff] %v3888
      %3921 = vst [vmem:[#allocation2 + $0x18] sm:$0xff] %v3889
      %3922 = vst [vmem:[#allocation2 + $0x20] sm:$0xff] %v3890
      %3923 = vst [vmem:[#allocation2 + $0x28] sm:$0xff] %v3891
      %3924 = vst [vmem:[#allocation2 + $0x30] sm:$0xff] %v3892
      %3925 = vst [vmem:[#allocation2 + $0x38] sm:$0xff] %v3893
      %3926 = vst [vmem:[#allocation2 + $0x40] sm:$0xff] %v3894
      %3927 = vst [vmem:[#allocation2 + $0x48] sm:$0xff] %v3895
      %3928 = vst [vmem:[#allocation2 + $0x50] sm:$0xff] %v3896
      %3929 = vst [vmem:[#allocation2 + $0x58] sm:$0xff] %v3897
      %3930 = vst [vmem:[#allocation2 + $0x60] sm:$0xff] %v3898
      %3931 = vst [vmem:[#allocation2 + $0x68] sm:$0xff] %v3899
      %3932 = vst [vmem:[#allocation2 + $0x70] sm:$0xff] %v3900
      %3933 = vst [vmem:[#allocation2 + $0x78] sm:$0xff] %v3901
      %3934 = vst [vmem:[#allocation2 + $0x80] sm:$0xff] %v3902
      %3935 = vst [vmem:[#allocation2 + $0x88] sm:$0xff] %v3903
      %3936 = vst [vmem:[#allocation2 + $0x90] sm:$0xff] %v3904
      %3937 = vst [vmem:[#allocation2 + $0x98] sm:$0xff] %v3905
      %3938 = vst [vmem:[#allocation2 + $0xa0] sm:$0xff] %v3906
      %3939 = vst [vmem:[#allocation2 + $0xa8] sm:$0xff] %v3907
      %3940 = vst [vmem:[#allocation2 + $0xb0] sm:$0xff] %v3908
      %3941 = vst [vmem:[#allocation2 + $0xb8] sm:$0xff] %v3909
      %3942 = vst [vmem:[#allocation2 + $0xc0] sm:$0xff] %v3910
      %3943 = vst [vmem:[#allocation2 + $0xc8] sm:$0xff] %v3911
      %3944 = vst [vmem:[#allocation2 + $0xd0] sm:$0xff] %v3912
      %3945 = vst [vmem:[#allocation2 + $0xd8] sm:$0xff] %v3913
      %3946 = vst [vmem:[#allocation2 + $0xe0] sm:$0xff] %v3914
      %3947 = vst [vmem:[#allocation2 + $0xe8] sm:$0xff] %v3915
      %3948 = vst [vmem:[#allocation2 + $0xf0] sm:$0xff] %v3916
      %3949 = vst [vmem:[#allocation2 + $0xf8] sm:$0xff] %v3917
      %v3950 = vld [vmem:[#allocation3] sm:$0x1]
      %v3951 = vadd.f32 %v3886, %v3887
      %v3952 = vadd.f32 %v3951, %v3888
      %v3953 = vadd.f32 %v3952, %v3889
      %v3954 = vadd.f32 %v3953, %v3890
      %v3955 = vadd.f32 %v3954, %v3891
      %v3956 = vadd.f32 %v3955, %v3892
      %v3957 = vadd.f32 %v3956, %v3893
      %v3958 = vadd.f32 %v3957, %v3894
      %v3959 = vadd.f32 %v3958, %v3895
      %v3960 = vadd.f32 %v3959, %v3896
      %v3961 = vadd.f32 %v3960, %v3897
      %v3962 = vadd.f32 %v3961, %v3898
      %v3963 = vadd.f32 %v3962, %v3899
      %v3964 = vadd.f32 %v3963, %v3900
      %v3965 = vadd.f32 %v3964, %v3901
      %v3966 = vadd.f32 %v3965, %v3902
      %v3967 = vadd.f32 %v3966, %v3903
      %v3968 = vadd.f32 %v3967, %v3904
      %v3969 = vadd.f32 %v3968, %v3905
      %v3970 = vadd.f32 %v3969, %v3906
      %v3971 = vadd.f32 %v3970, %v3907
      %v3972 = vadd.f32 %v3971, %v3908
      %v3973 = vadd.f32 %v3972, %v3909
      %v3974 = vadd.f32 %v3973, %v3910
      %v3975 = vadd.f32 %v3974, %v3911
      %v3976 = vadd.f32 %v3975, %v3912
      %v3977 = vadd.f32 %v3976, %v3913
      %v3978 = vadd.f32 %v3977, %v3914
      %v3979 = vadd.f32 %v3978, %v3915
      %v3980 = vadd.f32 %v3979, %v3916
      %v3981 = vadd.f32 %v3980, %v3917
      %v3982 = vrot.slane %v3981, 4
      %v3983 = vadd.f32 %v3981, %v3982
      %v3984 = vrot.slane %v3983, 2
      %v3985 = vadd.f32 %v3983, %v3984
      %v3986 = vrot.slane %v3985, 1
      %v3987 = vadd.f32 %v3985, %v3986
      %v3988 = vadd.f32 %v3950, %v3987
      %3989 = vst [vmem:[#allocation3] sm:$0x1] %v3988
      %v3990 = vld [vmem:[#allocation3] sm:$0x1]
      %v3991 = vmul.f32 %v3990, 0.00390625
      %v3992 = vld [vmem:[%s3] sm:$0xff]
      %v3993 = vld [vmem:[%s3 + $0x8] sm:$0xff]
      %v3994 = vld [vmem:[%s3 + $0x10] sm:$0xff]
      %v3995 = vld [vmem:[%s3 + $0x18] sm:$0xff]
      %v3996 = vld [vmem:[%s3 + $0x20] sm:$0xff]
      %v3997 = vld [vmem:[%s3 + $0x28] sm:$0xff]
      %v3998 = vld [vmem:[%s3 + $0x30] sm:$0xff]
      %v3999 = vld [vmem:[%s3 + $0x38] sm:$0xff]
      %v4000 = vld [vmem:[%s3 + $0x40] sm:$0xff]
      %v4001 = vld [vmem:[%s3 + $0x48] sm:$0xff]
      %v4002 = vld [vmem:[%s3 + $0x50] sm:$0xff]
      %v4003 = vld [vmem:[%s3 + $0x58] sm:$0xff]
      %v4004 = vld [vmem:[%s3 + $0x60] sm:$0xff]
      %v4005 = vld [vmem:[%s3 + $0x68] sm:$0xff]
      %v4006 = vld [vmem:[%s3 + $0x70] sm:$0xff]
      %v4007 = vld [vmem:[%s3 + $0x78] sm:$0xff]
      %v4008 = vld [vmem:[%s4] sm:$0x1]
      %4009 = vmatprep.subr.mxu0 0.0
      %4010 = vmatpush1.msra.mxu0 %v3992
      %4011 = vmatprep.subr.mxu0 0.0
      %4012 = vmatpush1.msra.mxu0 %v3993
      %4013 = vmatprep.subr.mxu0 0.0
      %4014 = vmatpush1.msra.mxu0 %v3994
      %4015 = vmatprep.subr.mxu0 0.0
      %4016 = vmatpush1.msra.mxu0 %v3995
      %4017 = vmatprep.subr.mxu0 0.0
      %4018 = vmatpush1.msra.mxu0 %v3996
      %4019 = vmatprep.subr.mxu0 0.0
      %4020 = vmatpush1.msra.mxu0 %v3997
      %4021 = vmatprep.subr.mxu0 0.0
      %4022 = vmatpush1.msra.mxu0 %v3998
      %4023 = vmatprep.subr.mxu0 0.0
      %4024 = vmatpush1.msra.mxu0 %v3999
      %4025 = vmatprep.subr.mxu0 0.0
      %4026 = vmatpush1.msra.mxu0 %v4000
      %4027 = vmatprep.subr.mxu0 0.0
      %4028 = vmatpush1.msra.mxu0 %v4001
      %4029 = vmatprep.subr.mxu0 0.0
      %4030 = vmatpush1.msra.mxu0 %v4002
      %4031 = vmatprep.subr.mxu0 0.0
      %4032 = vmatpush1.msra.mxu0 %v4003
      %4033 = vmatprep.subr.mxu0 0.0
      %4034 = vmatpush1.msra.mxu0 %v4004
      %4035 = vmatprep.subr.mxu0 0.0
      %4036 = vmatpush1.msra.mxu0 %v4005
      %4037 = vmatprep.subr.mxu0 0.0
      %4038 = vmatpush1.msra.mxu0 %v4006
      %4039 = vmatprep.subr.mxu0 0.0
      %4040 = vmatpush1.msra.mxu0 %v4007
      %4041 = vmatprep.subr.mxu0 0.0
      %4042 = vmatpush1.msra.mxu0 0.0
      %4043 = vmatprep.subr.mxu0 0.0
      %4044 = vmatpush1.msra.mxu0 0.0
      %4045 = vmatprep.subr.mxu0 0.0
      %4046 = vmatpush1.msra.mxu0 0.0
      %4047 = vmatprep.subr.mxu0 0.0
      %4048 = vmatpush1.msra.mxu0 0.0
      %4049 = vmatprep.subr.mxu0 0.0
      %4050 = vmatpush1.msra.mxu0 0.0
      %4051 = vmatprep.subr.mxu0 0.0
      %4052 = vmatpush1.msra.mxu0 0.0
      %4053 = vmatprep.subr.mxu0 0.0
      %4054 = vmatpush1.msra.mxu0 0.0
      %4055 = vmatprep.subr.mxu0 0.0
      %4056 = vmatpush1.msra.mxu0 0.0
      %4057 = vmatprep.subr.mxu0 0.0
      %4058 = vmatpush1.msra.mxu0 0.0
      %4059 = vmatprep.subr.mxu0 0.0
      %4060 = vmatpush1.msra.mxu0 0.0
      %4061 = vmatprep.subr.mxu0 0.0
      %4062 = vmatpush1.msra.mxu0 0.0
      %4063 = vmatprep.subr.mxu0 0.0
      %4064 = vmatpush1.msra.mxu0 0.0
      %4065 = vmatprep.subr.mxu0 0.0
      %4066 = vmatpush1.msra.mxu0 0.0
      %4067 = vmatprep.subr.mxu0 0.0
      %4068 = vmatpush1.msra.mxu0 0.0
      %4069 = vmatprep.subr.mxu0 0.0
      %4070 = vmatpush1.msra.mxu0 0.0
      %4071 = vmatprep.subr.mxu0 0.0
      %4072 = vmatpush1.msra.mxu0 0.0
      %4073 = vmatprep.mubr.f32.mxu0 0.0
      %4074 = vmatmul.mubr.f32.gmra.mrb[0].mxu0 %v3991
      %v4075 = vpop.f32.mrb[0].mxu0
      %v4076 = vadd.f32 %v4008, %v4075
      %v4077 = vpop.f32.mrb[0].mxu0
      %4078 = vdwg.mxu0
      %v4079 = vmax.f32 %v4076, 0.0
      %v4080 = vsub.f32 0.0, %v4079
      %v4081 = vmul.f32 %v4080, 1.442695
      %v4082 = vpow.pop %v4081
      %v4083 = vadd.f32 %v4082, 1.0
      %v4084 = vrcp.pop %v4083
      %v4085 = vld [vmem:[#allocation2] sm:$0xff]
      %v4086 = vld [vmem:[#allocation2 + $0x8] sm:$0xff]
      %v4087 = vld [vmem:[#allocation2 + $0x10] sm:$0xff]
      %v4088 = vld [vmem:[#allocation2 + $0x18] sm:$0xff]
      %v4089 = vld [vmem:[#allocation2 + $0x20] sm:$0xff]
      %v4090 = vld [vmem:[#allocation2 + $0x28] sm:$0xff]
      %v4091 = vld [vmem:[#allocation2 + $0x30] sm:$0xff]
      %v4092 = vld [vmem:[#allocation2 + $0x38] sm:$0xff]
      %v4093 = vld [vmem:[#allocation2 + $0x40] sm:$0xff]
      %v4094 = vld [vmem:[#allocation2 + $0x48] sm:$0xff]
      %v4095 = vld [vmem:[#allocation2 + $0x50] sm:$0xff]
      %v4096 = vld [vmem:[#allocation2 + $0x58] sm:$0xff]
      %v4097 = vld [vmem:[#allocation2 + $0x60] sm:$0xff]
      %v4098 = vld [vmem:[#allocation2 + $0x68] sm:$0xff]
      %v4099 = vld [vmem:[#allocation2 + $0x70] sm:$0xff]
      %v4100 = vld [vmem:[#allocation2 + $0x78] sm:$0xff]
      %v4101 = vlaneseq
      %v4102 = vshrl.u32 %v4101, 7
      %v4103 = vsub.s32 0, %v4102
      %v4104 = vrot.slane %v4084, %v4103
      %v4105 = vmul.f32 %v4085, %v4104
      %v4106 = vmul.f32 %v4086, %v4104
      %v4107 = vmul.f32 %v4087, %v4104
      %v4108 = vmul.f32 %v4088, %v4104
      %v4109 = vmul.f32 %v4089, %v4104
      %v4110 = vmul.f32 %v4090, %v4104
      %v4111 = vmul.f32 %v4091, %v4104
      %v4112 = vmul.f32 %v4092, %v4104
      %v4113 = vmul.f32 %v4093, %v4104
      %v4114 = vmul.f32 %v4094, %v4104
      %v4115 = vmul.f32 %v4095, %v4104
      %v4116 = vmul.f32 %v4096, %v4104
      %v4117 = vmul.f32 %v4097, %v4104
      %v4118 = vmul.f32 %v4098, %v4104
      %v4119 = vmul.f32 %v4099, %v4104
      %v4120 = vmul.f32 %v4100, %v4104
      %4121 = vst [vmem:[%s224] sm:$0xff] %v4105
      %4122 = vst [vmem:[%s224 + $0x8] sm:$0xff] %v4106
      %4123 = vst [vmem:[%s224 + $0x10] sm:$0xff] %v4107
      %4124 = vst [vmem:[%s224 + $0x18] sm:$0xff] %v4108
      %4125 = vst [vmem:[%s224 + $0x20] sm:$0xff] %v4109
      %4126 = vst [vmem:[%s224 + $0x28] sm:$0xff] %v4110
      %4127 = vst [vmem:[%s224 + $0x30] sm:$0xff] %v4111
      %4128 = vst [vmem:[%s224 + $0x38] sm:$0xff] %v4112
      %4129 = vst [vmem:[%s224 + $0x40] sm:$0xff] %v4113
      %4130 = vst [vmem:[%s224 + $0x48] sm:$0xff] %v4114
      %4131 = vst [vmem:[%s224 + $0x50] sm:$0xff] %v4115
      %4132 = vst [vmem:[%s224 + $0x58] sm:$0xff] %v4116
      %4133 = vst [vmem:[%s224 + $0x60] sm:$0xff] %v4117
      %4134 = vst [vmem:[%s224 + $0x68] sm:$0xff] %v4118
      %4135 = vst [vmem:[%s224 + $0x70] sm:$0xff] %v4119
      %4136 = vst [vmem:[%s224 + $0x78] sm:$0xff] %v4120
      %s4137 = scalar_lea.vmem [#allocation2], 128
      %v4138 = vld [vmem:[%s4137] sm:$0xff]
      %v4139 = vld [vmem:[%s4137 + $0x8] sm:$0xff]
      %v4140 = vld [vmem:[%s4137 + $0x10] sm:$0xff]
      %v4141 = vld [vmem:[%s4137 + $0x18] sm:$0xff]
      %v4142 = vld [vmem:[%s4137 + $0x20] sm:$0xff]
      %v4143 = vld [vmem:[%s4137 + $0x28] sm:$0xff]
      %v4144 = vld [vmem:[%s4137 + $0x30] sm:$0xff]
      %v4145 = vld [vmem:[%s4137 + $0x38] sm:$0xff]
      %v4146 = vld [vmem:[%s4137 + $0x40] sm:$0xff]
      %v4147 = vld [vmem:[%s4137 + $0x48] sm:$0xff]
      %v4148 = vld [vmem:[%s4137 + $0x50] sm:$0xff]
      %v4149 = vld [vmem:[%s4137 + $0x58] sm:$0xff]
      %v4150 = vld [vmem:[%s4137 + $0x60] sm:$0xff]
      %v4151 = vld [vmem:[%s4137 + $0x68] sm:$0xff]
      %v4152 = vld [vmem:[%s4137 + $0x70] sm:$0xff]
      %v4153 = vld [vmem:[%s4137 + $0x78] sm:$0xff]
      %v4154 = vmul.f32 %v4138, %v4104
      %v4155 = vmul.f32 %v4139, %v4104
      %v4156 = vmul.f32 %v4140, %v4104
      %v4157 = vmul.f32 %v4141, %v4104
      %v4158 = vmul.f32 %v4142, %v4104
      %v4159 = vmul.f32 %v4143, %v4104
      %v4160 = vmul.f32 %v4144, %v4104
      %v4161 = vmul.f32 %v4145, %v4104
      %v4162 = vmul.f32 %v4146, %v4104
      %v4163 = vmul.f32 %v4147, %v4104
      %v4164 = vmul.f32 %v4148, %v4104
      %v4165 = vmul.f32 %v4149, %v4104
      %v4166 = vmul.f32 %v4150, %v4104
      %v4167 = vmul.f32 %v4151, %v4104
      %v4168 = vmul.f32 %v4152, %v4104
      %v4169 = vmul.f32 %v4153, %v4104
      %s4170 = scalar_lea.vmem %s224, 128
      %4171 = vst [vmem:[%s4170] sm:$0xff] %v4154
      %4172 = vst [vmem:[%s4170 + $0x8] sm:$0xff] %v4155
      %4173 = vst [vmem:[%s4170 + $0x10] sm:$0xff] %v4156
      %4174 = vst [vmem:[%s4170 + $0x18] sm:$0xff] %v4157
      %4175 = vst [vmem:[%s4170 + $0x20] sm:$0xff] %v4158
      %4176 = vst [vmem:[%s4170 + $0x28] sm:$0xff] %v4159
      %4177 = vst [vmem:[%s4170 + $0x30] sm:$0xff] %v4160
      %4178 = vst [vmem:[%s4170 + $0x38] sm:$0xff] %v4161
      %4179 = vst [vmem:[%s4170 + $0x40] sm:$0xff] %v4162
      %4180 = vst [vmem:[%s4170 + $0x48] sm:$0xff] %v4163
      %4181 = vst [vmem:[%s4170 + $0x50] sm:$0xff] %v4164
      %4182 = vst [vmem:[%s4170 + $0x58] sm:$0xff] %v4165
      %4183 = vst [vmem:[%s4170 + $0x60] sm:$0xff] %v4166
      %4184 = vst [vmem:[%s4170 + $0x68] sm:$0xff] %v4167
      %4185 = vst [vmem:[%s4170 + $0x70] sm:$0xff] %v4168
      %4186 = vst [vmem:[%s4170 + $0x78] sm:$0xff] %v4169
      %p4187 = scmp.lt.s32.totalorder %s16, 1
      %s4188 = scalar_select %p4187, %s16, 1
      %s4189 = smul.addr %s4188, 32
      %s4190 = smul.addr %s4189, 8
      %s4191 = scalar_lea.vmem %s5, %s4190
      // Predicated region
      $region41: #{attention_refinement.1} parent=39 // pred_check
        %p4192 = pneg %p144
      $region42: #{attention_refinement.1} parent=39 // pred_check_branch
        %4194 = sbr.rel (%p4192) target = $region44
      $region43: #{attention_refinement.1} parent=39 // pred_region
        _
      $region44: #{attention_refinement.1} parent=39 // pred_fallthru
        _
    $region40: #{attention_refinement.1} parent=5 // pred_fallthru
      _
    %p4195 = scmp.le.s32.totalorder 2, %s11
    // Predicated region
    $region45: #{attention_refinement.1} parent=5 // pred_check
      %p4196 = pneg %p4195
    $region46: #{attention_refinement.1} parent=5 // pred_check_branch
      %4198 = sbr.rel (%p4196) target = $region48
    $region47: #{attention_refinement.1} parent=5 // pred_region
      %s4199 = ssub.s32 %s11, 2
      // Predicated region
      $region49: #{attention_refinement.1} parent=47 // pred_check
        %p4200 = pneg %p150
      $region50: #{attention_refinement.1} parent=47 // pred_check_branch
        %4202 = sbr.rel (%p4200) target = $region52
      $region51: #{attention_refinement.1} parent=47 // pred_region
        %p4203 = scmp.lt.s32.totalorder %s17, 1
        %s4204 = scalar_select %p4203, %s17, 1
        %s4205 = smul.addr %s4204, 32
        %s4206 = smul.addr %s4205, 8
        %s4207 = scalar_lea.vmem %s5, %s4206
      $region52: #{attention_refinement.1} parent=47 // pred_fallthru
        _
    $region48: #{attention_refinement.1} parent=5 // pred_fallthru
      _
  $region6: #{attention_refinement.1} parent=0 // loop_footer
    %s15 = sadd.s32 1, %s11
  $region7: #{attention_refinement.1} parent=0 // loop_footer_branch
    %10 = sbr.rel target = $region3
  $region8: #{attention_refinement.1} parent=0 // loop_exit
    _

</llo_original>
